<compile_context>
chip_gen: v6e
topology: v6e:2x2x1
jax: 0.10.0
libtpu: 0.0.40
codegen_flags: <defaults>
</compile_context>

<pallas_src>
import functools

import jax
import jax.numpy as jnp
from jax import lax
from jax.experimental import pallas as pl
from jax.experimental.pallas import tpu as pltpu


def _bilstm_kernel(x_ref, wih0_ref, wih_rest_ref, whh_ref, b_ref,
                   h0_ref, c0_ref, out_ref,
                   act_a_sc, act_b_sc, gx_sc):
    """All layers, both directions, whole sequence.

    x_ref       : (T*Bp, D)        time-major, row-flattened input (bf16)
    wih0_ref    : (D, 8H)          layer-0 [W_ih_f^T | W_ih_b^T]   (bf16)
    wih_rest_ref: (max(L-1,1), 2H, 8H)  layers>=1 input weights    (bf16)
    whh_ref     : (L, 2H, 8H)      blockdiag(W_hh_f^T, W_hh_b^T)   (bf16)
    b_ref       : (L, 1, 8H)       [b_ih+b_hh fwd | bwd]           (f32)
    h0_ref,c0_ref:(L, Bp, 2H)      lanes 0:H fwd, H:2H bwd         (f32)
    out_ref     : (T*Bp, 2H)       final layer output              (f32)
    act_*_sc    : (T*Bp, 2H) bf16  inter-layer activation ping/pong
    gx_sc       : (T*Bp, 8H) f32   hoisted x-projection gates
    """
    num_layers = whh_ref.shape[0]
    H = whh_ref.shape[1] // 2
    H4, H8 = 4 * H, 8 * H
    Bp = h0_ref.shape[1]
    T = x_ref.shape[0] // Bp

    # Lane mask selecting the cell-candidate ('g') quarter of each direction's
    # 4H gate block (PyTorch order i,f,g,o), hoisted out of the recurrence.
    lane = lax.broadcasted_iota(jnp.int32, (Bp, H8), 1)
    is_g = ((lane >= 2 * H) & (lane < 3 * H)) | ((lane >= 6 * H) & (lane < 7 * H))

    def activate(g):
        # sigmoid for i/f/o; tanh(x) = 2*sigmoid(2x) - 1 for the g block.
        s = jax.nn.sigmoid(jnp.where(is_g, 2.0 * g, g))
        return jnp.where(is_g, 2.0 * s - 1.0, s)

    def run_layer(w_ih, whh, bias, h0, c0, x_val, dst_ref):
        # Hoisted input projection for every timestep and both directions.
        gx_sc[...] = (jnp.dot(x_val, w_ih, preferred_element_type=jnp.float32)
                      + bias)
        dst_dtype = dst_ref.dtype

        def step(t, carry):
            hb, c = carry                                  # (Bp,2H) bf16 / f32
            rf = pl.multiple_of(t * Bp, 8)                 # rows of time t
            rb = pl.multiple_of((T - 1 - t) * Bp, 8)       # rows of time T-1-t
            gate_x = jnp.concatenate(
                [gx_sc[pl.ds(rf, Bp), 0:H4],               # fwd gates @ t
                 gx_sc[pl.ds(rb, Bp), H4:H8]], axis=1)     # bwd gates @ T-1-t
            # One block-diagonal recurrent matmul for both directions.
            gates = gate_x + jnp.dot(hb, whh,
                                     preferred_element_type=jnp.float32)
            a = activate(gates)
            i = jnp.concatenate([a[:, 0:H],         a[:, H4:H4 + H]], axis=1)
            f = jnp.concatenate([a[:, H:2 * H],     a[:, H4 + H:H4 + 2 * H]], axis=1)
            g = jnp.concatenate([a[:, 2 * H:3 * H], a[:, H4 + 2 * H:H4 + 3 * H]], axis=1)
            o = jnp.concatenate([a[:, 3 * H:H4],    a[:, H4 + 3 * H:H8]], axis=1)
            c_new = f * c + i * g
            h_new = o * jnp.tanh(c_new)
            dst_ref[pl.ds(rf, Bp), 0:H] = h_new[:, 0:H].astype(dst_dtype)
            dst_ref[pl.ds(rb, Bp), H:2 * H] = h_new[:, H:2 * H].astype(dst_dtype)
            return h_new.astype(jnp.bfloat16), c_new

        lax.fori_loop(0, T, step, (h0.astype(jnp.bfloat16), c0),
                      unroll=min(T, 8))

    acts = (act_a_sc, act_b_sc)
    layer_in = x_ref[...]
    for layer in range(num_layers):
        w_ih = wih0_ref[...] if layer == 0 else wih_rest_ref[layer - 1]
        last = layer + 1 == num_layers
        dst = out_ref if last else acts[layer % 2]
        run_layer(w_ih, whh_ref[layer], b_ref[layer],
                  h0_ref[layer], c0_ref[layer], layer_in, dst)
        if not last:
            layer_in = acts[layer % 2][...]


def _bilstm_pallas(x2, wih0, wih_rest, whh_blk, b_cat, h0s, c0s, *, T, Bp, H):
    TB = T * Bp
    vmem = pltpu.MemorySpace.VMEM
    # Everything is resident (whole sequence in VMEM) -> size the scoped limit
    # explicitly instead of relying on the 16/32 MiB default.
    bytes_needed = (
        x2.size * 2 + wih0.size * 2 + wih_rest.size * 2 + whh_blk.size * 2
        + b_cat.size * 4 + h0s.size * 4 + c0s.size * 4
        + TB * 2 * H * 4            # f32 output
        + 2 * TB * 2 * H * 2        # bf16 activation ping/pong
        + TB * 8 * H * 4)           # f32 gx scratch
    vmem_limit = int(min(64 * 1024 * 1024,
                         max(2 * bytes_needed, 16 * 1024 * 1024)))
    return pl.pallas_call(
        _bilstm_kernel,
        out_shape=jax.ShapeDtypeStruct((TB, 2 * H), jnp.float32),
        in_specs=[pl.BlockSpec(memory_space=vmem)] * 7,
        out_specs=pl.BlockSpec(memory_space=vmem),
        scratch_shapes=[
            pltpu.VMEM((TB, 2 * H), jnp.bfloat16),   # inter-layer act (ping)
            pltpu.VMEM((TB, 2 * H), jnp.bfloat16),   # inter-layer act (pong)
            pltpu.VMEM((TB, 8 * H), jnp.float32),    # x-projection gates
        ],
        compiler_params=pltpu.CompilerParams(vmem_limit_bytes=vmem_limit),
    )(x2, wih0, wih_rest, whh_blk, b_cat, h0s, c0s)


def init_bilstm_params(key, input_size, hidden_size, num_layers):
    """Deterministic U(-1/sqrt(H), 1/sqrt(H)) init, matching nn.LSTM shapes."""
    params = []
    bound = 1.0 / float(hidden_size) ** 0.5
    for layer in range(num_layers):
        d_in = input_size if layer == 0 else 2 * hidden_size
        for _direction in range(2):
            key, k1, k2, k3, k4 = jax.random.split(key, 5)
            w_ih = jax.random.uniform(k1, (4 * hidden_size, d_in),
                                      minval=-bound, maxval=bound)
            w_hh = jax.random.uniform(k2, (4 * hidden_size, hidden_size),
                                      minval=-bound, maxval=bound)
            b_ih = jax.random.uniform(k3, (4 * hidden_size,),
                                      minval=-bound, maxval=bound)
            b_hh = jax.random.uniform(k4, (4 * hidden_size,),
                                      minval=-bound, maxval=bound)
            params.append((w_ih, w_hh, b_ih, b_hh))
    return params


def bilstm_forward(x, params, h0, c0, num_layers):
    """x: (B, T, input_size) batch_first.  Returns (B, T, 2*hidden_size) f32."""
    B, T, D = x.shape
    H = h0.shape[-1]
    Bp = ((B + 7) // 8) * 8          # pad batch to sublane tile

    wih0 = None
    wih_rest, whh_blk, b_cat, h0_l, c0_l = [], [], [], [], []
    for layer in range(num_layers):
        w_ih_f, w_hh_f, b_ih_f, b_hh_f = params[2 * layer]
        w_ih_b, w_hh_b, b_ih_b, b_hh_b = params[2 * layer + 1]
        wih = jnp.concatenate([w_ih_f.T, w_ih_b.T], axis=1).astype(jnp.bfloat16)
        if layer == 0:
            wih0 = wih                                        # (D, 8H)
        else:
            wih_rest.append(wih)                              # (2H, 8H)
        blk = jnp.zeros((2 * H, 8 * H), jnp.float32)
        blk = blk.at[0:H, 0:4 * H].set(w_hh_f.T)
        blk = blk.at[H:2 * H, 4 * H:8 * H].set(w_hh_b.T)
        whh_blk.append(blk.astype(jnp.bfloat16))              # (2H, 8H)
        b_cat.append(jnp.concatenate([b_ih_f + b_hh_f,
                                      b_ih_b + b_hh_b])[None, :])   # (1, 8H)
        h0_pair = jnp.concatenate([h0[2 * layer], h0[2 * layer + 1]], axis=1)
        c0_pair = jnp.concatenate([c0[2 * layer], c0[2 * layer + 1]], axis=1)
        h0_l.append(jnp.pad(h0_pair, ((0, Bp - B), (0, 0))))   # (Bp, 2H)
        c0_l.append(jnp.pad(c0_pair, ((0, Bp - B), (0, 0))))
    if not wih_rest:   # num_layers == 1: pass an unused dummy
        wih_rest.append(jnp.zeros((2 * H, 8 * H), jnp.bfloat16))

    wih_rest = jnp.stack(wih_rest)                       # (max(L-1,1), 2H, 8H)
    whh_blk = jnp.stack(whh_blk)                         # (L, 2H, 8H)
    b_cat = jnp.stack(b_cat).astype(jnp.float32)         # (L, 1, 8H)
    h0s = jnp.stack(h0_l).astype(jnp.float32)            # (L, Bp, 2H)
    c0s = jnp.stack(c0_l).astype(jnp.float32)

    # Single transpose to time-major, pad batch rows, row-flatten.
    x_tm = jnp.transpose(x, (1, 0, 2))
    x_tm = jnp.pad(x_tm, ((0, 0), (0, Bp - B), (0, 0)))
    x2 = x_tm.reshape(T * Bp, D).astype(jnp.bfloat16)

    out = _bilstm_pallas(x2, wih0, wih_rest, whh_blk, b_cat, h0s, c0s,
                         T=T, Bp=Bp, H=H)
    out = out.reshape(T, Bp, 2 * H)[:, :B]
    # TODO(synk): PyTorch applies dropout(p=0.5) between layers in training
    # mode only (stochastic); inference semantics (no dropout) are used here.
    return jnp.transpose(out, (1, 0, 2))


if __name__ == "__main__":
    input_size, hidden_size, num_layers = 16, 32, 2
    B, T = 2, 8

    key = jax.random.PRNGKey(0)
    kx, kh, kc, kp = jax.random.split(key, 4)
    x = jax.random.normal(kx, (B, T, input_size), dtype=jnp.float32)
    # The PyTorch module draws h0/c0 from torch.randn each call; here they are
    # deterministic normal draws with a fixed key.
    h0 = jax.random.normal(kh, (num_layers * 2, B, hidden_size),
                           dtype=jnp.float32)
    c0 = jax.random.normal(kc, (num_layers * 2, B, hidden_size),
                           dtype=jnp.float32)
    params = init_bilstm_params(kp, input_size, hidden_size, num_layers)

    fwd = jax.jit(bilstm_forward, static_argnums=(4,))
    out = fwd(x, params, h0, c0, num_layers)
    out = jax.block_until_ready(out)
    assert out.shape == (B, T, 2 * hidden_size), out.shape
    assert out.dtype == jnp.float32
    print("KERNEL_OK")
</pallas_src>

<mosaic_0001>
module attributes {stable_mosaic.version = 11 : i64} {
  func.func @_bilstm_kernel(%arg0: memref<64x16xbf16, #tpu.memory_space<vmem>>, %arg1: memref<16x256xbf16, #tpu.memory_space<vmem>>, %arg2: memref<1x64x256xbf16, #tpu.memory_space<vmem>>, %arg3: memref<2x64x256xbf16, #tpu.memory_space<vmem>>, %arg4: memref<2x1x256xf32, #tpu.memory_space<vmem>>, %arg5: memref<2x8x64xf32, #tpu.memory_space<vmem>>, %arg6: memref<2x8x64xf32, #tpu.memory_space<vmem>>, %arg7: memref<64x64xf32, #tpu.memory_space<vmem>>, %arg8: memref<64x64xbf16, #tpu.memory_space<vmem>>, %arg9: memref<64x64xbf16, #tpu.memory_space<vmem>>, %arg10: memref<64x256xf32, #tpu.memory_space<vmem>>) attributes {dimension_semantics = [], scalar_prefetch = 0 : i64, scratch_operands = 3 : i64, tpu.core_type = #tpu.core_type<tc>} {
    %0 = tpu.iota {dimensions = array<i32: 1>} : vector<8x256xi32>
    %c64_i32 = arith.constant 64 : i32
    %1 = vector.broadcast %c64_i32 : i32 to vector<8x256xi32>
    %2 = arith.cmpi sge, %0, %1 : vector<8x256xi32>
    %c96_i32 = arith.constant 96 : i32
    %3 = vector.broadcast %c96_i32 : i32 to vector<8x256xi32>
    %4 = arith.cmpi slt, %0, %3 : vector<8x256xi32>
    %5 = arith.andi %2, %4 : vector<8x256xi1>
    %c192_i32 = arith.constant 192 : i32
    %6 = vector.broadcast %c192_i32 : i32 to vector<8x256xi32>
    %7 = arith.cmpi sge, %0, %6 : vector<8x256xi32>
    %c224_i32 = arith.constant 224 : i32
    %8 = vector.broadcast %c224_i32 : i32 to vector<8x256xi32>
    %9 = arith.cmpi slt, %0, %8 : vector<8x256xi32>
    %10 = arith.andi %7, %9 : vector<8x256xi1>
    %11 = arith.ori %5, %10 : vector<8x256xi1>
    %c0 = arith.constant 0 : index
    %c0_0 = arith.constant 0 : index
    %12 = vector.load %arg0[%c0, %c0_0] : memref<64x16xbf16, #tpu.memory_space<vmem>>, vector<64x16xbf16>
    %c0_1 = arith.constant 0 : index
    %c0_2 = arith.constant 0 : index
    %13 = vector.load %arg1[%c0_1, %c0_2] : memref<16x256xbf16, #tpu.memory_space<vmem>>, vector<16x256xbf16>
    %c0_3 = arith.constant 0 : index
    %c0_4 = arith.constant 0 : index
    %c0_5 = arith.constant 0 : index
    %14 = vector.load %arg3[%c0_3, %c0_4, %c0_5] : memref<2x64x256xbf16, #tpu.memory_space<vmem>>, vector<1x64x256xbf16>
    %15 = vector.shape_cast %14 : vector<1x64x256xbf16> to vector<64x256xbf16>
    %c0_6 = arith.constant 0 : index
    %c0_7 = arith.constant 0 : index
    %c0_8 = arith.constant 0 : index
    %16 = vector.load %arg4[%c0_6, %c0_7, %c0_8] : memref<2x1x256xf32, #tpu.memory_space<vmem>>, vector<1x1x256xf32>
    %17 = vector.shape_cast %16 : vector<1x1x256xf32> to vector<1x256xf32>
    %c0_9 = arith.constant 0 : index
    %c0_10 = arith.constant 0 : index
    %c0_11 = arith.constant 0 : index
    %18 = vector.load %arg5[%c0_9, %c0_10, %c0_11] : memref<2x8x64xf32, #tpu.memory_space<vmem>>, vector<1x8x64xf32>
    %19 = vector.shape_cast %18 : vector<1x8x64xf32> to vector<8x64xf32>
    %c0_12 = arith.constant 0 : index
    %c0_13 = arith.constant 0 : index
    %c0_14 = arith.constant 0 : index
    %20 = vector.load %arg6[%c0_12, %c0_13, %c0_14] : memref<2x8x64xf32, #tpu.memory_space<vmem>>, vector<1x8x64xf32>
    %21 = vector.shape_cast %20 : vector<1x8x64xf32> to vector<8x64xf32>
    %cst = arith.constant dense<0.000000e+00> : vector<64x256xf32>
    %22 = tpu.matmul %12, %13, %cst {dimension_numbers = #tpu.dot_dimension_numbers<[1], [0], [0], [1], [0, 0, 1, 1], [], []>} : vector<64x16xbf16>, vector<16x256xbf16>, vector<64x256xf32> -> vector<64x256xf32>
    %23 = vector.broadcast %17 : vector<1x256xf32> to vector<64x256xf32>
    %24 = arith.addf %22, %23 : vector<64x256xf32>
    %c0_15 = arith.constant 0 : index
    %c0_16 = arith.constant 0 : index
    %25 = vector.load %arg10[%c0_15, %c0_16] : memref<64x256xf32, #tpu.memory_space<vmem>>, vector<64x256xf32>
    tpu.vector_store %arg10[%c0_15, %c0_16], %24 {strides = array<i32>} : memref<64x256xf32, #tpu.memory_space<vmem>>, vector<64x256xf32>,
    %26 = arith.truncf %19 : vector<8x64xf32> to vector<8x64xbf16>
    %c0_i32 = arith.constant 0 : i32
    %c8_i32 = arith.constant 8 : i32
    %27 = arith.muli %c0_i32, %c8_i32 : i32
    %28 = tpu.assume_multiple %27, 8 : i32
    %c7_i32 = arith.constant 7 : i32
    %29 = arith.subi %c7_i32, %c0_i32 : i32
    %c8_i32_17 = arith.constant 8 : i32
    %30 = arith.muli %29, %c8_i32_17 : i32
    %31 = tpu.assume_multiple %30, 8 : i32
    %32 = arith.index_cast %28 : i32 to index
    %c0_18 = arith.constant 0 : index
    %33 = vector.load %arg10[%32, %c0_18] : memref<64x256xf32, #tpu.memory_space<vmem>>, vector<8x128xf32>
    %34 = arith.index_cast %31 : i32 to index
    %c128 = arith.constant 128 : index
    %35 = vector.load %arg10[%34, %c128] : memref<64x256xf32, #tpu.memory_space<vmem>>, vector<8x128xf32>
    %36 = tpu.concatenate %33, %35 in 1 : vector<8x128xf32>, vector<8x128xf32> -> vector<8x256xf32>
    %cst_19 = arith.constant dense<0.000000e+00> : vector<8x256xf32>
    %37 = tpu.matmul %26, %15, %cst_19 {dimension_numbers = #tpu.dot_dimension_numbers<[1], [0], [0], [1], [0, 0, 1, 1], [], []>} : vector<8x64xbf16>, vector<64x256xbf16>, vector<8x256xf32> -> vector<8x256xf32>
    %38 = arith.addf %36, %37 : vector<8x256xf32>
    %cst_20 = arith.constant 2.000000e+00 : f32
    %39 = vector.broadcast %cst_20 : f32 to vector<8x256xf32>
    %40 = arith.mulf %39, %38 : vector<8x256xf32>
    %41 = arith.select %11, %40, %38 : vector<8x256xi1>, vector<8x256xf32>
    %42 = arith.negf %41 : vector<8x256xf32>
    %43 = math.exp %42 : vector<8x256xf32>
    %cst_21 = arith.constant 1.000000e+00 : f32
    %44 = vector.broadcast %cst_21 : f32 to vector<8x256xf32>
    %45 = arith.addf %44, %43 : vector<8x256xf32>
    %46 = arith.divf %44, %45 : vector<8x256xf32>
    %cst_22 = arith.constant 2.000000e+00 : f32
    %47 = vector.broadcast %cst_22 : f32 to vector<8x256xf32>
    %48 = arith.mulf %47, %46 : vector<8x256xf32>
    %cst_23 = arith.constant 1.000000e+00 : f32
    %49 = vector.broadcast %cst_23 : f32 to vector<8x256xf32>
    %50 = arith.subf %48, %49 : vector<8x256xf32>
    %51 = arith.select %11, %50, %46 : vector<8x256xi1>, vector<8x256xf32>
    %52 = vector.extract_strided_slice %51 {offsets = [0, 0], sizes = [8, 32], strides = [1, 1]} : vector<8x256xf32> to vector<8x32xf32>
    %53 = vector.extract_strided_slice %51 {offsets = [0, 128], sizes = [8, 32], strides = [1, 1]} : vector<8x256xf32> to vector<8x32xf32>
    %54 = tpu.concatenate %52, %53 in 1 : vector<8x32xf32>, vector<8x32xf32> -> vector<8x64xf32>
    %55 = vector.extract_strided_slice %51 {offsets = [0, 32], sizes = [8, 32], strides = [1, 1]} : vector<8x256xf32> to vector<8x32xf32>
    %56 = vector.extract_strided_slice %51 {offsets = [0, 160], sizes = [8, 32], strides = [1, 1]} : vector<8x256xf32> to vector<8x32xf32>
    %57 = tpu.concatenate %55, %56 in 1 : vector<8x32xf32>, vector<8x32xf32> -> vector<8x64xf32>
    %58 = vector.extract_strided_slice %51 {offsets = [0, 64], sizes = [8, 32], strides = [1, 1]} : vector<8x256xf32> to vector<8x32xf32>
    %59 = vector.extract_strided_slice %51 {offsets = [0, 192], sizes = [8, 32], strides = [1, 1]} : vector<8x256xf32> to vector<8x32xf32>
    %60 = tpu.concatenate %58, %59 in 1 : vector<8x32xf32>, vector<8x32xf32> -> vector<8x64xf32>
    %61 = vector.extract_strided_slice %51 {offsets = [0, 96], sizes = [8, 32], strides = [1, 1]} : vector<8x256xf32> to vector<8x32xf32>
    %62 = vector.extract_strided_slice %51 {offsets = [0, 224], sizes = [8, 32], strides = [1, 1]} : vector<8x256xf32> to vector<8x32xf32>
    %63 = tpu.concatenate %61, %62 in 1 : vector<8x32xf32>, vector<8x32xf32> -> vector<8x64xf32>
    %64 = arith.mulf %57, %21 : vector<8x64xf32>
    %65 = arith.mulf %54, %60 : vector<8x64xf32>
    %66 = arith.addf %64, %65 : vector<8x64xf32>
    %67 = math.tanh %66 : vector<8x64xf32>
    %68 = arith.mulf %63, %67 : vector<8x64xf32>
    %69 = vector.extract_strided_slice %68 {offsets = [0, 0], sizes = [8, 32], strides = [1, 1]} : vector<8x64xf32> to vector<8x32xf32>
    %70 = arith.truncf %69 : vector<8x32xf32> to vector<8x32xbf16>
    %71 = arith.index_cast %28 : i32 to index
    %c0_24 = arith.constant 0 : index
    %72 = vector.load %arg8[%71, %c0_24] : memref<64x64xbf16, #tpu.memory_space<vmem>>, vector<8x32xbf16>
    tpu.vector_store %arg8[%71, %c0_24], %70 {strides = array<i32>} : memref<64x64xbf16, #tpu.memory_space<vmem>>, vector<8x32xbf16>,
    %73 = vector.extract_strided_slice %68 {offsets = [0, 32], sizes = [8, 32], strides = [1, 1]} : vector<8x64xf32> to vector<8x32xf32>
    %74 = arith.truncf %73 : vector<8x32xf32> to vector<8x32xbf16>
    %75 = arith.index_cast %31 : i32 to index
    %c32 = arith.constant 32 : index
    %76 = vector.load %arg8[%75, %c32] : memref<64x64xbf16, #tpu.memory_space<vmem>>, vector<8x32xbf16>
    tpu.vector_store %arg8[%75, %c32], %74 {strides = array<i32>} : memref<64x64xbf16, #tpu.memory_space<vmem>>, vector<8x32xbf16>,
    %77 = arith.truncf %68 : vector<8x64xf32> to vector<8x64xbf16>
    %c1_i32 = arith.constant 1 : i32
    %c8_i32_25 = arith.constant 8 : i32
    %78 = arith.muli %c1_i32, %c8_i32_25 : i32
    %79 = tpu.assume_multiple %78, 8 : i32
    %c7_i32_26 = arith.constant 7 : i32
    %80 = arith.subi %c7_i32_26, %c1_i32 : i32
    %c8_i32_27 = arith.constant 8 : i32
    %81 = arith.muli %80, %c8_i32_27 : i32
    %82 = tpu.assume_multiple %81, 8 : i32
    %83 = arith.index_cast %79 : i32 to index
    %c0_28 = arith.constant 0 : index
    %84 = vector.load %arg10[%83, %c0_28] : memref<64x256xf32, #tpu.memory_space<vmem>>, vector<8x128xf32>
    %85 = arith.index_cast %82 : i32 to index
    %c128_29 = arith.constant 128 : index
    %86 = vector.load %arg10[%85, %c128_29] : memref<64x256xf32, #tpu.memory_space<vmem>>, vector<8x128xf32>
    %87 = tpu.concatenate %84, %86 in 1 : vector<8x128xf32>, vector<8x128xf32> -> vector<8x256xf32>
    %cst_30 = arith.constant dense<0.000000e+00> : vector<8x256xf32>
    %88 = tpu.matmul %77, %15, %cst_30 {dimension_numbers = #tpu.dot_dimension_numbers<[1], [0], [0], [1], [0, 0, 1, 1], [], []>} : vector<8x64xbf16>, vector<64x256xbf16>, vector<8x256xf32> -> vector<8x256xf32>
    %89 = arith.addf %87, %88 : vector<8x256xf32>
    %cst_31 = arith.constant 2.000000e+00 : f32
    %90 = vector.broadcast %cst_31 : f32 to vector<8x256xf32>
    %91 = arith.mulf %90, %89 : vector<8x256xf32>
    %92 = arith.select %11, %91, %89 : vector<8x256xi1>, vector<8x256xf32>
    %93 = arith.negf %92 : vector<8x256xf32>
    %94 = math.exp %93 : vector<8x256xf32>
    %cst_32 = arith.constant 1.000000e+00 : f32
    %95 = vector.broadcast %cst_32 : f32 to vector<8x256xf32>
    %96 = arith.addf %95, %94 : vector<8x256xf32>
    %97 = arith.divf %95, %96 : vector<8x256xf32>
    %cst_33 = arith.constant 2.000000e+00 : f32
    %98 = vector.broadcast %cst_33 : f32 to vector<8x256xf32>
    %99 = arith.mulf %98, %97 : vector<8x256xf32>
    %cst_34 = arith.constant 1.000000e+00 : f32
    %100 = vector.broadcast %cst_34 : f32 to vector<8x256xf32>
    %101 = arith.subf %99, %100 : vector<8x256xf32>
    %102 = arith.select %11, %101, %97 : vector<8x256xi1>, vector<8x256xf32>
    %103 = vector.extract_strided_slice %102 {offsets = [0, 0], sizes = [8, 32], strides = [1, 1]} : vector<8x256xf32> to vector<8x32xf32>
    %104 = vector.extract_strided_slice %102 {offsets = [0, 128], sizes = [8, 32], strides = [1, 1]} : vector<8x256xf32> to vector<8x32xf32>
    %105 = tpu.concatenate %103, %104 in 1 : vector<8x32xf32>, vector<8x32xf32> -> vector<8x64xf32>
    %106 = vector.extract_strided_slice %102 {offsets = [0, 32], sizes = [8, 32], strides = [1, 1]} : vector<8x256xf32> to vector<8x32xf32>
    %107 = vector.extract_strided_slice %102 {offsets = [0, 160], sizes = [8, 32], strides = [1, 1]} : vector<8x256xf32> to vector<8x32xf32>
    %108 = tpu.concatenate %106, %107 in 1 : vector<8x32xf32>, vector<8x32xf32> -> vector<8x64xf32>
    %109 = vector.extract_strided_slice %102 {offsets = [0, 64], sizes = [8, 32], strides = [1, 1]} : vector<8x256xf32> to vector<8x32xf32>
    %110 = vector.extract_strided_slice %102 {offsets = [0, 192], sizes = [8, 32], strides = [1, 1]} : vector<8x256xf32> to vector<8x32xf32>
    %111 = tpu.concatenate %109, %110 in 1 : vector<8x32xf32>, vector<8x32xf32> -> vector<8x64xf32>
    %112 = vector.extract_strided_slice %102 {offsets = [0, 96], sizes = [8, 32], strides = [1, 1]} : vector<8x256xf32> to vector<8x32xf32>
    %113 = vector.extract_strided_slice %102 {offsets = [0, 224], sizes = [8, 32], strides = [1, 1]} : vector<8x256xf32> to vector<8x32xf32>
    %114 = tpu.concatenate %112, %113 in 1 : vector<8x32xf32>, vector<8x32xf32> -> vector<8x64xf32>
    %115 = arith.mulf %108, %66 : vector<8x64xf32>
    %116 = arith.mulf %105, %111 : vector<8x64xf32>
    %117 = arith.addf %115, %116 : vector<8x64xf32>
    %118 = math.tanh %117 : vector<8x64xf32>
    %119 = arith.mulf %114, %118 : vector<8x64xf32>
    %120 = vector.extract_strided_slice %119 {offsets = [0, 0], sizes = [8, 32], strides = [1, 1]} : vector<8x64xf32> to vector<8x32xf32>
    %121 = arith.truncf %120 : vector<8x32xf32> to vector<8x32xbf16>
    %122 = arith.index_cast %79 : i32 to index
    %c0_35 = arith.constant 0 : index
    %123 = vector.load %arg8[%122, %c0_35] : memref<64x64xbf16, #tpu.memory_space<vmem>>, vector<8x32xbf16>
    tpu.vector_store %arg8[%122, %c0_35], %121 {strides = array<i32>} : memref<64x64xbf16, #tpu.memory_space<vmem>>, vector<8x32xbf16>,
    %124 = vector.extract_strided_slice %119 {offsets = [0, 32], sizes = [8, 32], strides = [1, 1]} : vector<8x64xf32> to vector<8x32xf32>
    %125 = arith.truncf %124 : vector<8x32xf32> to vector<8x32xbf16>
    %126 = arith.index_cast %82 : i32 to index
    %c32_36 = arith.constant 32 : index
    %127 = vector.load %arg8[%126, %c32_36] : memref<64x64xbf16, #tpu.memory_space<vmem>>, vector<8x32xbf16>
    tpu.vector_store %arg8[%126, %c32_36], %125 {strides = array<i32>} : memref<64x64xbf16, #tpu.memory_space<vmem>>, vector<8x32xbf16>,
    %128 = arith.truncf %119 : vector<8x64xf32> to vector<8x64xbf16>
    %c2_i32 = arith.constant 2 : i32
    %c8_i32_37 = arith.constant 8 : i32
    %129 = arith.muli %c2_i32, %c8_i32_37 : i32
    %130 = tpu.assume_multiple %129, 8 : i32
    %c7_i32_38 = arith.constant 7 : i32
    %131 = arith.subi %c7_i32_38, %c2_i32 : i32
    %c8_i32_39 = arith.constant 8 : i32
    %132 = arith.muli %131, %c8_i32_39 : i32
    %133 = tpu.assume_multiple %132, 8 : i32
    %134 = arith.index_cast %130 : i32 to index
    %c0_40 = arith.constant 0 : index
    %135 = vector.load %arg10[%134, %c0_40] : memref<64x256xf32, #tpu.memory_space<vmem>>, vector<8x128xf32>
    %136 = arith.index_cast %133 : i32 to index
    %c128_41 = arith.constant 128 : index
    %137 = vector.load %arg10[%136, %c128_41] : memref<64x256xf32, #tpu.memory_space<vmem>>, vector<8x128xf32>
    %138 = tpu.concatenate %135, %137 in 1 : vector<8x128xf32>, vector<8x128xf32> -> vector<8x256xf32>
    %cst_42 = arith.constant dense<0.000000e+00> : vector<8x256xf32>
    %139 = tpu.matmul %128, %15, %cst_42 {dimension_numbers = #tpu.dot_dimension_numbers<[1], [0], [0], [1], [0, 0, 1, 1], [], []>} : vector<8x64xbf16>, vector<64x256xbf16>, vector<8x256xf32> -> vector<8x256xf32>
    %140 = arith.addf %138, %139 : vector<8x256xf32>
    %cst_43 = arith.constant 2.000000e+00 : f32
    %141 = vector.broadcast %cst_43 : f32 to vector<8x256xf32>
    %142 = arith.mulf %141, %140 : vector<8x256xf32>
    %143 = arith.select %11, %142, %140 : vector<8x256xi1>, vector<8x256xf32>
    %144 = arith.negf %143 : vector<8x256xf32>
    %145 = math.exp %144 : vector<8x256xf32>
    %cst_44 = arith.constant 1.000000e+00 : f32
    %146 = vector.broadcast %cst_44 : f32 to vector<8x256xf32>
    %147 = arith.addf %146, %145 : vector<8x256xf32>
    %148 = arith.divf %146, %147 : vector<8x256xf32>
    %cst_45 = arith.constant 2.000000e+00 : f32
    %149 = vector.broadcast %cst_45 : f32 to vector<8x256xf32>
    %150 = arith.mulf %149, %148 : vector<8x256xf32>
    %cst_46 = arith.constant 1.000000e+00 : f32
    %151 = vector.broadcast %cst_46 : f32 to vector<8x256xf32>
    %152 = arith.subf %150, %151 : vector<8x256xf32>
    %153 = arith.select %11, %152, %148 : vector<8x256xi1>, vector<8x256xf32>
    %154 = vector.extract_strided_slice %153 {offsets = [0, 0], sizes = [8, 32], strides = [1, 1]} : vector<8x256xf32> to vector<8x32xf32>
    %155 = vector.extract_strided_slice %153 {offsets = [0, 128], sizes = [8, 32], strides = [1, 1]} : vector<8x256xf32> to vector<8x32xf32>
    %156 = tpu.concatenate %154, %155 in 1 : vector<8x32xf32>, vector<8x32xf32> -> vector<8x64xf32>
    %157 = vector.extract_strided_slice %153 {offsets = [0, 32], sizes = [8, 32], strides = [1, 1]} : vector<8x256xf32> to vector<8x32xf32>
    %158 = vector.extract_strided_slice %153 {offsets = [0, 160], sizes = [8, 32], strides = [1, 1]} : vector<8x256xf32> to vector<8x32xf32>
    %159 = tpu.concatenate %157, %158 in 1 : vector<8x32xf32>, vector<8x32xf32> -> vector<8x64xf32>
    %160 = vector.extract_strided_slice %153 {offsets = [0, 64], sizes = [8, 32], strides = [1, 1]} : vector<8x256xf32> to vector<8x32xf32>
    %161 = vector.extract_strided_slice %153 {offsets = [0, 192], sizes = [8, 32], strides = [1, 1]} : vector<8x256xf32> to vector<8x32xf32>
    %162 = tpu.concatenate %160, %161 in 1 : vector<8x32xf32>, vector<8x32xf32> -> vector<8x64xf32>
    %163 = vector.extract_strided_slice %153 {offsets = [0, 96], sizes = [8, 32], strides = [1, 1]} : vector<8x256xf32> to vector<8x32xf32>
    %164 = vector.extract_strided_slice %153 {offsets = [0, 224], sizes = [8, 32], strides = [1, 1]} : vector<8x256xf32> to vector<8x32xf32>
    %165 = tpu.concatenate %163, %164 in 1 : vector<8x32xf32>, vector<8x32xf32> -> vector<8x64xf32>
    %166 = arith.mulf %159, %117 : vector<8x64xf32>
    %167 = arith.mulf %156, %162 : vector<8x64xf32>
    %168 = arith.addf %166, %167 : vector<8x64xf32>
    %169 = math.tanh %168 : vector<8x64xf32>
    %170 = arith.mulf %165, %169 : vector<8x64xf32>
    %171 = vector.extract_strided_slice %170 {offsets = [0, 0], sizes = [8, 32], strides = [1, 1]} : vector<8x64xf32> to vector<8x32xf32>
    %172 = arith.truncf %171 : vector<8x32xf32> to vector<8x32xbf16>
    %173 = arith.index_cast %130 : i32 to index
    %c0_47 = arith.constant 0 : index
    %174 = vector.load %arg8[%173, %c0_47] : memref<64x64xbf16, #tpu.memory_space<vmem>>, vector<8x32xbf16>
    tpu.vector_store %arg8[%173, %c0_47], %172 {strides = array<i32>} : memref<64x64xbf16, #tpu.memory_space<vmem>>, vector<8x32xbf16>,
    %175 = vector.extract_strided_slice %170 {offsets = [0, 32], sizes = [8, 32], strides = [1, 1]} : vector<8x64xf32> to vector<8x32xf32>
    %176 = arith.truncf %175 : vector<8x32xf32> to vector<8x32xbf16>
    %177 = arith.index_cast %133 : i32 to index
    %c32_48 = arith.constant 32 : index
    %178 = vector.load %arg8[%177, %c32_48] : memref<64x64xbf16, #tpu.memory_space<vmem>>, vector<8x32xbf16>
    tpu.vector_store %arg8[%177, %c32_48], %176 {strides = array<i32>} : memref<64x64xbf16, #tpu.memory_space<vmem>>, vector<8x32xbf16>,
    %179 = arith.truncf %170 : vector<8x64xf32> to vector<8x64xbf16>
    %c3_i32 = arith.constant 3 : i32
    %c8_i32_49 = arith.constant 8 : i32
    %180 = arith.muli %c3_i32, %c8_i32_49 : i32
    %181 = tpu.assume_multiple %180, 8 : i32
    %c7_i32_50 = arith.constant 7 : i32
    %182 = arith.subi %c7_i32_50, %c3_i32 : i32
    %c8_i32_51 = arith.constant 8 : i32
    %183 = arith.muli %182, %c8_i32_51 : i32
    %184 = tpu.assume_multiple %183, 8 : i32
    %185 = arith.index_cast %181 : i32 to index
    %c0_52 = arith.constant 0 : index
    %186 = vector.load %arg10[%185, %c0_52] : memref<64x256xf32, #tpu.memory_space<vmem>>, vector<8x128xf32>
    %187 = arith.index_cast %184 : i32 to index
    %c128_53 = arith.constant 128 : index
    %188 = vector.load %arg10[%187, %c128_53] : memref<64x256xf32, #tpu.memory_space<vmem>>, vector<8x128xf32>
    %189 = tpu.concatenate %186, %188 in 1 : vector<8x128xf32>, vector<8x128xf32> -> vector<8x256xf32>
    %cst_54 = arith.constant dense<0.000000e+00> : vector<8x256xf32>
    %190 = tpu.matmul %179, %15, %cst_54 {dimension_numbers = #tpu.dot_dimension_numbers<[1], [0], [0], [1], [0, 0, 1, 1], [], []>} : vector<8x64xbf16>, vector<64x256xbf16>, vector<8x256xf32> -> vector<8x256xf32>
    %191 = arith.addf %189, %190 : vector<8x256xf32>
    %cst_55 = arith.constant 2.000000e+00 : f32
    %192 = vector.broadcast %cst_55 : f32 to vector<8x256xf32>
    %193 = arith.mulf %192, %191 : vector<8x256xf32>
    %194 = arith.select %11, %193, %191 : vector<8x256xi1>, vector<8x256xf32>
    %195 = arith.negf %194 : vector<8x256xf32>
    %196 = math.exp %195 : vector<8x256xf32>
    %cst_56 = arith.constant 1.000000e+00 : f32
    %197 = vector.broadcast %cst_56 : f32 to vector<8x256xf32>
    %198 = arith.addf %197, %196 : vector<8x256xf32>
    %199 = arith.divf %197, %198 : vector<8x256xf32>
    %cst_57 = arith.constant 2.000000e+00 : f32
    %200 = vector.broadcast %cst_57 : f32 to vector<8x256xf32>
    %201 = arith.mulf %200, %199 : vector<8x256xf32>
    %cst_58 = arith.constant 1.000000e+00 : f32
    %202 = vector.broadcast %cst_58 : f32 to vector<8x256xf32>
    %203 = arith.subf %201, %202 : vector<8x256xf32>
    %204 = arith.select %11, %203, %199 : vector<8x256xi1>, vector<8x256xf32>
    %205 = vector.extract_strided_slice %204 {offsets = [0, 0], sizes = [8, 32], strides = [1, 1]} : vector<8x256xf32> to vector<8x32xf32>
    %206 = vector.extract_strided_slice %204 {offsets = [0, 128], sizes = [8, 32], strides = [1, 1]} : vector<8x256xf32> to vector<8x32xf32>
    %207 = tpu.concatenate %205, %206 in 1 : vector<8x32xf32>, vector<8x32xf32> -> vector<8x64xf32>
    %208 = vector.extract_strided_slice %204 {offsets = [0, 32], sizes = [8, 32], strides = [1, 1]} : vector<8x256xf32> to vector<8x32xf32>
    %209 = vector.extract_strided_slice %204 {offsets = [0, 160], sizes = [8, 32], strides = [1, 1]} : vector<8x256xf32> to vector<8x32xf32>
    %210 = tpu.concatenate %208, %209 in 1 : vector<8x32xf32>, vector<8x32xf32> -> vector<8x64xf32>
    %211 = vector.extract_strided_slice %204 {offsets = [0, 64], sizes = [8, 32], strides = [1, 1]} : vector<8x256xf32> to vector<8x32xf32>
    %212 = vector.extract_strided_slice %204 {offsets = [0, 192], sizes = [8, 32], strides = [1, 1]} : vector<8x256xf32> to vector<8x32xf32>
    %213 = tpu.concatenate %211, %212 in 1 : vector<8x32xf32>, vector<8x32xf32> -> vector<8x64xf32>
    %214 = vector.extract_strided_slice %204 {offsets = [0, 96], sizes = [8, 32], strides = [1, 1]} : vector<8x256xf32> to vector<8x32xf32>
    %215 = vector.extract_strided_slice %204 {offsets = [0, 224], sizes = [8, 32], strides = [1, 1]} : vector<8x256xf32> to vector<8x32xf32>
    %216 = tpu.concatenate %214, %215 in 1 : vector<8x32xf32>, vector<8x32xf32> -> vector<8x64xf32>
    %217 = arith.mulf %210, %168 : vector<8x64xf32>
    %218 = arith.mulf %207, %213 : vector<8x64xf32>
    %219 = arith.addf %217, %218 : vector<8x64xf32>
    %220 = math.tanh %219 : vector<8x64xf32>
    %221 = arith.mulf %216, %220 : vector<8x64xf32>
    %222 = vector.extract_strided_slice %221 {offsets = [0, 0], sizes = [8, 32], strides = [1, 1]} : vector<8x64xf32> to vector<8x32xf32>
    %223 = arith.truncf %222 : vector<8x32xf32> to vector<8x32xbf16>
    %224 = arith.index_cast %181 : i32 to index
    %c0_59 = arith.constant 0 : index
    %225 = vector.load %arg8[%224, %c0_59] : memref<64x64xbf16, #tpu.memory_space<vmem>>, vector<8x32xbf16>
    tpu.vector_store %arg8[%224, %c0_59], %223 {strides = array<i32>} : memref<64x64xbf16, #tpu.memory_space<vmem>>, vector<8x32xbf16>,
    %226 = vector.extract_strided_slice %221 {offsets = [0, 32], sizes = [8, 32], strides = [1, 1]} : vector<8x64xf32> to vector<8x32xf32>
    %227 = arith.truncf %226 : vector<8x32xf32> to vector<8x32xbf16>
    %228 = arith.index_cast %184 : i32 to index
    %c32_60 = arith.constant 32 : index
    %229 = vector.load %arg8[%228, %c32_60] : memref<64x64xbf16, #tpu.memory_space<vmem>>, vector<8x32xbf16>
    tpu.vector_store %arg8[%228, %c32_60], %227 {strides = array<i32>} : memref<64x64xbf16, #tpu.memory_space<vmem>>, vector<8x32xbf16>,
    %230 = arith.truncf %221 : vector<8x64xf32> to vector<8x64xbf16>
    %c4_i32 = arith.constant 4 : i32
    %c8_i32_61 = arith.constant 8 : i32
    %231 = arith.muli %c4_i32, %c8_i32_61 : i32
    %232 = tpu.assume_multiple %231, 8 : i32
    %c7_i32_62 = arith.constant 7 : i32
    %233 = arith.subi %c7_i32_62, %c4_i32 : i32
    %c8_i32_63 = arith.constant 8 : i32
    %234 = arith.muli %233, %c8_i32_63 : i32
    %235 = tpu.assume_multiple %234, 8 : i32
    %236 = arith.index_cast %232 : i32 to index
    %c0_64 = arith.constant 0 : index
    %237 = vector.load %arg10[%236, %c0_64] : memref<64x256xf32, #tpu.memory_space<vmem>>, vector<8x128xf32>
    %238 = arith.index_cast %235 : i32 to index
    %c128_65 = arith.constant 128 : index
    %239 = vector.load %arg10[%238, %c128_65] : memref<64x256xf32, #tpu.memory_space<vmem>>, vector<8x128xf32>
    %240 = tpu.concatenate %237, %239 in 1 : vector<8x128xf32>, vector<8x128xf32> -> vector<8x256xf32>
    %cst_66 = arith.constant dense<0.000000e+00> : vector<8x256xf32>
    %241 = tpu.matmul %230, %15, %cst_66 {dimension_numbers = #tpu.dot_dimension_numbers<[1], [0], [0], [1], [0, 0, 1, 1], [], []>} : vector<8x64xbf16>, vector<64x256xbf16>, vector<8x256xf32> -> vector<8x256xf32>
    %242 = arith.addf %240, %241 : vector<8x256xf32>
    %cst_67 = arith.constant 2.000000e+00 : f32
    %243 = vector.broadcast %cst_67 : f32 to vector<8x256xf32>
    %244 = arith.mulf %243, %242 : vector<8x256xf32>
    %245 = arith.select %11, %244, %242 : vector<8x256xi1>, vector<8x256xf32>
    %246 = arith.negf %245 : vector<8x256xf32>
    %247 = math.exp %246 : vector<8x256xf32>
    %cst_68 = arith.constant 1.000000e+00 : f32
    %248 = vector.broadcast %cst_68 : f32 to vector<8x256xf32>
    %249 = arith.addf %248, %247 : vector<8x256xf32>
    %250 = arith.divf %248, %249 : vector<8x256xf32>
    %cst_69 = arith.constant 2.000000e+00 : f32
    %251 = vector.broadcast %cst_69 : f32 to vector<8x256xf32>
    %252 = arith.mulf %251, %250 : vector<8x256xf32>
    %cst_70 = arith.constant 1.000000e+00 : f32
    %253 = vector.broadcast %cst_70 : f32 to vector<8x256xf32>
    %254 = arith.subf %252, %253 : vector<8x256xf32>
    %255 = arith.select %11, %254, %250 : vector<8x256xi1>, vector<8x256xf32>
    %256 = vector.extract_strided_slice %255 {offsets = [0, 0], sizes = [8, 32], strides = [1, 1]} : vector<8x256xf32> to vector<8x32xf32>
    %257 = vector.extract_strided_slice %255 {offsets = [0, 128], sizes = [8, 32], strides = [1, 1]} : vector<8x256xf32> to vector<8x32xf32>
    %258 = tpu.concatenate %256, %257 in 1 : vector<8x32xf32>, vector<8x32xf32> -> vector<8x64xf32>
    %259 = vector.extract_strided_slice %255 {offsets = [0, 32], sizes = [8, 32], strides = [1, 1]} : vector<8x256xf32> to vector<8x32xf32>
    %260 = vector.extract_strided_slice %255 {offsets = [0, 160], sizes = [8, 32], strides = [1, 1]} : vector<8x256xf32> to vector<8x32xf32>
    %261 = tpu.concatenate %259, %260 in 1 : vector<8x32xf32>, vector<8x32xf32> -> vector<8x64xf32>
    %262 = vector.extract_strided_slice %255 {offsets = [0, 64], sizes = [8, 32], strides = [1, 1]} : vector<8x256xf32> to vector<8x32xf32>
    %263 = vector.extract_strided_slice %255 {offsets = [0, 192], sizes = [8, 32], strides = [1, 1]} : vector<8x256xf32> to vector<8x32xf32>
    %264 = tpu.concatenate %262, %263 in 1 : vector<8x32xf32>, vector<8x32xf32> -> vector<8x64xf32>
    %265 = vector.extract_strided_slice %255 {offsets = [0, 96], sizes = [8, 32], strides = [1, 1]} : vector<8x256xf32> to vector<8x32xf32>
    %266 = vector.extract_strided_slice %255 {offsets = [0, 224], sizes = [8, 32], strides = [1, 1]} : vector<8x256xf32> to vector<8x32xf32>
    %267 = tpu.concatenate %265, %266 in 1 : vector<8x32xf32>, vector<8x32xf32> -> vector<8x64xf32>
    %268 = arith.mulf %261, %219 : vector<8x64xf32>
    %269 = arith.mulf %258, %264 : vector<8x64xf32>
    %270 = arith.addf %268, %269 : vector<8x64xf32>
    %271 = math.tanh %270 : vector<8x64xf32>
    %272 = arith.mulf %267, %271 : vector<8x64xf32>
    %273 = vector.extract_strided_slice %272 {offsets = [0, 0], sizes = [8, 32], strides = [1, 1]} : vector<8x64xf32> to vector<8x32xf32>
    %274 = arith.truncf %273 : vector<8x32xf32> to vector<8x32xbf16>
    %275 = arith.index_cast %232 : i32 to index
    %c0_71 = arith.constant 0 : index
    %276 = vector.load %arg8[%275, %c0_71] : memref<64x64xbf16, #tpu.memory_space<vmem>>, vector<8x32xbf16>
    tpu.vector_store %arg8[%275, %c0_71], %274 {strides = array<i32>} : memref<64x64xbf16, #tpu.memory_space<vmem>>, vector<8x32xbf16>,
    %277 = vector.extract_strided_slice %272 {offsets = [0, 32], sizes = [8, 32], strides = [1, 1]} : vector<8x64xf32> to vector<8x32xf32>
    %278 = arith.truncf %277 : vector<8x32xf32> to vector<8x32xbf16>
    %279 = arith.index_cast %235 : i32 to index
    %c32_72 = arith.constant 32 : index
    %280 = vector.load %arg8[%279, %c32_72] : memref<64x64xbf16, #tpu.memory_space<vmem>>, vector<8x32xbf16>
    tpu.vector_store %arg8[%279, %c32_72], %278 {strides = array<i32>} : memref<64x64xbf16, #tpu.memory_space<vmem>>, vector<8x32xbf16>,
    %281 = arith.truncf %272 : vector<8x64xf32> to vector<8x64xbf16>
    %c5_i32 = arith.constant 5 : i32
    %c8_i32_73 = arith.constant 8 : i32
    %282 = arith.muli %c5_i32, %c8_i32_73 : i32
    %283 = tpu.assume_multiple %282, 8 : i32
    %c7_i32_74 = arith.constant 7 : i32
    %284 = arith.subi %c7_i32_74, %c5_i32 : i32
    %c8_i32_75 = arith.constant 8 : i32
    %285 = arith.muli %284, %c8_i32_75 : i32
    %286 = tpu.assume_multiple %285, 8 : i32
    %287 = arith.index_cast %283 : i32 to index
    %c0_76 = arith.constant 0 : index
    %288 = vector.load %arg10[%287, %c0_76] : memref<64x256xf32, #tpu.memory_space<vmem>>, vector<8x128xf32>
    %289 = arith.index_cast %286 : i32 to index
    %c128_77 = arith.constant 128 : index
    %290 = vector.load %arg10[%289, %c128_77] : memref<64x256xf32, #tpu.memory_space<vmem>>, vector<8x128xf32>
    %291 = tpu.concatenate %288, %290 in 1 : vector<8x128xf32>, vector<8x128xf32> -> vector<8x256xf32>
    %cst_78 = arith.constant dense<0.000000e+00> : vector<8x256xf32>
    %292 = tpu.matmul %281, %15, %cst_78 {dimension_numbers = #tpu.dot_dimension_numbers<[1], [0], [0], [1], [0, 0, 1, 1], [], []>} : vector<8x64xbf16>, vector<64x256xbf16>, vector<8x256xf32> -> vector<8x256xf32>
    %293 = arith.addf %291, %292 : vector<8x256xf32>
    %cst_79 = arith.constant 2.000000e+00 : f32
    %294 = vector.broadcast %cst_79 : f32 to vector<8x256xf32>
    %295 = arith.mulf %294, %293 : vector<8x256xf32>
    %296 = arith.select %11, %295, %293 : vector<8x256xi1>, vector<8x256xf32>
    %297 = arith.negf %296 : vector<8x256xf32>
    %298 = math.exp %297 : vector<8x256xf32>
    %cst_80 = arith.constant 1.000000e+00 : f32
    %299 = vector.broadcast %cst_80 : f32 to vector<8x256xf32>
    %300 = arith.addf %299, %298 : vector<8x256xf32>
    %301 = arith.divf %299, %300 : vector<8x256xf32>
    %cst_81 = arith.constant 2.000000e+00 : f32
    %302 = vector.broadcast %cst_81 : f32 to vector<8x256xf32>
    %303 = arith.mulf %302, %301 : vector<8x256xf32>
    %cst_82 = arith.constant 1.000000e+00 : f32
    %304 = vector.broadcast %cst_82 : f32 to vector<8x256xf32>
    %305 = arith.subf %303, %304 : vector<8x256xf32>
    %306 = arith.select %11, %305, %301 : vector<8x256xi1>, vector<8x256xf32>
    %307 = vector.extract_strided_slice %306 {offsets = [0, 0], sizes = [8, 32], strides = [1, 1]} : vector<8x256xf32> to vector<8x32xf32>
    %308 = vector.extract_strided_slice %306 {offsets = [0, 128], sizes = [8, 32], strides = [1, 1]} : vector<8x256xf32> to vector<8x32xf32>
    %309 = tpu.concatenate %307, %308 in 1 : vector<8x32xf32>, vector<8x32xf32> -> vector<8x64xf32>
    %310 = vector.extract_strided_slice %306 {offsets = [0, 32], sizes = [8, 32], strides = [1, 1]} : vector<8x256xf32> to vector<8x32xf32>
    %311 = vector.extract_strided_slice %306 {offsets = [0, 160], sizes = [8, 32], strides = [1, 1]} : vector<8x256xf32> to vector<8x32xf32>
    %312 = tpu.concatenate %310, %311 in 1 : vector<8x32xf32>, vector<8x32xf32> -> vector<8x64xf32>
    %313 = vector.extract_strided_slice %306 {offsets = [0, 64], sizes = [8, 32], strides = [1, 1]} : vector<8x256xf32> to vector<8x32xf32>
    %314 = vector.extract_strided_slice %306 {offsets = [0, 192], sizes = [8, 32], strides = [1, 1]} : vector<8x256xf32> to vector<8x32xf32>
    %315 = tpu.concatenate %313, %314 in 1 : vector<8x32xf32>, vector<8x32xf32> -> vector<8x64xf32>
    %316 = vector.extract_strided_slice %306 {offsets = [0, 96], sizes = [8, 32], strides = [1, 1]} : vector<8x256xf32> to vector<8x32xf32>
    %317 = vector.extract_strided_slice %306 {offsets = [0, 224], sizes = [8, 32], strides = [1, 1]} : vector<8x256xf32> to vector<8x32xf32>
    %318 = tpu.concatenate %316, %317 in 1 : vector<8x32xf32>, vector<8x32xf32> -> vector<8x64xf32>
    %319 = arith.mulf %312, %270 : vector<8x64xf32>
    %320 = arith.mulf %309, %315 : vector<8x64xf32>
    %321 = arith.addf %319, %320 : vector<8x64xf32>
    %322 = math.tanh %321 : vector<8x64xf32>
    %323 = arith.mulf %318, %322 : vector<8x64xf32>
    %324 = vector.extract_strided_slice %323 {offsets = [0, 0], sizes = [8, 32], strides = [1, 1]} : vector<8x64xf32> to vector<8x32xf32>
    %325 = arith.truncf %324 : vector<8x32xf32> to vector<8x32xbf16>
    %326 = arith.index_cast %283 : i32 to index
    %c0_83 = arith.constant 0 : index
    %327 = vector.load %arg8[%326, %c0_83] : memref<64x64xbf16, #tpu.memory_space<vmem>>, vector<8x32xbf16>
    tpu.vector_store %arg8[%326, %c0_83], %325 {strides = array<i32>} : memref<64x64xbf16, #tpu.memory_space<vmem>>, vector<8x32xbf16>,
    %328 = vector.extract_strided_slice %323 {offsets = [0, 32], sizes = [8, 32], strides = [1, 1]} : vector<8x64xf32> to vector<8x32xf32>
    %329 = arith.truncf %328 : vector<8x32xf32> to vector<8x32xbf16>
    %330 = arith.index_cast %286 : i32 to index
    %c32_84 = arith.constant 32 : index
    %331 = vector.load %arg8[%330, %c32_84] : memref<64x64xbf16, #tpu.memory_space<vmem>>, vector<8x32xbf16>
    tpu.vector_store %arg8[%330, %c32_84], %329 {strides = array<i32>} : memref<64x64xbf16, #tpu.memory_space<vmem>>, vector<8x32xbf16>,
    %332 = arith.truncf %323 : vector<8x64xf32> to vector<8x64xbf16>
    %c6_i32 = arith.constant 6 : i32
    %c8_i32_85 = arith.constant 8 : i32
    %333 = arith.muli %c6_i32, %c8_i32_85 : i32
    %334 = tpu.assume_multiple %333, 8 : i32
    %c7_i32_86 = arith.constant 7 : i32
    %335 = arith.subi %c7_i32_86, %c6_i32 : i32
    %c8_i32_87 = arith.constant 8 : i32
    %336 = arith.muli %335, %c8_i32_87 : i32
    %337 = tpu.assume_multiple %336, 8 : i32
    %338 = arith.index_cast %334 : i32 to index
    %c0_88 = arith.constant 0 : index
    %339 = vector.load %arg10[%338, %c0_88] : memref<64x256xf32, #tpu.memory_space<vmem>>, vector<8x128xf32>
    %340 = arith.index_cast %337 : i32 to index
    %c128_89 = arith.constant 128 : index
    %341 = vector.load %arg10[%340, %c128_89] : memref<64x256xf32, #tpu.memory_space<vmem>>, vector<8x128xf32>
    %342 = tpu.concatenate %339, %341 in 1 : vector<8x128xf32>, vector<8x128xf32> -> vector<8x256xf32>
    %cst_90 = arith.constant dense<0.000000e+00> : vector<8x256xf32>
    %343 = tpu.matmul %332, %15, %cst_90 {dimension_numbers = #tpu.dot_dimension_numbers<[1], [0], [0], [1], [0, 0, 1, 1], [], []>} : vector<8x64xbf16>, vector<64x256xbf16>, vector<8x256xf32> -> vector<8x256xf32>
    %344 = arith.addf %342, %343 : vector<8x256xf32>
    %cst_91 = arith.constant 2.000000e+00 : f32
    %345 = vector.broadcast %cst_91 : f32 to vector<8x256xf32>
    %346 = arith.mulf %345, %344 : vector<8x256xf32>
    %347 = arith.select %11, %346, %344 : vector<8x256xi1>, vector<8x256xf32>
    %348 = arith.negf %347 : vector<8x256xf32>
    %349 = math.exp %348 : vector<8x256xf32>
    %cst_92 = arith.constant 1.000000e+00 : f32
    %350 = vector.broadcast %cst_92 : f32 to vector<8x256xf32>
    %351 = arith.addf %350, %349 : vector<8x256xf32>
    %352 = arith.divf %350, %351 : vector<8x256xf32>
    %cst_93 = arith.constant 2.000000e+00 : f32
    %353 = vector.broadcast %cst_93 : f32 to vector<8x256xf32>
    %354 = arith.mulf %353, %352 : vector<8x256xf32>
    %cst_94 = arith.constant 1.000000e+00 : f32
    %355 = vector.broadcast %cst_94 : f32 to vector<8x256xf32>
    %356 = arith.subf %354, %355 : vector<8x256xf32>
    %357 = arith.select %11, %356, %352 : vector<8x256xi1>, vector<8x256xf32>
    %358 = vector.extract_strided_slice %357 {offsets = [0, 0], sizes = [8, 32], strides = [1, 1]} : vector<8x256xf32> to vector<8x32xf32>
    %359 = vector.extract_strided_slice %357 {offsets = [0, 128], sizes = [8, 32], strides = [1, 1]} : vector<8x256xf32> to vector<8x32xf32>
    %360 = tpu.concatenate %358, %359 in 1 : vector<8x32xf32>, vector<8x32xf32> -> vector<8x64xf32>
    %361 = vector.extract_strided_slice %357 {offsets = [0, 32], sizes = [8, 32], strides = [1, 1]} : vector<8x256xf32> to vector<8x32xf32>
    %362 = vector.extract_strided_slice %357 {offsets = [0, 160], sizes = [8, 32], strides = [1, 1]} : vector<8x256xf32> to vector<8x32xf32>
    %363 = tpu.concatenate %361, %362 in 1 : vector<8x32xf32>, vector<8x32xf32> -> vector<8x64xf32>
    %364 = vector.extract_strided_slice %357 {offsets = [0, 64], sizes = [8, 32], strides = [1, 1]} : vector<8x256xf32> to vector<8x32xf32>
    %365 = vector.extract_strided_slice %357 {offsets = [0, 192], sizes = [8, 32], strides = [1, 1]} : vector<8x256xf32> to vector<8x32xf32>
    %366 = tpu.concatenate %364, %365 in 1 : vector<8x32xf32>, vector<8x32xf32> -> vector<8x64xf32>
    %367 = vector.extract_strided_slice %357 {offsets = [0, 96], sizes = [8, 32], strides = [1, 1]} : vector<8x256xf32> to vector<8x32xf32>
    %368 = vector.extract_strided_slice %357 {offsets = [0, 224], sizes = [8, 32], strides = [1, 1]} : vector<8x256xf32> to vector<8x32xf32>
    %369 = tpu.concatenate %367, %368 in 1 : vector<8x32xf32>, vector<8x32xf32> -> vector<8x64xf32>
    %370 = arith.mulf %363, %321 : vector<8x64xf32>
    %371 = arith.mulf %360, %366 : vector<8x64xf32>
    %372 = arith.addf %370, %371 : vector<8x64xf32>
    %373 = math.tanh %372 : vector<8x64xf32>
    %374 = arith.mulf %369, %373 : vector<8x64xf32>
    %375 = vector.extract_strided_slice %374 {offsets = [0, 0], sizes = [8, 32], strides = [1, 1]} : vector<8x64xf32> to vector<8x32xf32>
    %376 = arith.truncf %375 : vector<8x32xf32> to vector<8x32xbf16>
    %377 = arith.index_cast %334 : i32 to index
    %c0_95 = arith.constant 0 : index
    %378 = vector.load %arg8[%377, %c0_95] : memref<64x64xbf16, #tpu.memory_space<vmem>>, vector<8x32xbf16>
    tpu.vector_store %arg8[%377, %c0_95], %376 {strides = array<i32>} : memref<64x64xbf16, #tpu.memory_space<vmem>>, vector<8x32xbf16>,
    %379 = vector.extract_strided_slice %374 {offsets = [0, 32], sizes = [8, 32], strides = [1, 1]} : vector<8x64xf32> to vector<8x32xf32>
    %380 = arith.truncf %379 : vector<8x32xf32> to vector<8x32xbf16>
    %381 = arith.index_cast %337 : i32 to index
    %c32_96 = arith.constant 32 : index
    %382 = vector.load %arg8[%381, %c32_96] : memref<64x64xbf16, #tpu.memory_space<vmem>>, vector<8x32xbf16>
    tpu.vector_store %arg8[%381, %c32_96], %380 {strides = array<i32>} : memref<64x64xbf16, #tpu.memory_space<vmem>>, vector<8x32xbf16>,
    %383 = arith.truncf %374 : vector<8x64xf32> to vector<8x64xbf16>
    %c7_i32_97 = arith.constant 7 : i32
    %c8_i32_98 = arith.constant 8 : i32
    %384 = arith.muli %c7_i32_97, %c8_i32_98 : i32
    %385 = tpu.assume_multiple %384, 8 : i32
    %c7_i32_99 = arith.constant 7 : i32
    %386 = arith.subi %c7_i32_99, %c7_i32_97 : i32
    %c8_i32_100 = arith.constant 8 : i32
    %387 = arith.muli %386, %c8_i32_100 : i32
    %388 = tpu.assume_multiple %387, 8 : i32
    %389 = arith.index_cast %385 : i32 to index
    %c0_101 = arith.constant 0 : index
    %390 = vector.load %arg10[%389, %c0_101] : memref<64x256xf32, #tpu.memory_space<vmem>>, vector<8x128xf32>
    %391 = arith.index_cast %388 : i32 to index
    %c128_102 = arith.constant 128 : index
    %392 = vector.load %arg10[%391, %c128_102] : memref<64x256xf32, #tpu.memory_space<vmem>>, vector<8x128xf32>
    %393 = tpu.concatenate %390, %392 in 1 : vector<8x128xf32>, vector<8x128xf32> -> vector<8x256xf32>
    %cst_103 = arith.constant dense<0.000000e+00> : vector<8x256xf32>
    %394 = tpu.matmul %383, %15, %cst_103 {dimension_numbers = #tpu.dot_dimension_numbers<[1], [0], [0], [1], [0, 0, 1, 1], [], []>} : vector<8x64xbf16>, vector<64x256xbf16>, vector<8x256xf32> -> vector<8x256xf32>
    %395 = arith.addf %393, %394 : vector<8x256xf32>
    %cst_104 = arith.constant 2.000000e+00 : f32
    %396 = vector.broadcast %cst_104 : f32 to vector<8x256xf32>
    %397 = arith.mulf %396, %395 : vector<8x256xf32>
    %398 = arith.select %11, %397, %395 : vector<8x256xi1>, vector<8x256xf32>
    %399 = arith.negf %398 : vector<8x256xf32>
    %400 = math.exp %399 : vector<8x256xf32>
    %cst_105 = arith.constant 1.000000e+00 : f32
    %401 = vector.broadcast %cst_105 : f32 to vector<8x256xf32>
    %402 = arith.addf %401, %400 : vector<8x256xf32>
    %403 = arith.divf %401, %402 : vector<8x256xf32>
    %cst_106 = arith.constant 2.000000e+00 : f32
    %404 = vector.broadcast %cst_106 : f32 to vector<8x256xf32>
    %405 = arith.mulf %404, %403 : vector<8x256xf32>
    %cst_107 = arith.constant 1.000000e+00 : f32
    %406 = vector.broadcast %cst_107 : f32 to vector<8x256xf32>
    %407 = arith.subf %405, %406 : vector<8x256xf32>
    %408 = arith.select %11, %407, %403 : vector<8x256xi1>, vector<8x256xf32>
    %409 = vector.extract_strided_slice %408 {offsets = [0, 0], sizes = [8, 32], strides = [1, 1]} : vector<8x256xf32> to vector<8x32xf32>
    %410 = vector.extract_strided_slice %408 {offsets = [0, 128], sizes = [8, 32], strides = [1, 1]} : vector<8x256xf32> to vector<8x32xf32>
    %411 = tpu.concatenate %409, %410 in 1 : vector<8x32xf32>, vector<8x32xf32> -> vector<8x64xf32>
    %412 = vector.extract_strided_slice %408 {offsets = [0, 32], sizes = [8, 32], strides = [1, 1]} : vector<8x256xf32> to vector<8x32xf32>
    %413 = vector.extract_strided_slice %408 {offsets = [0, 160], sizes = [8, 32], strides = [1, 1]} : vector<8x256xf32> to vector<8x32xf32>
    %414 = tpu.concatenate %412, %413 in 1 : vector<8x32xf32>, vector<8x32xf32> -> vector<8x64xf32>
    %415 = vector.extract_strided_slice %408 {offsets = [0, 64], sizes = [8, 32], strides = [1, 1]} : vector<8x256xf32> to vector<8x32xf32>
    %416 = vector.extract_strided_slice %408 {offsets = [0, 192], sizes = [8, 32], strides = [1, 1]} : vector<8x256xf32> to vector<8x32xf32>
    %417 = tpu.concatenate %415, %416 in 1 : vector<8x32xf32>, vector<8x32xf32> -> vector<8x64xf32>
    %418 = vector.extract_strided_slice %408 {offsets = [0, 96], sizes = [8, 32], strides = [1, 1]} : vector<8x256xf32> to vector<8x32xf32>
    %419 = vector.extract_strided_slice %408 {offsets = [0, 224], sizes = [8, 32], strides = [1, 1]} : vector<8x256xf32> to vector<8x32xf32>
    %420 = tpu.concatenate %418, %419 in 1 : vector<8x32xf32>, vector<8x32xf32> -> vector<8x64xf32>
    %421 = arith.mulf %414, %372 : vector<8x64xf32>
    %422 = arith.mulf %411, %417 : vector<8x64xf32>
    %423 = arith.addf %421, %422 : vector<8x64xf32>
    %424 = math.tanh %423 : vector<8x64xf32>
    %425 = arith.mulf %420, %424 : vector<8x64xf32>
    %426 = vector.extract_strided_slice %425 {offsets = [0, 0], sizes = [8, 32], strides = [1, 1]} : vector<8x64xf32> to vector<8x32xf32>
    %427 = arith.truncf %426 : vector<8x32xf32> to vector<8x32xbf16>
    %428 = arith.index_cast %385 : i32 to index
    %c0_108 = arith.constant 0 : index
    %429 = vector.load %arg8[%428, %c0_108] : memref<64x64xbf16, #tpu.memory_space<vmem>>, vector<8x32xbf16>
    tpu.vector_store %arg8[%428, %c0_108], %427 {strides = array<i32>} : memref<64x64xbf16, #tpu.memory_space<vmem>>, vector<8x32xbf16>,
    %430 = vector.extract_strided_slice %425 {offsets = [0, 32], sizes = [8, 32], strides = [1, 1]} : vector<8x64xf32> to vector<8x32xf32>
    %431 = arith.truncf %430 : vector<8x32xf32> to vector<8x32xbf16>
    %432 = arith.index_cast %388 : i32 to index
    %c32_109 = arith.constant 32 : index
    %433 = vector.load %arg8[%432, %c32_109] : memref<64x64xbf16, #tpu.memory_space<vmem>>, vector<8x32xbf16>
    tpu.vector_store %arg8[%432, %c32_109], %431 {strides = array<i32>} : memref<64x64xbf16, #tpu.memory_space<vmem>>, vector<8x32xbf16>,
    %434 = arith.truncf %425 : vector<8x64xf32> to vector<8x64xbf16>
    %c8_i32_110 = arith.constant 8 : i32
    %c0_111 = arith.constant 0 : index
    %c0_112 = arith.constant 0 : index
    %435 = vector.load %arg8[%c0_111, %c0_112] : memref<64x64xbf16, #tpu.memory_space<vmem>>, vector<64x64xbf16>
    %c0_113 = arith.constant 0 : index
    %c0_114 = arith.constant 0 : index
    %c0_115 = arith.constant 0 : index
    %436 = vector.load %arg2[%c0_113, %c0_114, %c0_115] : memref<1x64x256xbf16, #tpu.memory_space<vmem>>, vector<1x64x256xbf16>
    %437 = vector.shape_cast %436 : vector<1x64x256xbf16> to vector<64x256xbf16>
    %c1 = arith.constant 1 : index
    %c0_116 = arith.constant 0 : index
    %c0_117 = arith.constant 0 : index
    %438 = vector.load %arg3[%c1, %c0_116, %c0_117] : memref<2x64x256xbf16, #tpu.memory_space<vmem>>, vector<1x64x256xbf16>
    %439 = vector.shape_cast %438 : vector<1x64x256xbf16> to vector<64x256xbf16>
    %c1_118 = arith.constant 1 : index
    %c0_119 = arith.constant 0 : index
    %c0_120 = arith.constant 0 : index
    %440 = vector.load %arg4[%c1_118, %c0_119, %c0_120] : memref<2x1x256xf32, #tpu.memory_space<vmem>>, vector<1x1x256xf32>
    %441 = vector.shape_cast %440 : vector<1x1x256xf32> to vector<1x256xf32>
    %c1_121 = arith.constant 1 : index
    %c0_122 = arith.constant 0 : index
    %c0_123 = arith.constant 0 : index
    %442 = vector.load %arg5[%c1_121, %c0_122, %c0_123] : memref<2x8x64xf32, #tpu.memory_space<vmem>>, vector<1x8x64xf32>
    %443 = vector.shape_cast %442 : vector<1x8x64xf32> to vector<8x64xf32>
    %c1_124 = arith.constant 1 : index
    %c0_125 = arith.constant 0 : index
    %c0_126 = arith.constant 0 : index
    %444 = vector.load %arg6[%c1_124, %c0_125, %c0_126] : memref<2x8x64xf32, #tpu.memory_space<vmem>>, vector<1x8x64xf32>
    %445 = vector.shape_cast %444 : vector<1x8x64xf32> to vector<8x64xf32>
    %cst_127 = arith.constant dense<0.000000e+00> : vector<64x256xf32>
    %446 = tpu.matmul %435, %437, %cst_127 {dimension_numbers = #tpu.dot_dimension_numbers<[1], [0], [0], [1], [0, 0, 1, 1], [], []>} : vector<64x64xbf16>, vector<64x256xbf16>, vector<64x256xf32> -> vector<64x256xf32>
    %447 = vector.broadcast %441 : vector<1x256xf32> to vector<64x256xf32>
    %448 = arith.addf %446, %447 : vector<64x256xf32>
    %c0_128 = arith.constant 0 : index
    %c0_129 = arith.constant 0 : index
    %449 = vector.load %arg10[%c0_128, %c0_129] : memref<64x256xf32, #tpu.memory_space<vmem>>, vector<64x256xf32>
    tpu.vector_store %arg10[%c0_128, %c0_129], %448 {strides = array<i32>} : memref<64x256xf32, #tpu.memory_space<vmem>>, vector<64x256xf32>,
    %450 = arith.truncf %443 : vector<8x64xf32> to vector<8x64xbf16>
    %c0_i32_130 = arith.constant 0 : i32
    %c8_i32_131 = arith.constant 8 : i32
    %451 = arith.muli %c0_i32_130, %c8_i32_131 : i32
    %452 = tpu.assume_multiple %451, 8 : i32
    %c7_i32_132 = arith.constant 7 : i32
    %453 = arith.subi %c7_i32_132, %c0_i32_130 : i32
    %c8_i32_133 = arith.constant 8 : i32
    %454 = arith.muli %453, %c8_i32_133 : i32
    %455 = tpu.assume_multiple %454, 8 : i32
    %456 = arith.index_cast %452 : i32 to index
    %c0_134 = arith.constant 0 : index
    %457 = vector.load %arg10[%456, %c0_134] : memref<64x256xf32, #tpu.memory_space<vmem>>, vector<8x128xf32>
    %458 = arith.index_cast %455 : i32 to index
    %c128_135 = arith.constant 128 : index
    %459 = vector.load %arg10[%458, %c128_135] : memref<64x256xf32, #tpu.memory_space<vmem>>, vector<8x128xf32>
    %460 = tpu.concatenate %457, %459 in 1 : vector<8x128xf32>, vector<8x128xf32> -> vector<8x256xf32>
    %cst_136 = arith.constant dense<0.000000e+00> : vector<8x256xf32>
    %461 = tpu.matmul %450, %439, %cst_136 {dimension_numbers = #tpu.dot_dimension_numbers<[1], [0], [0], [1], [0, 0, 1, 1], [], []>} : vector<8x64xbf16>, vector<64x256xbf16>, vector<8x256xf32> -> vector<8x256xf32>
    %462 = arith.addf %460, %461 : vector<8x256xf32>
    %cst_137 = arith.constant 2.000000e+00 : f32
    %463 = vector.broadcast %cst_137 : f32 to vector<8x256xf32>
    %464 = arith.mulf %463, %462 : vector<8x256xf32>
    %465 = arith.select %11, %464, %462 : vector<8x256xi1>, vector<8x256xf32>
    %466 = arith.negf %465 : vector<8x256xf32>
    %467 = math.exp %466 : vector<8x256xf32>
    %cst_138 = arith.constant 1.000000e+00 : f32
    %468 = vector.broadcast %cst_138 : f32 to vector<8x256xf32>
    %469 = arith.addf %468, %467 : vector<8x256xf32>
    %470 = arith.divf %468, %469 : vector<8x256xf32>
    %cst_139 = arith.constant 2.000000e+00 : f32
    %471 = vector.broadcast %cst_139 : f32 to vector<8x256xf32>
    %472 = arith.mulf %471, %470 : vector<8x256xf32>
    %cst_140 = arith.constant 1.000000e+00 : f32
    %473 = vector.broadcast %cst_140 : f32 to vector<8x256xf32>
    %474 = arith.subf %472, %473 : vector<8x256xf32>
    %475 = arith.select %11, %474, %470 : vector<8x256xi1>, vector<8x256xf32>
    %476 = vector.extract_strided_slice %475 {offsets = [0, 0], sizes = [8, 32], strides = [1, 1]} : vector<8x256xf32> to vector<8x32xf32>
    %477 = vector.extract_strided_slice %475 {offsets = [0, 128], sizes = [8, 32], strides = [1, 1]} : vector<8x256xf32> to vector<8x32xf32>
    %478 = tpu.concatenate %476, %477 in 1 : vector<8x32xf32>, vector<8x32xf32> -> vector<8x64xf32>
    %479 = vector.extract_strided_slice %475 {offsets = [0, 32], sizes = [8, 32], strides = [1, 1]} : vector<8x256xf32> to vector<8x32xf32>
    %480 = vector.extract_strided_slice %475 {offsets = [0, 160], sizes = [8, 32], strides = [1, 1]} : vector<8x256xf32> to vector<8x32xf32>
    %481 = tpu.concatenate %479, %480 in 1 : vector<8x32xf32>, vector<8x32xf32> -> vector<8x64xf32>
    %482 = vector.extract_strided_slice %475 {offsets = [0, 64], sizes = [8, 32], strides = [1, 1]} : vector<8x256xf32> to vector<8x32xf32>
    %483 = vector.extract_strided_slice %475 {offsets = [0, 192], sizes = [8, 32], strides = [1, 1]} : vector<8x256xf32> to vector<8x32xf32>
    %484 = tpu.concatenate %482, %483 in 1 : vector<8x32xf32>, vector<8x32xf32> -> vector<8x64xf32>
    %485 = vector.extract_strided_slice %475 {offsets = [0, 96], sizes = [8, 32], strides = [1, 1]} : vector<8x256xf32> to vector<8x32xf32>
    %486 = vector.extract_strided_slice %475 {offsets = [0, 224], sizes = [8, 32], strides = [1, 1]} : vector<8x256xf32> to vector<8x32xf32>
    %487 = tpu.concatenate %485, %486 in 1 : vector<8x32xf32>, vector<8x32xf32> -> vector<8x64xf32>
    %488 = arith.mulf %481, %445 : vector<8x64xf32>
    %489 = arith.mulf %478, %484 : vector<8x64xf32>
    %490 = arith.addf %488, %489 : vector<8x64xf32>
    %491 = math.tanh %490 : vector<8x64xf32>
    %492 = arith.mulf %487, %491 : vector<8x64xf32>
    %493 = vector.extract_strided_slice %492 {offsets = [0, 0], sizes = [8, 32], strides = [1, 1]} : vector<8x64xf32> to vector<8x32xf32>
    %494 = arith.index_cast %452 : i32 to index
    %c0_141 = arith.constant 0 : index
    %495 = vector.load %arg7[%494, %c0_141] : memref<64x64xf32, #tpu.memory_space<vmem>>, vector<8x32xf32>
    tpu.vector_store %arg7[%494, %c0_141], %493 {strides = array<i32>} : memref<64x64xf32, #tpu.memory_space<vmem>>, vector<8x32xf32>,
    %496 = vector.extract_strided_slice %492 {offsets = [0, 32], sizes = [8, 32], strides = [1, 1]} : vector<8x64xf32> to vector<8x32xf32>
    %497 = arith.index_cast %455 : i32 to index
    %c32_142 = arith.constant 32 : index
    %498 = vector.load %arg7[%497, %c32_142] : memref<64x64xf32, #tpu.memory_space<vmem>>, vector<8x32xf32>
    tpu.vector_store %arg7[%497, %c32_142], %496 {strides = array<i32>} : memref<64x64xf32, #tpu.memory_space<vmem>>, vector<8x32xf32>,
    %499 = arith.truncf %492 : vector<8x64xf32> to vector<8x64xbf16>
    %c1_i32_143 = arith.constant 1 : i32
    %c8_i32_144 = arith.constant 8 : i32
    %500 = arith.muli %c1_i32_143, %c8_i32_144 : i32
    %501 = tpu.assume_multiple %500, 8 : i32
    %c7_i32_145 = arith.constant 7 : i32
    %502 = arith.subi %c7_i32_145, %c1_i32_143 : i32
    %c8_i32_146 = arith.constant 8 : i32
    %503 = arith.muli %502, %c8_i32_146 : i32
    %504 = tpu.assume_multiple %503, 8 : i32
    %505 = arith.index_cast %501 : i32 to index
    %c0_147 = arith.constant 0 : index
    %506 = vector.load %arg10[%505, %c0_147] : memref<64x256xf32, #tpu.memory_space<vmem>>, vector<8x128xf32>
    %507 = arith.index_cast %504 : i32 to index
    %c128_148 = arith.constant 128 : index
    %508 = vector.load %arg10[%507, %c128_148] : memref<64x256xf32, #tpu.memory_space<vmem>>, vector<8x128xf32>
    %509 = tpu.concatenate %506, %508 in 1 : vector<8x128xf32>, vector<8x128xf32> -> vector<8x256xf32>
    %cst_149 = arith.constant dense<0.000000e+00> : vector<8x256xf32>
    %510 = tpu.matmul %499, %439, %cst_149 {dimension_numbers = #tpu.dot_dimension_numbers<[1], [0], [0], [1], [0, 0, 1, 1], [], []>} : vector<8x64xbf16>, vector<64x256xbf16>, vector<8x256xf32> -> vector<8x256xf32>
    %511 = arith.addf %509, %510 : vector<8x256xf32>
    %cst_150 = arith.constant 2.000000e+00 : f32
    %512 = vector.broadcast %cst_150 : f32 to vector<8x256xf32>
    %513 = arith.mulf %512, %511 : vector<8x256xf32>
    %514 = arith.select %11, %513, %511 : vector<8x256xi1>, vector<8x256xf32>
    %515 = arith.negf %514 : vector<8x256xf32>
    %516 = math.exp %515 : vector<8x256xf32>
    %cst_151 = arith.constant 1.000000e+00 : f32
    %517 = vector.broadcast %cst_151 : f32 to vector<8x256xf32>
    %518 = arith.addf %517, %516 : vector<8x256xf32>
    %519 = arith.divf %517, %518 : vector<8x256xf32>
    %cst_152 = arith.constant 2.000000e+00 : f32
    %520 = vector.broadcast %cst_152 : f32 to vector<8x256xf32>
    %521 = arith.mulf %520, %519 : vector<8x256xf32>
    %cst_153 = arith.constant 1.000000e+00 : f32
    %522 = vector.broadcast %cst_153 : f32 to vector<8x256xf32>
    %523 = arith.subf %521, %522 : vector<8x256xf32>
    %524 = arith.select %11, %523, %519 : vector<8x256xi1>, vector<8x256xf32>
    %525 = vector.extract_strided_slice %524 {offsets = [0, 0], sizes = [8, 32], strides = [1, 1]} : vector<8x256xf32> to vector<8x32xf32>
    %526 = vector.extract_strided_slice %524 {offsets = [0, 128], sizes = [8, 32], strides = [1, 1]} : vector<8x256xf32> to vector<8x32xf32>
    %527 = tpu.concatenate %525, %526 in 1 : vector<8x32xf32>, vector<8x32xf32> -> vector<8x64xf32>
    %528 = vector.extract_strided_slice %524 {offsets = [0, 32], sizes = [8, 32], strides = [1, 1]} : vector<8x256xf32> to vector<8x32xf32>
    %529 = vector.extract_strided_slice %524 {offsets = [0, 160], sizes = [8, 32], strides = [1, 1]} : vector<8x256xf32> to vector<8x32xf32>
    %530 = tpu.concatenate %528, %529 in 1 : vector<8x32xf32>, vector<8x32xf32> -> vector<8x64xf32>
    %531 = vector.extract_strided_slice %524 {offsets = [0, 64], sizes = [8, 32], strides = [1, 1]} : vector<8x256xf32> to vector<8x32xf32>
    %532 = vector.extract_strided_slice %524 {offsets = [0, 192], sizes = [8, 32], strides = [1, 1]} : vector<8x256xf32> to vector<8x32xf32>
    %533 = tpu.concatenate %531, %532 in 1 : vector<8x32xf32>, vector<8x32xf32> -> vector<8x64xf32>
    %534 = vector.extract_strided_slice %524 {offsets = [0, 96], sizes = [8, 32], strides = [1, 1]} : vector<8x256xf32> to vector<8x32xf32>
    %535 = vector.extract_strided_slice %524 {offsets = [0, 224], sizes = [8, 32], strides = [1, 1]} : vector<8x256xf32> to vector<8x32xf32>
    %536 = tpu.concatenate %534, %535 in 1 : vector<8x32xf32>, vector<8x32xf32> -> vector<8x64xf32>
    %537 = arith.mulf %530, %490 : vector<8x64xf32>
    %538 = arith.mulf %527, %533 : vector<8x64xf32>
    %539 = arith.addf %537, %538 : vector<8x64xf32>
    %540 = math.tanh %539 : vector<8x64xf32>
    %541 = arith.mulf %536, %540 : vector<8x64xf32>
    %542 = vector.extract_strided_slice %541 {offsets = [0, 0], sizes = [8, 32], strides = [1, 1]} : vector<8x64xf32> to vector<8x32xf32>
    %543 = arith.index_cast %501 : i32 to index
    %c0_154 = arith.constant 0 : index
    %544 = vector.load %arg7[%543, %c0_154] : memref<64x64xf32, #tpu.memory_space<vmem>>, vector<8x32xf32>
    tpu.vector_store %arg7[%543, %c0_154], %542 {strides = array<i32>} : memref<64x64xf32, #tpu.memory_space<vmem>>, vector<8x32xf32>,
    %545 = vector.extract_strided_slice %541 {offsets = [0, 32], sizes = [8, 32], strides = [1, 1]} : vector<8x64xf32> to vector<8x32xf32>
    %546 = arith.index_cast %504 : i32 to index
    %c32_155 = arith.constant 32 : index
    %547 = vector.load %arg7[%546, %c32_155] : memref<64x64xf32, #tpu.memory_space<vmem>>, vector<8x32xf32>
    tpu.vector_store %arg7[%546, %c32_155], %545 {strides = array<i32>} : memref<64x64xf32, #tpu.memory_space<vmem>>, vector<8x32xf32>,
    %548 = arith.truncf %541 : vector<8x64xf32> to vector<8x64xbf16>
    %c2_i32_156 = arith.constant 2 : i32
    %c8_i32_157 = arith.constant 8 : i32
    %549 = arith.muli %c2_i32_156, %c8_i32_157 : i32
    %550 = tpu.assume_multiple %549, 8 : i32
    %c7_i32_158 = arith.constant 7 : i32
    %551 = arith.subi %c7_i32_158, %c2_i32_156 : i32
    %c8_i32_159 = arith.constant 8 : i32
    %552 = arith.muli %551, %c8_i32_159 : i32
    %553 = tpu.assume_multiple %552, 8 : i32
    %554 = arith.index_cast %550 : i32 to index
    %c0_160 = arith.constant 0 : index
    %555 = vector.load %arg10[%554, %c0_160] : memref<64x256xf32, #tpu.memory_space<vmem>>, vector<8x128xf32>
    %556 = arith.index_cast %553 : i32 to index
    %c128_161 = arith.constant 128 : index
    %557 = vector.load %arg10[%556, %c128_161] : memref<64x256xf32, #tpu.memory_space<vmem>>, vector<8x128xf32>
    %558 = tpu.concatenate %555, %557 in 1 : vector<8x128xf32>, vector<8x128xf32> -> vector<8x256xf32>
    %cst_162 = arith.constant dense<0.000000e+00> : vector<8x256xf32>
    %559 = tpu.matmul %548, %439, %cst_162 {dimension_numbers = #tpu.dot_dimension_numbers<[1], [0], [0], [1], [0, 0, 1, 1], [], []>} : vector<8x64xbf16>, vector<64x256xbf16>, vector<8x256xf32> -> vector<8x256xf32>
    %560 = arith.addf %558, %559 : vector<8x256xf32>
    %cst_163 = arith.constant 2.000000e+00 : f32
    %561 = vector.broadcast %cst_163 : f32 to vector<8x256xf32>
    %562 = arith.mulf %561, %560 : vector<8x256xf32>
    %563 = arith.select %11, %562, %560 : vector<8x256xi1>, vector<8x256xf32>
    %564 = arith.negf %563 : vector<8x256xf32>
    %565 = math.exp %564 : vector<8x256xf32>
    %cst_164 = arith.constant 1.000000e+00 : f32
    %566 = vector.broadcast %cst_164 : f32 to vector<8x256xf32>
    %567 = arith.addf %566, %565 : vector<8x256xf32>
    %568 = arith.divf %566, %567 : vector<8x256xf32>
    %cst_165 = arith.constant 2.000000e+00 : f32
    %569 = vector.broadcast %cst_165 : f32 to vector<8x256xf32>
    %570 = arith.mulf %569, %568 : vector<8x256xf32>
    %cst_166 = arith.constant 1.000000e+00 : f32
    %571 = vector.broadcast %cst_166 : f32 to vector<8x256xf32>
    %572 = arith.subf %570, %571 : vector<8x256xf32>
    %573 = arith.select %11, %572, %568 : vector<8x256xi1>, vector<8x256xf32>
    %574 = vector.extract_strided_slice %573 {offsets = [0, 0], sizes = [8, 32], strides = [1, 1]} : vector<8x256xf32> to vector<8x32xf32>
    %575 = vector.extract_strided_slice %573 {offsets = [0, 128], sizes = [8, 32], strides = [1, 1]} : vector<8x256xf32> to vector<8x32xf32>
    %576 = tpu.concatenate %574, %575 in 1 : vector<8x32xf32>, vector<8x32xf32> -> vector<8x64xf32>
    %577 = vector.extract_strided_slice %573 {offsets = [0, 32], sizes = [8, 32], strides = [1, 1]} : vector<8x256xf32> to vector<8x32xf32>
    %578 = vector.extract_strided_slice %573 {offsets = [0, 160], sizes = [8, 32], strides = [1, 1]} : vector<8x256xf32> to vector<8x32xf32>
    %579 = tpu.concatenate %577, %578 in 1 : vector<8x32xf32>, vector<8x32xf32> -> vector<8x64xf32>
    %580 = vector.extract_strided_slice %573 {offsets = [0, 64], sizes = [8, 32], strides = [1, 1]} : vector<8x256xf32> to vector<8x32xf32>
    %581 = vector.extract_strided_slice %573 {offsets = [0, 192], sizes = [8, 32], strides = [1, 1]} : vector<8x256xf32> to vector<8x32xf32>
    %582 = tpu.concatenate %580, %581 in 1 : vector<8x32xf32>, vector<8x32xf32> -> vector<8x64xf32>
    %583 = vector.extract_strided_slice %573 {offsets = [0, 96], sizes = [8, 32], strides = [1, 1]} : vector<8x256xf32> to vector<8x32xf32>
    %584 = vector.extract_strided_slice %573 {offsets = [0, 224], sizes = [8, 32], strides = [1, 1]} : vector<8x256xf32> to vector<8x32xf32>
    %585 = tpu.concatenate %583, %584 in 1 : vector<8x32xf32>, vector<8x32xf32> -> vector<8x64xf32>
    %586 = arith.mulf %579, %539 : vector<8x64xf32>
    %587 = arith.mulf %576, %582 : vector<8x64xf32>
    %588 = arith.addf %586, %587 : vector<8x64xf32>
    %589 = math.tanh %588 : vector<8x64xf32>
    %590 = arith.mulf %585, %589 : vector<8x64xf32>
    %591 = vector.extract_strided_slice %590 {offsets = [0, 0], sizes = [8, 32], strides = [1, 1]} : vector<8x64xf32> to vector<8x32xf32>
    %592 = arith.index_cast %550 : i32 to index
    %c0_167 = arith.constant 0 : index
    %593 = vector.load %arg7[%592, %c0_167] : memref<64x64xf32, #tpu.memory_space<vmem>>, vector<8x32xf32>
    tpu.vector_store %arg7[%592, %c0_167], %591 {strides = array<i32>} : memref<64x64xf32, #tpu.memory_space<vmem>>, vector<8x32xf32>,
    %594 = vector.extract_strided_slice %590 {offsets = [0, 32], sizes = [8, 32], strides = [1, 1]} : vector<8x64xf32> to vector<8x32xf32>
    %595 = arith.index_cast %553 : i32 to index
    %c32_168 = arith.constant 32 : index
    %596 = vector.load %arg7[%595, %c32_168] : memref<64x64xf32, #tpu.memory_space<vmem>>, vector<8x32xf32>
    tpu.vector_store %arg7[%595, %c32_168], %594 {strides = array<i32>} : memref<64x64xf32, #tpu.memory_space<vmem>>, vector<8x32xf32>,
    %597 = arith.truncf %590 : vector<8x64xf32> to vector<8x64xbf16>
    %c3_i32_169 = arith.constant 3 : i32
    %c8_i32_170 = arith.constant 8 : i32
    %598 = arith.muli %c3_i32_169, %c8_i32_170 : i32
    %599 = tpu.assume_multiple %598, 8 : i32
    %c7_i32_171 = arith.constant 7 : i32
    %600 = arith.subi %c7_i32_171, %c3_i32_169 : i32
    %c8_i32_172 = arith.constant 8 : i32
    %601 = arith.muli %600, %c8_i32_172 : i32
    %602 = tpu.assume_multiple %601, 8 : i32
    %603 = arith.index_cast %599 : i32 to index
    %c0_173 = arith.constant 0 : index
    %604 = vector.load %arg10[%603, %c0_173] : memref<64x256xf32, #tpu.memory_space<vmem>>, vector<8x128xf32>
    %605 = arith.index_cast %602 : i32 to index
    %c128_174 = arith.constant 128 : index
    %606 = vector.load %arg10[%605, %c128_174] : memref<64x256xf32, #tpu.memory_space<vmem>>, vector<8x128xf32>
    %607 = tpu.concatenate %604, %606 in 1 : vector<8x128xf32>, vector<8x128xf32> -> vector<8x256xf32>
    %cst_175 = arith.constant dense<0.000000e+00> : vector<8x256xf32>
    %608 = tpu.matmul %597, %439, %cst_175 {dimension_numbers = #tpu.dot_dimension_numbers<[1], [0], [0], [1], [0, 0, 1, 1], [], []>} : vector<8x64xbf16>, vector<64x256xbf16>, vector<8x256xf32> -> vector<8x256xf32>
    %609 = arith.addf %607, %608 : vector<8x256xf32>
    %cst_176 = arith.constant 2.000000e+00 : f32
    %610 = vector.broadcast %cst_176 : f32 to vector<8x256xf32>
    %611 = arith.mulf %610, %609 : vector<8x256xf32>
    %612 = arith.select %11, %611, %609 : vector<8x256xi1>, vector<8x256xf32>
    %613 = arith.negf %612 : vector<8x256xf32>
    %614 = math.exp %613 : vector<8x256xf32>
    %cst_177 = arith.constant 1.000000e+00 : f32
    %615 = vector.broadcast %cst_177 : f32 to vector<8x256xf32>
    %616 = arith.addf %615, %614 : vector<8x256xf32>
    %617 = arith.divf %615, %616 : vector<8x256xf32>
    %cst_178 = arith.constant 2.000000e+00 : f32
    %618 = vector.broadcast %cst_178 : f32 to vector<8x256xf32>
    %619 = arith.mulf %618, %617 : vector<8x256xf32>
    %cst_179 = arith.constant 1.000000e+00 : f32
    %620 = vector.broadcast %cst_179 : f32 to vector<8x256xf32>
    %621 = arith.subf %619, %620 : vector<8x256xf32>
    %622 = arith.select %11, %621, %617 : vector<8x256xi1>, vector<8x256xf32>
    %623 = vector.extract_strided_slice %622 {offsets = [0, 0], sizes = [8, 32], strides = [1, 1]} : vector<8x256xf32> to vector<8x32xf32>
    %624 = vector.extract_strided_slice %622 {offsets = [0, 128], sizes = [8, 32], strides = [1, 1]} : vector<8x256xf32> to vector<8x32xf32>
    %625 = tpu.concatenate %623, %624 in 1 : vector<8x32xf32>, vector<8x32xf32> -> vector<8x64xf32>
    %626 = vector.extract_strided_slice %622 {offsets = [0, 32], sizes = [8, 32], strides = [1, 1]} : vector<8x256xf32> to vector<8x32xf32>
    %627 = vector.extract_strided_slice %622 {offsets = [0, 160], sizes = [8, 32], strides = [1, 1]} : vector<8x256xf32> to vector<8x32xf32>
    %628 = tpu.concatenate %626, %627 in 1 : vector<8x32xf32>, vector<8x32xf32> -> vector<8x64xf32>
    %629 = vector.extract_strided_slice %622 {offsets = [0, 64], sizes = [8, 32], strides = [1, 1]} : vector<8x256xf32> to vector<8x32xf32>
    %630 = vector.extract_strided_slice %622 {offsets = [0, 192], sizes = [8, 32], strides = [1, 1]} : vector<8x256xf32> to vector<8x32xf32>
    %631 = tpu.concatenate %629, %630 in 1 : vector<8x32xf32>, vector<8x32xf32> -> vector<8x64xf32>
    %632 = vector.extract_strided_slice %622 {offsets = [0, 96], sizes = [8, 32], strides = [1, 1]} : vector<8x256xf32> to vector<8x32xf32>
    %633 = vector.extract_strided_slice %622 {offsets = [0, 224], sizes = [8, 32], strides = [1, 1]} : vector<8x256xf32> to vector<8x32xf32>
    %634 = tpu.concatenate %632, %633 in 1 : vector<8x32xf32>, vector<8x32xf32> -> vector<8x64xf32>
    %635 = arith.mulf %628, %588 : vector<8x64xf32>
    %636 = arith.mulf %625, %631 : vector<8x64xf32>
    %637 = arith.addf %635, %636 : vector<8x64xf32>
    %638 = math.tanh %637 : vector<8x64xf32>
    %639 = arith.mulf %634, %638 : vector<8x64xf32>
    %640 = vector.extract_strided_slice %639 {offsets = [0, 0], sizes = [8, 32], strides = [1, 1]} : vector<8x64xf32> to vector<8x32xf32>
    %641 = arith.index_cast %599 : i32 to index
    %c0_180 = arith.constant 0 : index
    %642 = vector.load %arg7[%641, %c0_180] : memref<64x64xf32, #tpu.memory_space<vmem>>, vector<8x32xf32>
    tpu.vector_store %arg7[%641, %c0_180], %640 {strides = array<i32>} : memref<64x64xf32, #tpu.memory_space<vmem>>, vector<8x32xf32>,
    %643 = vector.extract_strided_slice %639 {offsets = [0, 32], sizes = [8, 32], strides = [1, 1]} : vector<8x64xf32> to vector<8x32xf32>
    %644 = arith.index_cast %602 : i32 to index
    %c32_181 = arith.constant 32 : index
    %645 = vector.load %arg7[%644, %c32_181] : memref<64x64xf32, #tpu.memory_space<vmem>>, vector<8x32xf32>
    tpu.vector_store %arg7[%644, %c32_181], %643 {strides = array<i32>} : memref<64x64xf32, #tpu.memory_space<vmem>>, vector<8x32xf32>,
    %646 = arith.truncf %639 : vector<8x64xf32> to vector<8x64xbf16>
    %c4_i32_182 = arith.constant 4 : i32
    %c8_i32_183 = arith.constant 8 : i32
    %647 = arith.muli %c4_i32_182, %c8_i32_183 : i32
    %648 = tpu.assume_multiple %647, 8 : i32
    %c7_i32_184 = arith.constant 7 : i32
    %649 = arith.subi %c7_i32_184, %c4_i32_182 : i32
    %c8_i32_185 = arith.constant 8 : i32
    %650 = arith.muli %649, %c8_i32_185 : i32
    %651 = tpu.assume_multiple %650, 8 : i32
    %652 = arith.index_cast %648 : i32 to index
    %c0_186 = arith.constant 0 : index
    %653 = vector.load %arg10[%652, %c0_186] : memref<64x256xf32, #tpu.memory_space<vmem>>, vector<8x128xf32>
    %654 = arith.index_cast %651 : i32 to index
    %c128_187 = arith.constant 128 : index
    %655 = vector.load %arg10[%654, %c128_187] : memref<64x256xf32, #tpu.memory_space<vmem>>, vector<8x128xf32>
    %656 = tpu.concatenate %653, %655 in 1 : vector<8x128xf32>, vector<8x128xf32> -> vector<8x256xf32>
    %cst_188 = arith.constant dense<0.000000e+00> : vector<8x256xf32>
    %657 = tpu.matmul %646, %439, %cst_188 {dimension_numbers = #tpu.dot_dimension_numbers<[1], [0], [0], [1], [0, 0, 1, 1], [], []>} : vector<8x64xbf16>, vector<64x256xbf16>, vector<8x256xf32> -> vector<8x256xf32>
    %658 = arith.addf %656, %657 : vector<8x256xf32>
    %cst_189 = arith.constant 2.000000e+00 : f32
    %659 = vector.broadcast %cst_189 : f32 to vector<8x256xf32>
    %660 = arith.mulf %659, %658 : vector<8x256xf32>
    %661 = arith.select %11, %660, %658 : vector<8x256xi1>, vector<8x256xf32>
    %662 = arith.negf %661 : vector<8x256xf32>
    %663 = math.exp %662 : vector<8x256xf32>
    %cst_190 = arith.constant 1.000000e+00 : f32
    %664 = vector.broadcast %cst_190 : f32 to vector<8x256xf32>
    %665 = arith.addf %664, %663 : vector<8x256xf32>
    %666 = arith.divf %664, %665 : vector<8x256xf32>
    %cst_191 = arith.constant 2.000000e+00 : f32
    %667 = vector.broadcast %cst_191 : f32 to vector<8x256xf32>
    %668 = arith.mulf %667, %666 : vector<8x256xf32>
    %cst_192 = arith.constant 1.000000e+00 : f32
    %669 = vector.broadcast %cst_192 : f32 to vector<8x256xf32>
    %670 = arith.subf %668, %669 : vector<8x256xf32>
    %671 = arith.select %11, %670, %666 : vector<8x256xi1>, vector<8x256xf32>
    %672 = vector.extract_strided_slice %671 {offsets = [0, 0], sizes = [8, 32], strides = [1, 1]} : vector<8x256xf32> to vector<8x32xf32>
    %673 = vector.extract_strided_slice %671 {offsets = [0, 128], sizes = [8, 32], strides = [1, 1]} : vector<8x256xf32> to vector<8x32xf32>
    %674 = tpu.concatenate %672, %673 in 1 : vector<8x32xf32>, vector<8x32xf32> -> vector<8x64xf32>
    %675 = vector.extract_strided_slice %671 {offsets = [0, 32], sizes = [8, 32], strides = [1, 1]} : vector<8x256xf32> to vector<8x32xf32>
    %676 = vector.extract_strided_slice %671 {offsets = [0, 160], sizes = [8, 32], strides = [1, 1]} : vector<8x256xf32> to vector<8x32xf32>
    %677 = tpu.concatenate %675, %676 in 1 : vector<8x32xf32>, vector<8x32xf32> -> vector<8x64xf32>
    %678 = vector.extract_strided_slice %671 {offsets = [0, 64], sizes = [8, 32], strides = [1, 1]} : vector<8x256xf32> to vector<8x32xf32>
    %679 = vector.extract_strided_slice %671 {offsets = [0, 192], sizes = [8, 32], strides = [1, 1]} : vector<8x256xf32> to vector<8x32xf32>
    %680 = tpu.concatenate %678, %679 in 1 : vector<8x32xf32>, vector<8x32xf32> -> vector<8x64xf32>
    %681 = vector.extract_strided_slice %671 {offsets = [0, 96], sizes = [8, 32], strides = [1, 1]} : vector<8x256xf32> to vector<8x32xf32>
    %682 = vector.extract_strided_slice %671 {offsets = [0, 224], sizes = [8, 32], strides = [1, 1]} : vector<8x256xf32> to vector<8x32xf32>
    %683 = tpu.concatenate %681, %682 in 1 : vector<8x32xf32>, vector<8x32xf32> -> vector<8x64xf32>
    %684 = arith.mulf %677, %637 : vector<8x64xf32>
    %685 = arith.mulf %674, %680 : vector<8x64xf32>
    %686 = arith.addf %684, %685 : vector<8x64xf32>
    %687 = math.tanh %686 : vector<8x64xf32>
    %688 = arith.mulf %683, %687 : vector<8x64xf32>
    %689 = vector.extract_strided_slice %688 {offsets = [0, 0], sizes = [8, 32], strides = [1, 1]} : vector<8x64xf32> to vector<8x32xf32>
    %690 = arith.index_cast %648 : i32 to index
    %c0_193 = arith.constant 0 : index
    %691 = vector.load %arg7[%690, %c0_193] : memref<64x64xf32, #tpu.memory_space<vmem>>, vector<8x32xf32>
    tpu.vector_store %arg7[%690, %c0_193], %689 {strides = array<i32>} : memref<64x64xf32, #tpu.memory_space<vmem>>, vector<8x32xf32>,
    %692 = vector.extract_strided_slice %688 {offsets = [0, 32], sizes = [8, 32], strides = [1, 1]} : vector<8x64xf32> to vector<8x32xf32>
    %693 = arith.index_cast %651 : i32 to index
    %c32_194 = arith.constant 32 : index
    %694 = vector.load %arg7[%693, %c32_194] : memref<64x64xf32, #tpu.memory_space<vmem>>, vector<8x32xf32>
    tpu.vector_store %arg7[%693, %c32_194], %692 {strides = array<i32>} : memref<64x64xf32, #tpu.memory_space<vmem>>, vector<8x32xf32>,
    %695 = arith.truncf %688 : vector<8x64xf32> to vector<8x64xbf16>
    %c5_i32_195 = arith.constant 5 : i32
    %c8_i32_196 = arith.constant 8 : i32
    %696 = arith.muli %c5_i32_195, %c8_i32_196 : i32
    %697 = tpu.assume_multiple %696, 8 : i32
    %c7_i32_197 = arith.constant 7 : i32
    %698 = arith.subi %c7_i32_197, %c5_i32_195 : i32
    %c8_i32_198 = arith.constant 8 : i32
    %699 = arith.muli %698, %c8_i32_198 : i32
    %700 = tpu.assume_multiple %699, 8 : i32
    %701 = arith.index_cast %697 : i32 to index
    %c0_199 = arith.constant 0 : index
    %702 = vector.load %arg10[%701, %c0_199] : memref<64x256xf32, #tpu.memory_space<vmem>>, vector<8x128xf32>
    %703 = arith.index_cast %700 : i32 to index
    %c128_200 = arith.constant 128 : index
    %704 = vector.load %arg10[%703, %c128_200] : memref<64x256xf32, #tpu.memory_space<vmem>>, vector<8x128xf32>
    %705 = tpu.concatenate %702, %704 in 1 : vector<8x128xf32>, vector<8x128xf32> -> vector<8x256xf32>
    %cst_201 = arith.constant dense<0.000000e+00> : vector<8x256xf32>
    %706 = tpu.matmul %695, %439, %cst_201 {dimension_numbers = #tpu.dot_dimension_numbers<[1], [0], [0], [1], [0, 0, 1, 1], [], []>} : vector<8x64xbf16>, vector<64x256xbf16>, vector<8x256xf32> -> vector<8x256xf32>
    %707 = arith.addf %705, %706 : vector<8x256xf32>
    %cst_202 = arith.constant 2.000000e+00 : f32
    %708 = vector.broadcast %cst_202 : f32 to vector<8x256xf32>
    %709 = arith.mulf %708, %707 : vector<8x256xf32>
    %710 = arith.select %11, %709, %707 : vector<8x256xi1>, vector<8x256xf32>
    %711 = arith.negf %710 : vector<8x256xf32>
    %712 = math.exp %711 : vector<8x256xf32>
    %cst_203 = arith.constant 1.000000e+00 : f32
    %713 = vector.broadcast %cst_203 : f32 to vector<8x256xf32>
    %714 = arith.addf %713, %712 : vector<8x256xf32>
    %715 = arith.divf %713, %714 : vector<8x256xf32>
    %cst_204 = arith.constant 2.000000e+00 : f32
    %716 = vector.broadcast %cst_204 : f32 to vector<8x256xf32>
    %717 = arith.mulf %716, %715 : vector<8x256xf32>
    %cst_205 = arith.constant 1.000000e+00 : f32
    %718 = vector.broadcast %cst_205 : f32 to vector<8x256xf32>
    %719 = arith.subf %717, %718 : vector<8x256xf32>
    %720 = arith.select %11, %719, %715 : vector<8x256xi1>, vector<8x256xf32>
    %721 = vector.extract_strided_slice %720 {offsets = [0, 0], sizes = [8, 32], strides = [1, 1]} : vector<8x256xf32> to vector<8x32xf32>
    %722 = vector.extract_strided_slice %720 {offsets = [0, 128], sizes = [8, 32], strides = [1, 1]} : vector<8x256xf32> to vector<8x32xf32>
    %723 = tpu.concatenate %721, %722 in 1 : vector<8x32xf32>, vector<8x32xf32> -> vector<8x64xf32>
    %724 = vector.extract_strided_slice %720 {offsets = [0, 32], sizes = [8, 32], strides = [1, 1]} : vector<8x256xf32> to vector<8x32xf32>
    %725 = vector.extract_strided_slice %720 {offsets = [0, 160], sizes = [8, 32], strides = [1, 1]} : vector<8x256xf32> to vector<8x32xf32>
    %726 = tpu.concatenate %724, %725 in 1 : vector<8x32xf32>, vector<8x32xf32> -> vector<8x64xf32>
    %727 = vector.extract_strided_slice %720 {offsets = [0, 64], sizes = [8, 32], strides = [1, 1]} : vector<8x256xf32> to vector<8x32xf32>
    %728 = vector.extract_strided_slice %720 {offsets = [0, 192], sizes = [8, 32], strides = [1, 1]} : vector<8x256xf32> to vector<8x32xf32>
    %729 = tpu.concatenate %727, %728 in 1 : vector<8x32xf32>, vector<8x32xf32> -> vector<8x64xf32>
    %730 = vector.extract_strided_slice %720 {offsets = [0, 96], sizes = [8, 32], strides = [1, 1]} : vector<8x256xf32> to vector<8x32xf32>
    %731 = vector.extract_strided_slice %720 {offsets = [0, 224], sizes = [8, 32], strides = [1, 1]} : vector<8x256xf32> to vector<8x32xf32>
    %732 = tpu.concatenate %730, %731 in 1 : vector<8x32xf32>, vector<8x32xf32> -> vector<8x64xf32>
    %733 = arith.mulf %726, %686 : vector<8x64xf32>
    %734 = arith.mulf %723, %729 : vector<8x64xf32>
    %735 = arith.addf %733, %734 : vector<8x64xf32>
    %736 = math.tanh %735 : vector<8x64xf32>
    %737 = arith.mulf %732, %736 : vector<8x64xf32>
    %738 = vector.extract_strided_slice %737 {offsets = [0, 0], sizes = [8, 32], strides = [1, 1]} : vector<8x64xf32> to vector<8x32xf32>
    %739 = arith.index_cast %697 : i32 to index
    %c0_206 = arith.constant 0 : index
    %740 = vector.load %arg7[%739, %c0_206] : memref<64x64xf32, #tpu.memory_space<vmem>>, vector<8x32xf32>
    tpu.vector_store %arg7[%739, %c0_206], %738 {strides = array<i32>} : memref<64x64xf32, #tpu.memory_space<vmem>>, vector<8x32xf32>,
    %741 = vector.extract_strided_slice %737 {offsets = [0, 32], sizes = [8, 32], strides = [1, 1]} : vector<8x64xf32> to vector<8x32xf32>
    %742 = arith.index_cast %700 : i32 to index
    %c32_207 = arith.constant 32 : index
    %743 = vector.load %arg7[%742, %c32_207] : memref<64x64xf32, #tpu.memory_space<vmem>>, vector<8x32xf32>
    tpu.vector_store %arg7[%742, %c32_207], %741 {strides = array<i32>} : memref<64x64xf32, #tpu.memory_space<vmem>>, vector<8x32xf32>,
    %744 = arith.truncf %737 : vector<8x64xf32> to vector<8x64xbf16>
    %c6_i32_208 = arith.constant 6 : i32
    %c8_i32_209 = arith.constant 8 : i32
    %745 = arith.muli %c6_i32_208, %c8_i32_209 : i32
    %746 = tpu.assume_multiple %745, 8 : i32
    %c7_i32_210 = arith.constant 7 : i32
    %747 = arith.subi %c7_i32_210, %c6_i32_208 : i32
    %c8_i32_211 = arith.constant 8 : i32
    %748 = arith.muli %747, %c8_i32_211 : i32
    %749 = tpu.assume_multiple %748, 8 : i32
    %750 = arith.index_cast %746 : i32 to index
    %c0_212 = arith.constant 0 : index
    %751 = vector.load %arg10[%750, %c0_212] : memref<64x256xf32, #tpu.memory_space<vmem>>, vector<8x128xf32>
    %752 = arith.index_cast %749 : i32 to index
    %c128_213 = arith.constant 128 : index
    %753 = vector.load %arg10[%752, %c128_213] : memref<64x256xf32, #tpu.memory_space<vmem>>, vector<8x128xf32>
    %754 = tpu.concatenate %751, %753 in 1 : vector<8x128xf32>, vector<8x128xf32> -> vector<8x256xf32>
    %cst_214 = arith.constant dense<0.000000e+00> : vector<8x256xf32>
    %755 = tpu.matmul %744, %439, %cst_214 {dimension_numbers = #tpu.dot_dimension_numbers<[1], [0], [0], [1], [0, 0, 1, 1], [], []>} : vector<8x64xbf16>, vector<64x256xbf16>, vector<8x256xf32> -> vector<8x256xf32>
    %756 = arith.addf %754, %755 : vector<8x256xf32>
    %cst_215 = arith.constant 2.000000e+00 : f32
    %757 = vector.broadcast %cst_215 : f32 to vector<8x256xf32>
    %758 = arith.mulf %757, %756 : vector<8x256xf32>
    %759 = arith.select %11, %758, %756 : vector<8x256xi1>, vector<8x256xf32>
    %760 = arith.negf %759 : vector<8x256xf32>
    %761 = math.exp %760 : vector<8x256xf32>
    %cst_216 = arith.constant 1.000000e+00 : f32
    %762 = vector.broadcast %cst_216 : f32 to vector<8x256xf32>
    %763 = arith.addf %762, %761 : vector<8x256xf32>
    %764 = arith.divf %762, %763 : vector<8x256xf32>
    %cst_217 = arith.constant 2.000000e+00 : f32
    %765 = vector.broadcast %cst_217 : f32 to vector<8x256xf32>
    %766 = arith.mulf %765, %764 : vector<8x256xf32>
    %cst_218 = arith.constant 1.000000e+00 : f32
    %767 = vector.broadcast %cst_218 : f32 to vector<8x256xf32>
    %768 = arith.subf %766, %767 : vector<8x256xf32>
    %769 = arith.select %11, %768, %764 : vector<8x256xi1>, vector<8x256xf32>
    %770 = vector.extract_strided_slice %769 {offsets = [0, 0], sizes = [8, 32], strides = [1, 1]} : vector<8x256xf32> to vector<8x32xf32>
    %771 = vector.extract_strided_slice %769 {offsets = [0, 128], sizes = [8, 32], strides = [1, 1]} : vector<8x256xf32> to vector<8x32xf32>
    %772 = tpu.concatenate %770, %771 in 1 : vector<8x32xf32>, vector<8x32xf32> -> vector<8x64xf32>
    %773 = vector.extract_strided_slice %769 {offsets = [0, 32], sizes = [8, 32], strides = [1, 1]} : vector<8x256xf32> to vector<8x32xf32>
    %774 = vector.extract_strided_slice %769 {offsets = [0, 160], sizes = [8, 32], strides = [1, 1]} : vector<8x256xf32> to vector<8x32xf32>
    %775 = tpu.concatenate %773, %774 in 1 : vector<8x32xf32>, vector<8x32xf32> -> vector<8x64xf32>
    %776 = vector.extract_strided_slice %769 {offsets = [0, 64], sizes = [8, 32], strides = [1, 1]} : vector<8x256xf32> to vector<8x32xf32>
    %777 = vector.extract_strided_slice %769 {offsets = [0, 192], sizes = [8, 32], strides = [1, 1]} : vector<8x256xf32> to vector<8x32xf32>
    %778 = tpu.concatenate %776, %777 in 1 : vector<8x32xf32>, vector<8x32xf32> -> vector<8x64xf32>
    %779 = vector.extract_strided_slice %769 {offsets = [0, 96], sizes = [8, 32], strides = [1, 1]} : vector<8x256xf32> to vector<8x32xf32>
    %780 = vector.extract_strided_slice %769 {offsets = [0, 224], sizes = [8, 32], strides = [1, 1]} : vector<8x256xf32> to vector<8x32xf32>
    %781 = tpu.concatenate %779, %780 in 1 : vector<8x32xf32>, vector<8x32xf32> -> vector<8x64xf32>
    %782 = arith.mulf %775, %735 : vector<8x64xf32>
    %783 = arith.mulf %772, %778 : vector<8x64xf32>
    %784 = arith.addf %782, %783 : vector<8x64xf32>
    %785 = math.tanh %784 : vector<8x64xf32>
    %786 = arith.mulf %781, %785 : vector<8x64xf32>
    %787 = vector.extract_strided_slice %786 {offsets = [0, 0], sizes = [8, 32], strides = [1, 1]} : vector<8x64xf32> to vector<8x32xf32>
    %788 = arith.index_cast %746 : i32 to index
    %c0_219 = arith.constant 0 : index
    %789 = vector.load %arg7[%788, %c0_219] : memref<64x64xf32, #tpu.memory_space<vmem>>, vector<8x32xf32>
    tpu.vector_store %arg7[%788, %c0_219], %787 {strides = array<i32>} : memref<64x64xf32, #tpu.memory_space<vmem>>, vector<8x32xf32>,
    %790 = vector.extract_strided_slice %786 {offsets = [0, 32], sizes = [8, 32], strides = [1, 1]} : vector<8x64xf32> to vector<8x32xf32>
    %791 = arith.index_cast %749 : i32 to index
    %c32_220 = arith.constant 32 : index
    %792 = vector.load %arg7[%791, %c32_220] : memref<64x64xf32, #tpu.memory_space<vmem>>, vector<8x32xf32>
    tpu.vector_store %arg7[%791, %c32_220], %790 {strides = array<i32>} : memref<64x64xf32, #tpu.memory_space<vmem>>, vector<8x32xf32>,
    %793 = arith.truncf %786 : vector<8x64xf32> to vector<8x64xbf16>
    %c7_i32_221 = arith.constant 7 : i32
    %c8_i32_222 = arith.constant 8 : i32
    %794 = arith.muli %c7_i32_221, %c8_i32_222 : i32
    %795 = tpu.assume_multiple %794, 8 : i32
    %c7_i32_223 = arith.constant 7 : i32
    %796 = arith.subi %c7_i32_223, %c7_i32_221 : i32
    %c8_i32_224 = arith.constant 8 : i32
    %797 = arith.muli %796, %c8_i32_224 : i32
    %798 = tpu.assume_multiple %797, 8 : i32
    %799 = arith.index_cast %795 : i32 to index
    %c0_225 = arith.constant 0 : index
    %800 = vector.load %arg10[%799, %c0_225] : memref<64x256xf32, #tpu.memory_space<vmem>>, vector<8x128xf32>
    %801 = arith.index_cast %798 : i32 to index
    %c128_226 = arith.constant 128 : index
    %802 = vector.load %arg10[%801, %c128_226] : memref<64x256xf32, #tpu.memory_space<vmem>>, vector<8x128xf32>
    %803 = tpu.concatenate %800, %802 in 1 : vector<8x128xf32>, vector<8x128xf32> -> vector<8x256xf32>
    %cst_227 = arith.constant dense<0.000000e+00> : vector<8x256xf32>
    %804 = tpu.matmul %793, %439, %cst_227 {dimension_numbers = #tpu.dot_dimension_numbers<[1], [0], [0], [1], [0, 0, 1, 1], [], []>} : vector<8x64xbf16>, vector<64x256xbf16>, vector<8x256xf32> -> vector<8x256xf32>
    %805 = arith.addf %803, %804 : vector<8x256xf32>
    %cst_228 = arith.constant 2.000000e+00 : f32
    %806 = vector.broadcast %cst_228 : f32 to vector<8x256xf32>
    %807 = arith.mulf %806, %805 : vector<8x256xf32>
    %808 = arith.select %11, %807, %805 : vector<8x256xi1>, vector<8x256xf32>
    %809 = arith.negf %808 : vector<8x256xf32>
    %810 = math.exp %809 : vector<8x256xf32>
    %cst_229 = arith.constant 1.000000e+00 : f32
    %811 = vector.broadcast %cst_229 : f32 to vector<8x256xf32>
    %812 = arith.addf %811, %810 : vector<8x256xf32>
    %813 = arith.divf %811, %812 : vector<8x256xf32>
    %cst_230 = arith.constant 2.000000e+00 : f32
    %814 = vector.broadcast %cst_230 : f32 to vector<8x256xf32>
    %815 = arith.mulf %814, %813 : vector<8x256xf32>
    %cst_231 = arith.constant 1.000000e+00 : f32
    %816 = vector.broadcast %cst_231 : f32 to vector<8x256xf32>
    %817 = arith.subf %815, %816 : vector<8x256xf32>
    %818 = arith.select %11, %817, %813 : vector<8x256xi1>, vector<8x256xf32>
    %819 = vector.extract_strided_slice %818 {offsets = [0, 0], sizes = [8, 32], strides = [1, 1]} : vector<8x256xf32> to vector<8x32xf32>
    %820 = vector.extract_strided_slice %818 {offsets = [0, 128], sizes = [8, 32], strides = [1, 1]} : vector<8x256xf32> to vector<8x32xf32>
    %821 = tpu.concatenate %819, %820 in 1 : vector<8x32xf32>, vector<8x32xf32> -> vector<8x64xf32>
    %822 = vector.extract_strided_slice %818 {offsets = [0, 32], sizes = [8, 32], strides = [1, 1]} : vector<8x256xf32> to vector<8x32xf32>
    %823 = vector.extract_strided_slice %818 {offsets = [0, 160], sizes = [8, 32], strides = [1, 1]} : vector<8x256xf32> to vector<8x32xf32>
    %824 = tpu.concatenate %822, %823 in 1 : vector<8x32xf32>, vector<8x32xf32> -> vector<8x64xf32>
    %825 = vector.extract_strided_slice %818 {offsets = [0, 64], sizes = [8, 32], strides = [1, 1]} : vector<8x256xf32> to vector<8x32xf32>
    %826 = vector.extract_strided_slice %818 {offsets = [0, 192], sizes = [8, 32], strides = [1, 1]} : vector<8x256xf32> to vector<8x32xf32>
    %827 = tpu.concatenate %825, %826 in 1 : vector<8x32xf32>, vector<8x32xf32> -> vector<8x64xf32>
    %828 = vector.extract_strided_slice %818 {offsets = [0, 96], sizes = [8, 32], strides = [1, 1]} : vector<8x256xf32> to vector<8x32xf32>
    %829 = vector.extract_strided_slice %818 {offsets = [0, 224], sizes = [8, 32], strides = [1, 1]} : vector<8x256xf32> to vector<8x32xf32>
    %830 = tpu.concatenate %828, %829 in 1 : vector<8x32xf32>, vector<8x32xf32> -> vector<8x64xf32>
    %831 = arith.mulf %824, %784 : vector<8x64xf32>
    %832 = arith.mulf %821, %827 : vector<8x64xf32>
    %833 = arith.addf %831, %832 : vector<8x64xf32>
    %834 = math.tanh %833 : vector<8x64xf32>
    %835 = arith.mulf %830, %834 : vector<8x64xf32>
    %836 = vector.extract_strided_slice %835 {offsets = [0, 0], sizes = [8, 32], strides = [1, 1]} : vector<8x64xf32> to vector<8x32xf32>
    %837 = arith.index_cast %795 : i32 to index
    %c0_232 = arith.constant 0 : index
    %838 = vector.load %arg7[%837, %c0_232] : memref<64x64xf32, #tpu.memory_space<vmem>>, vector<8x32xf32>
    tpu.vector_store %arg7[%837, %c0_232], %836 {strides = array<i32>} : memref<64x64xf32, #tpu.memory_space<vmem>>, vector<8x32xf32>,
    %839 = vector.extract_strided_slice %835 {offsets = [0, 32], sizes = [8, 32], strides = [1, 1]} : vector<8x64xf32> to vector<8x32xf32>
    %840 = arith.index_cast %798 : i32 to index
    %c32_233 = arith.constant 32 : index
    %841 = vector.load %arg7[%840, %c32_233] : memref<64x64xf32, #tpu.memory_space<vmem>>, vector<8x32xf32>
    tpu.vector_store %arg7[%840, %c32_233], %839 {strides = array<i32>} : memref<64x64xf32, #tpu.memory_space<vmem>>, vector<8x32xf32>,
    %842 = arith.truncf %835 : vector<8x64xf32> to vector<8x64xbf16>
    %c8_i32_234 = arith.constant 8 : i32
    return
  }
}

</mosaic_0001>

<llo_original>
// kernel: bilstm_forward.1
$region0: #{bilstm_forward.1}
  #allocation0 [shape = 'u32[]', space=smem, size = 0x4, offset = 0x4, fixed_abs, tag = 'smem constant byte address 0x4 - core index']
  #allocation1 [shape = 'u32[144,128]{1,0:T(1,128)}', space=vmem, size = 0x12000, scoped, tag = 'internal scratch']
  #allocation2 [shape = 'bf16[64,64]{1,0:T(8,128)(2,1)}', space=vmem, size = 0x4000, scoped, tag = 'scratch operand']
  #allocation3 [shape = 'bf16[64,64]{1,0:T(8,128)(2,1)}', space=vmem, size = 0x4000, scoped, tag = 'scratch operand']
  #allocation4 [shape = 'f32[64,256]{1,0:T(8,128)}', space=vmem, size = 0x10000, scoped, tag = 'scratch operand']
  %s0 = inlined_call_operand.vmem [shape: bf16[64,16], index: 0, kind: input, shape index: {}]
  %s1 = inlined_call_operand.vmem [shape: bf16[16,256], index: 1, kind: input, shape index: {}]
  %s2 = inlined_call_operand.vmem [shape: bf16[1,64,256], index: 2, kind: input, shape index: {}]
  %s3 = inlined_call_operand.vmem [shape: bf16[2,64,256], index: 3, kind: input, shape index: {}]
  %s4 = inlined_call_operand.vmem [shape: f32[2,1,256], index: 4, kind: input, shape index: {}]
  %s5 = inlined_call_operand.vmem [shape: f32[2,8,64], index: 5, kind: input, shape index: {}]
  %s6 = inlined_call_operand.vmem [shape: f32[2,8,64], index: 6, kind: input, shape index: {}]
  %s7 = inlined_call_operand.vmem [shape: f32[64,64], index: 7, kind: output, shape index: {}]
  %s8 = sld [smem:[#allocation0]]
  $region38: #{bilstm_forward.1} parent=0
    _
  %s10 = ssub.s32 1, %s8
  %s11 = scalar_select 0, %s10, %s8
  // Predicated region
  $region2: #{bilstm_forward.1} parent=0 // pred_check
    _
  $region3: #{bilstm_forward.1} parent=0 // pred_check_branch
    %13 = sbr.rel (0) target = $region5
  $region4: #{bilstm_forward.1} parent=0 // pred_region
    _
  $region5: #{bilstm_forward.1} parent=0 // pred_fallthru
    _
  // Predicated region
  $region6: #{bilstm_forward.1} parent=0 // pred_check
    _
  $region7: #{bilstm_forward.1} parent=0 // pred_check_branch
    %15 = sbr.rel (0) target = $region9
  $region8: #{bilstm_forward.1} parent=0 // pred_region
    _
  $region9: #{bilstm_forward.1} parent=0 // pred_fallthru
    _
  // Predicated region
  $region10: #{bilstm_forward.1} parent=0 // pred_check
    _
  $region11: #{bilstm_forward.1} parent=0 // pred_check_branch
    %17 = sbr.rel (0) target = $region13
  $region12: #{bilstm_forward.1} parent=0 // pred_region
    _
  $region13: #{bilstm_forward.1} parent=0 // pred_fallthru
    _
  // Predicated region
  $region14: #{bilstm_forward.1} parent=0 // pred_check
    _
  $region15: #{bilstm_forward.1} parent=0 // pred_check_branch
    %19 = sbr.rel (0) target = $region17
  $region16: #{bilstm_forward.1} parent=0 // pred_region
    _
  $region17: #{bilstm_forward.1} parent=0 // pred_fallthru
    _
  // Predicated region
  $region18: #{bilstm_forward.1} parent=0 // pred_check
    _
  $region19: #{bilstm_forward.1} parent=0 // pred_check_branch
    %21 = sbr.rel (0) target = $region21
  $region20: #{bilstm_forward.1} parent=0 // pred_region
    _
  $region21: #{bilstm_forward.1} parent=0 // pred_fallthru
    _
  // Predicated region
  $region22: #{bilstm_forward.1} parent=0 // pred_check
    _
  $region23: #{bilstm_forward.1} parent=0 // pred_check_branch
    %23 = sbr.rel (0) target = $region25
  $region24: #{bilstm_forward.1} parent=0 // pred_region
    _
  $region25: #{bilstm_forward.1} parent=0 // pred_fallthru
    _
  // Predicated region
  $region26: #{bilstm_forward.1} parent=0 // pred_check
    _
  $region27: #{bilstm_forward.1} parent=0 // pred_check_branch
    %25 = sbr.rel (0) target = $region29
  $region28: #{bilstm_forward.1} parent=0 // pred_region
    _
  $region29: #{bilstm_forward.1} parent=0 // pred_fallthru
    _
  %v27 = vlaneseq
  %v28 = vand.u32 %v27, 127
  %v29 = vadd.s32 %v28, 128
  %vm30 = vcmp.ge.s32.totalorder %v28, 64
  %vm31 = vcmp.ge.s32.totalorder %v29, 64
  %vm32 = vcmp.lt.s32.totalorder %v28, 96
  %vm33 = vcmp.lt.s32.totalorder %v29, 96
  %vm34 = vmand %vm30, %vm32
  %vm35 = vmand %vm31, %vm33
  %vm36 = vcmp.ge.s32.totalorder %v28, 192
  %vm37 = vcmp.ge.s32.totalorder %v29, 192
  %vm38 = vcmp.lt.s32.totalorder %v28, 224
  %vm39 = vcmp.lt.s32.totalorder %v29, 224
  %vm40 = vmand %vm36, %vm38
  %vm41 = vmand %vm37, %vm39
  %vm42 = vmor %vm34, %vm40
  %vm43 = vmor %vm35, %vm41
  %v44 = vld [vmem:[%s0] sm:$0xf]
  %v45 = vld [vmem:[%s0 + $0x4] sm:$0xf]
  %v46 = vld [vmem:[%s0 + $0x8] sm:$0xf]
  %v47 = vld [vmem:[%s0 + $0xc] sm:$0xf]
  %v48 = vld [vmem:[%s0 + $0x10] sm:$0xf]
  %v49 = vld [vmem:[%s0 + $0x14] sm:$0xf]
  %v50 = vld [vmem:[%s0 + $0x18] sm:$0xf]
  %v51 = vld [vmem:[%s0 + $0x1c] sm:$0xf]
  %v52 = vld [vmem:[%s1] sm:$0xff]
  %v53 = vld [vmem:[%s1 + $0x8] sm:$0xff]
  %v54 = vld [vmem:[%s3] sm:$0xff]
  %v55 = vld [vmem:[%s3 + $0x8] sm:$0xff]
  %v56 = vld [vmem:[%s3 + $0x10] sm:$0xff]
  %v57 = vld [vmem:[%s3 + $0x18] sm:$0xff]
  %v58 = vld [vmem:[%s3 + $0x20] sm:$0xff]
  %v59 = vld [vmem:[%s3 + $0x28] sm:$0xff]
  %v60 = vld [vmem:[%s3 + $0x30] sm:$0xff]
  %v61 = vld [vmem:[%s3 + $0x38] sm:$0xff]
  %v62 = vld [vmem:[%s4] sm:$0x3]
  %v63 = vld [vmem:[%s5] sm:$0xff]
  %v64 = vld [vmem:[%s6] sm:$0xff]
  %v66 = vlaneseq
  %v67 = vshrl.u32 %v66, 7
  %v68 = vsub.s32 0, %v67
  %v69 = vrot.slane %v62, %v68
  %v70 = vlaneseq
  %v71 = vshrl.u32 %v70, 7
  %v72 = vsub.s32 1, %v71
  %v73 = vrot.slane %v62, %v72
  %v84 = vunpack.c.l.b16 %v44
  %v85 = vunpack.c.l.b16 %v45
  %v86 = vunpack.c.l.b16 %v46
  %v87 = vunpack.c.l.b16 %v47
  %v88 = vunpack.c.l.b16 %v48
  %v89 = vunpack.c.l.b16 %v49
  %v90 = vunpack.c.l.b16 %v50
  %v91 = vunpack.c.l.b16 %v51
  %v92 = vpack.c.b16 %v85, %v84
  %v93 = vpack.c.b16 %v87, %v86
  %v94 = vpack.c.b16 %v89, %v88
  %v95 = vpack.c.b16 %v91, %v90
  %v98 = vunpack.c.l.b16 %v52
  %v99 = vunpack.c.h.b16 %v52
  %v100 = vunpack.c.l.b16 %v53
  %v101 = vunpack.c.h.b16 %v53
  %v102 = vpack.c.b16 %v100, %v98
  %v103 = vpack.c.b16 %v101, %v99
  %vm106 = vcmask 130048
  %v108 = vsel %vm106, %v92, 0
  %v111 = vsel %vm106, %v93, 0
  %v114 = vsel %vm106, %v94, 0
  %v117 = vsel %vm106, %v95, 0
  %119 = vmatprep.subr.bf16.mxu0 0
  %120 = vmatpush1.bf16.msra.mxu0 0
  %121 = vmatprep.subr.bf16.mxu0 0
  %122 = vmatpush1.bf16.msra.mxu0 0
  %123 = vmatprep.subr.bf16.mxu0 0
  %124 = vmatpush1.bf16.msra.mxu0 0
  %125 = vmatprep.subr.bf16.mxu0 0
  %126 = vmatpush1.bf16.msra.mxu0 0
  %127 = vmatprep.subr.bf16.mxu0 0
  %128 = vmatpush1.bf16.msra.mxu0 0
  %129 = vmatprep.subr.bf16.mxu0 0
  %130 = vmatpush1.bf16.msra.mxu0 0
  %131 = vmatprep.subr.bf16.mxu0 0
  %132 = vmatpush1.bf16.msra.mxu0 0
  %133 = vmatprep.subr.bf16.mxu0 %v103
  %134 = vmatpush1.bf16.msra.mxu0 %v102
  %135 = vmatprep.subr.bf16.mxu0 0
  %136 = vmatpush2.bf16.msra.mxu0 0
  %137 = vmatprep.subr.bf16.mxu0 0
  %138 = vmatpush2.bf16.msra.mxu0 0
  %139 = vmatprep.subr.bf16.mxu0 0
  %140 = vmatpush2.bf16.msra.mxu0 0
  %141 = vmatprep.subr.bf16.mxu0 0
  %142 = vmatpush2.bf16.msra.mxu0 0
  %143 = vmatprep.subr.bf16.mxu0 0
  %144 = vmatpush2.bf16.msra.mxu0 0
  %145 = vmatprep.subr.bf16.mxu0 0
  %146 = vmatpush2.bf16.msra.mxu0 0
  %147 = vmatprep.subr.bf16.mxu0 0
  %148 = vmatpush2.bf16.msra.mxu0 0
  %149 = vmatprep.subr.bf16.mxu0 0
  %150 = vmatpush2.bf16.msra.mxu0 0
  %151 = vmatprep.mubr.bf16.mxu0 0
  %152 = vmatmul.mubr.bf16.gmra.mxu0 %v108
  %v153 = vpop.f32.mrf.mxu0
  %v154 = vadd.f32 %v69, %v153
  %v155 = vpop.f32.mrf.mxu0
  %v156 = vadd.f32 %v73, %v155
  %v157 = vpop.f32.mrf.mxu0
  %v158 = vadd.f32 %v69, %v157
  %v159 = vpop.f32.mrf.mxu0
  %v160 = vadd.f32 %v73, %v159
  %161 = vmatprep.mubr.bf16.mxu0 0
  %162 = vmatmul.mubr.bf16.gmra.mxu0 %v111
  %v163 = vpop.f32.mrf.mxu0
  %v164 = vadd.f32 %v69, %v163
  %v165 = vpop.f32.mrf.mxu0
  %v166 = vadd.f32 %v73, %v165
  %v167 = vpop.f32.mrf.mxu0
  %v168 = vadd.f32 %v69, %v167
  %v169 = vpop.f32.mrf.mxu0
  %v170 = vadd.f32 %v73, %v169
  %171 = vmatprep.mubr.bf16.mxu0 0
  %172 = vmatmul.mubr.bf16.gmra.mxu0 %v114
  %v173 = vpop.f32.mrf.mxu0
  %v174 = vadd.f32 %v69, %v173
  %v175 = vpop.f32.mrf.mxu0
  %v176 = vadd.f32 %v73, %v175
  %v177 = vpop.f32.mrf.mxu0
  %v178 = vadd.f32 %v69, %v177
  %v179 = vpop.f32.mrf.mxu0
  %v180 = vadd.f32 %v73, %v179
  %181 = vmatprep.mubr.bf16.mxu0 0
  %182 = vmatmul.mubr.bf16.gmra.mxu0 %v117
  %v183 = vpop.f32.mrf.mxu0
  %v184 = vadd.f32 %v69, %v183
  %v185 = vpop.f32.mrf.mxu0
  %v186 = vadd.f32 %v73, %v185
  %v187 = vpop.f32.mrf.mxu0
  %v188 = vadd.f32 %v69, %v187
  %v189 = vpop.f32.mrf.mxu0
  %v190 = vadd.f32 %v73, %v189
  %191 = vdwg.mxu0
  %192 = vst [vmem:[#allocation4] sm:$0xff] %v154
  %193 = vst [vmem:[#allocation4 + $0x8] sm:$0xff] %v156
  %194 = vst [vmem:[#allocation4 + $0x10] sm:$0xff] %v158
  %195 = vst [vmem:[#allocation4 + $0x18] sm:$0xff] %v160
  %196 = vst [vmem:[#allocation4 + $0x20] sm:$0xff] %v164
  %197 = vst [vmem:[#allocation4 + $0x28] sm:$0xff] %v166
  %198 = vst [vmem:[#allocation4 + $0x30] sm:$0xff] %v168
  %199 = vst [vmem:[#allocation4 + $0x38] sm:$0xff] %v170
  %200 = vst [vmem:[#allocation4 + $0x40] sm:$0xff] %v174
  %201 = vst [vmem:[#allocation4 + $0x48] sm:$0xff] %v176
  %202 = vst [vmem:[#allocation4 + $0x50] sm:$0xff] %v178
  %203 = vst [vmem:[#allocation4 + $0x58] sm:$0xff] %v180
  %204 = vst [vmem:[#allocation4 + $0x60] sm:$0xff] %v184
  %205 = vst [vmem:[#allocation4 + $0x68] sm:$0xff] %v186
  %206 = vst [vmem:[#allocation4 + $0x70] sm:$0xff] %v188
  %207 = vst [vmem:[#allocation4 + $0x78] sm:$0xff] %v190
  %v208 = vpack.c.bf16 %v63, %v63
  %s209 = smul.u32 0, 2
  %s210 = smul.addr %s209, 8
  %s211 = scalar_lea.vmem [#allocation4], %s210
  %v212 = vld [vmem:[%s211] sm:$0xff]
  %s213 = smul.u32 7, 2
  %s214 = smul.addr %s213, 8
  %s215 = scalar_lea.vmem [#allocation4], %s214
  %v216 = vld [vmem:[%s215 + $0x8] sm:$0xff]
  %v225 = vunpack.c.l.b16 %v54
  %v226 = vunpack.c.h.b16 %v54
  %v227 = vunpack.c.l.b16 %v55
  %v228 = vunpack.c.h.b16 %v55
  %v229 = vunpack.c.l.b16 %v56
  %v230 = vunpack.c.h.b16 %v56
  %v231 = vunpack.c.l.b16 %v57
  %v232 = vunpack.c.h.b16 %v57
  %v233 = vunpack.c.l.b16 %v58
  %v234 = vunpack.c.h.b16 %v58
  %v235 = vunpack.c.l.b16 %v59
  %v236 = vunpack.c.h.b16 %v59
  %v237 = vunpack.c.l.b16 %v60
  %v238 = vunpack.c.h.b16 %v60
  %v239 = vunpack.c.l.b16 %v61
  %v240 = vunpack.c.h.b16 %v61
  %v241 = vpack.c.b16 %v227, %v225
  %v242 = vpack.c.b16 %v228, %v226
  %v243 = vpack.c.b16 %v231, %v229
  %v244 = vpack.c.b16 %v232, %v230
  %v245 = vpack.c.b16 %v235, %v233
  %v246 = vpack.c.b16 %v236, %v234
  %v247 = vpack.c.b16 %v239, %v237
  %v248 = vpack.c.b16 %v240, %v238
  %vm257 = vcmask 523264
  %v259 = vsel %vm257, %v208, 0
  %261 = vmatprep.subr.bf16.mxu0 0
  %262 = vmatpush1.bf16.msra.mxu0 0
  %263 = vmatprep.subr.bf16.mxu0 0
  %264 = vmatpush1.bf16.msra.mxu0 0
  %265 = vmatprep.subr.bf16.mxu0 0
  %266 = vmatpush1.bf16.msra.mxu0 0
  %267 = vmatprep.subr.bf16.mxu0 0
  %268 = vmatpush1.bf16.msra.mxu0 0
  %269 = vmatprep.subr.bf16.mxu0 %v248
  %270 = vmatpush1.bf16.msra.mxu0 %v247
  %271 = vmatprep.subr.bf16.mxu0 %v246
  %272 = vmatpush1.bf16.msra.mxu0 %v245
  %273 = vmatprep.subr.bf16.mxu0 %v244
  %274 = vmatpush1.bf16.msra.mxu0 %v243
  %275 = vmatprep.subr.bf16.mxu0 %v242
  %276 = vmatpush1.bf16.msra.mxu0 %v241
  %277 = vmatprep.subr.bf16.mxu0 0
  %278 = vmatpush2.bf16.msra.mxu0 0
  %279 = vmatprep.subr.bf16.mxu0 0
  %280 = vmatpush2.bf16.msra.mxu0 0
  %281 = vmatprep.subr.bf16.mxu0 0
  %282 = vmatpush2.bf16.msra.mxu0 0
  %283 = vmatprep.subr.bf16.mxu0 0
  %284 = vmatpush2.bf16.msra.mxu0 0
  %285 = vmatprep.subr.bf16.mxu0 0
  %286 = vmatpush2.bf16.msra.mxu0 0
  %287 = vmatprep.subr.bf16.mxu0 0
  %288 = vmatpush2.bf16.msra.mxu0 0
  %289 = vmatprep.subr.bf16.mxu0 0
  %290 = vmatpush2.bf16.msra.mxu0 0
  %291 = vmatprep.subr.bf16.mxu0 0
  %292 = vmatpush2.bf16.msra.mxu0 0
  %293 = vmatprep.mubr.bf16.mxu0 0
  %294 = vmatmul.mubr.bf16.gmra.mxu0 %v259
  %v295 = vpop.f32.mrf.mxu0
  %v296 = vadd.f32 0.0, %v295
  %v297 = vpop.f32.mrf.mxu0
  %v298 = vadd.f32 0.0, %v297
  %v299 = vpop.f32.mrf.mxu0
  %v300 = vpop.f32.mrf.mxu0
  %301 = vdwg.mxu0
  %v302 = vadd.f32 %v212, %v296
  %v303 = vadd.f32 %v216, %v298
  %v304 = vmul.f32 %v302, 2.0
  %v305 = vmul.f32 %v303, 2.0
  %v306 = vsel %vm42, %v304, %v302
  %v307 = vsel %vm43, %v305, %v303
  %v308 = vxor.u32 %v306, 2147483648
  %v309 = vxor.u32 %v307, 2147483648
  %v310 = vmul.f32 %v308, 1.442695
  %v311 = vpow.pop %v310
  %v312 = vmul.f32 %v309, 1.442695
  %v313 = vpow.pop %v312
  %v314 = vadd.f32 %v311, 1.0
  %v315 = vadd.f32 %v313, 1.0
  %v316 = vrcp.pop %v314
  %v317 = vmul.f32 1.0, %v316
  %v318 = vrcp.pop %v315
  %v319 = vmul.f32 1.0, %v318
  %v320 = vmul.f32 %v317, 2.0
  %v321 = vmul.f32 %v319, 2.0
  %v322 = vsub.f32 %v320, 1.0
  %v323 = vsub.f32 %v321, 1.0
  %v324 = vsel %vm42, %v322, %v317
  %v325 = vsel %vm43, %v323, %v319
  %327 = vrot.lane.b32.xlu0 %v325, 32
  %v328 = vpop.permute.xlu0 %327
  %vm330 = vcmask 261120
  %v331 = vsel %vm330, %v324, %v328
  %333 = vrot.lane.b32.xlu0 %v324, 96
  %v334 = vpop.permute.xlu0 %333
  %v336 = vsel %vm330, %v334, %v325
  %337 = vrot.lane.b32.xlu0 %v324, 64
  %v338 = vpop.permute.xlu0 %337
  %340 = vrot.lane.b32.xlu0 %v325, 96
  %v341 = vpop.permute.xlu0 %340
  %v343 = vsel %vm330, %v338, %v341
  %344 = vrot.lane.b32.xlu0 %v324, 32
  %v345 = vpop.permute.xlu0 %344
  %347 = vrot.lane.b32.xlu0 %v325, 64
  %v348 = vpop.permute.xlu0 %347
  %v350 = vsel %vm330, %v345, %v348
  %v351 = vmul.f32 %v336, %v64
  %v352 = vmul.f32 %v331, %v343
  %v353 = vadd.f32 %v351, %v352
  %v354 = vtanh.pop %v353
  %v355 = vmul.f32 %v350, %v354
  %v356 = vpack.c.bf16 %v355, %v355
  %vm357 = vcmask 257024
  %358 = vst.msk [vmem:[#allocation2] sm:$0xf] %vm357, %v356
  %s359 = scalar_lea.vmem [#allocation2], 28
  %vm360 = vcmask 519424
  %361 = vst.msk [vmem:[%s359] sm:$0xf] %vm360, %v356
  %s362 = smul.u32 1, 2
  %s363 = smul.addr %s362, 8
  %s364 = scalar_lea.vmem [#allocation4], %s363
  %v365 = vld [vmem:[%s364] sm:$0xff]
  %s366 = smul.u32 6, 2
  %s367 = smul.addr %s366, 8
  %s368 = scalar_lea.vmem [#allocation4], %s367
  %v369 = vld [vmem:[%s368 + $0x8] sm:$0xff]
  %v371 = vsel %vm257, %v356, 0
  %373 = vmatprep.subr.bf16.mxu0 0
  %374 = vmatpush1.bf16.msra.mxu0 0
  %375 = vmatprep.subr.bf16.mxu0 0
  %376 = vmatpush1.bf16.msra.mxu0 0
  %377 = vmatprep.subr.bf16.mxu0 0
  %378 = vmatpush1.bf16.msra.mxu0 0
  %379 = vmatprep.subr.bf16.mxu0 0
  %380 = vmatpush1.bf16.msra.mxu0 0
  %381 = vmatprep.subr.bf16.mxu0 %v248
  %382 = vmatpush1.bf16.msra.mxu0 %v247
  %383 = vmatprep.subr.bf16.mxu0 %v246
  %384 = vmatpush1.bf16.msra.mxu0 %v245
  %385 = vmatprep.subr.bf16.mxu0 %v244
  %386 = vmatpush1.bf16.msra.mxu0 %v243
  %387 = vmatprep.subr.bf16.mxu0 %v242
  %388 = vmatpush1.bf16.msra.mxu0 %v241
  %389 = vmatprep.subr.bf16.mxu0 0
  %390 = vmatpush2.bf16.msra.mxu0 0
  %391 = vmatprep.subr.bf16.mxu0 0
  %392 = vmatpush2.bf16.msra.mxu0 0
  %393 = vmatprep.subr.bf16.mxu0 0
  %394 = vmatpush2.bf16.msra.mxu0 0
  %395 = vmatprep.subr.bf16.mxu0 0
  %396 = vmatpush2.bf16.msra.mxu0 0
  %397 = vmatprep.subr.bf16.mxu0 0
  %398 = vmatpush2.bf16.msra.mxu0 0
  %399 = vmatprep.subr.bf16.mxu0 0
  %400 = vmatpush2.bf16.msra.mxu0 0
  %401 = vmatprep.subr.bf16.mxu0 0
  %402 = vmatpush2.bf16.msra.mxu0 0
  %403 = vmatprep.subr.bf16.mxu0 0
  %404 = vmatpush2.bf16.msra.mxu0 0
  %405 = vmatprep.mubr.bf16.mxu0 0
  %406 = vmatmul.mubr.bf16.gmra.mxu0 %v371
  %v407 = vpop.f32.mrf.mxu0
  %v408 = vadd.f32 0.0, %v407
  %v409 = vpop.f32.mrf.mxu0
  %v410 = vadd.f32 0.0, %v409
  %v411 = vpop.f32.mrf.mxu0
  %v412 = vpop.f32.mrf.mxu0
  %413 = vdwg.mxu0
  %v414 = vadd.f32 %v365, %v408
  %v415 = vadd.f32 %v369, %v410
  %v416 = vmul.f32 %v414, 2.0
  %v417 = vmul.f32 %v415, 2.0
  %v418 = vsel %vm42, %v416, %v414
  %v419 = vsel %vm43, %v417, %v415
  %v420 = vxor.u32 %v418, 2147483648
  %v421 = vxor.u32 %v419, 2147483648
  %v422 = vmul.f32 %v420, 1.442695
  %v423 = vpow.pop %v422
  %v424 = vmul.f32 %v421, 1.442695
  %v425 = vpow.pop %v424
  %v426 = vadd.f32 %v423, 1.0
  %v427 = vadd.f32 %v425, 1.0
  %v428 = vrcp.pop %v426
  %v429 = vmul.f32 1.0, %v428
  %v430 = vrcp.pop %v427
  %v431 = vmul.f32 1.0, %v430
  %v432 = vmul.f32 %v429, 2.0
  %v433 = vmul.f32 %v431, 2.0
  %v434 = vsub.f32 %v432, 1.0
  %v435 = vsub.f32 %v433, 1.0
  %v436 = vsel %vm42, %v434, %v429
  %v437 = vsel %vm43, %v435, %v431
  %439 = vrot.lane.b32.xlu0 %v437, 32
  %v440 = vpop.permute.xlu0 %439
  %v442 = vsel %vm330, %v436, %v440
  %444 = vrot.lane.b32.xlu0 %v436, 96
  %v445 = vpop.permute.xlu0 %444
  %v447 = vsel %vm330, %v445, %v437
  %448 = vrot.lane.b32.xlu0 %v436, 64
  %v449 = vpop.permute.xlu0 %448
  %451 = vrot.lane.b32.xlu0 %v437, 96
  %v452 = vpop.permute.xlu0 %451
  %v454 = vsel %vm330, %v449, %v452
  %455 = vrot.lane.b32.xlu0 %v436, 32
  %v456 = vpop.permute.xlu0 %455
  %458 = vrot.lane.b32.xlu0 %v437, 64
  %v459 = vpop.permute.xlu0 %458
  %v461 = vsel %vm330, %v456, %v459
  %v462 = vmul.f32 %v447, %v353
  %v463 = vmul.f32 %v442, %v454
  %v464 = vadd.f32 %v462, %v463
  %v465 = vtanh.pop %v464
  %v466 = vmul.f32 %v461, %v465
  %v467 = vpack.c.bf16 %v466, %v466
  %s468 = scalar_lea.vmem [#allocation2], 4
  %469 = vst.msk [vmem:[%s468] sm:$0xf] %vm357, %v467
  %s470 = scalar_lea.vmem [#allocation2], 24
  %471 = vst.msk [vmem:[%s470] sm:$0xf] %vm360, %v467
  %s472 = smul.u32 2, 2
  %s473 = smul.addr %s472, 8
  %s474 = scalar_lea.vmem [#allocation4], %s473
  %v475 = vld [vmem:[%s474] sm:$0xff]
  %s476 = smul.u32 5, 2
  %s477 = smul.addr %s476, 8
  %s478 = scalar_lea.vmem [#allocation4], %s477
  %v479 = vld [vmem:[%s478 + $0x8] sm:$0xff]
  %v481 = vsel %vm257, %v467, 0
  %483 = vmatprep.subr.bf16.mxu0 0
  %484 = vmatpush1.bf16.msra.mxu0 0
  %485 = vmatprep.subr.bf16.mxu0 0
  %486 = vmatpush1.bf16.msra.mxu0 0
  %487 = vmatprep.subr.bf16.mxu0 0
  %488 = vmatpush1.bf16.msra.mxu0 0
  %489 = vmatprep.subr.bf16.mxu0 0
  %490 = vmatpush1.bf16.msra.mxu0 0
  %491 = vmatprep.subr.bf16.mxu0 %v248
  %492 = vmatpush1.bf16.msra.mxu0 %v247
  %493 = vmatprep.subr.bf16.mxu0 %v246
  %494 = vmatpush1.bf16.msra.mxu0 %v245
  %495 = vmatprep.subr.bf16.mxu0 %v244
  %496 = vmatpush1.bf16.msra.mxu0 %v243
  %497 = vmatprep.subr.bf16.mxu0 %v242
  %498 = vmatpush1.bf16.msra.mxu0 %v241
  %499 = vmatprep.subr.bf16.mxu0 0
  %500 = vmatpush2.bf16.msra.mxu0 0
  %501 = vmatprep.subr.bf16.mxu0 0
  %502 = vmatpush2.bf16.msra.mxu0 0
  %503 = vmatprep.subr.bf16.mxu0 0
  %504 = vmatpush2.bf16.msra.mxu0 0
  %505 = vmatprep.subr.bf16.mxu0 0
  %506 = vmatpush2.bf16.msra.mxu0 0
  %507 = vmatprep.subr.bf16.mxu0 0
  %508 = vmatpush2.bf16.msra.mxu0 0
  %509 = vmatprep.subr.bf16.mxu0 0
  %510 = vmatpush2.bf16.msra.mxu0 0
  %511 = vmatprep.subr.bf16.mxu0 0
  %512 = vmatpush2.bf16.msra.mxu0 0
  %513 = vmatprep.subr.bf16.mxu0 0
  %514 = vmatpush2.bf16.msra.mxu0 0
  %515 = vmatprep.mubr.bf16.mxu0 0
  %516 = vmatmul.mubr.bf16.gmra.mxu0 %v481
  %v517 = vpop.f32.mrf.mxu0
  %v518 = vadd.f32 0.0, %v517
  %v519 = vpop.f32.mrf.mxu0
  %v520 = vadd.f32 0.0, %v519
  %v521 = vpop.f32.mrf.mxu0
  %v522 = vpop.f32.mrf.mxu0
  %523 = vdwg.mxu0
  %v524 = vadd.f32 %v475, %v518
  %v525 = vadd.f32 %v479, %v520
  %v526 = vmul.f32 %v524, 2.0
  %v527 = vmul.f32 %v525, 2.0
  %v528 = vsel %vm42, %v526, %v524
  %v529 = vsel %vm43, %v527, %v525
  %v530 = vxor.u32 %v528, 2147483648
  %v531 = vxor.u32 %v529, 2147483648
  %v532 = vmul.f32 %v530, 1.442695
  %v533 = vpow.pop %v532
  %v534 = vmul.f32 %v531, 1.442695
  %v535 = vpow.pop %v534
  %v536 = vadd.f32 %v533, 1.0
  %v537 = vadd.f32 %v535, 1.0
  %v538 = vrcp.pop %v536
  %v539 = vmul.f32 1.0, %v538
  %v540 = vrcp.pop %v537
  %v541 = vmul.f32 1.0, %v540
  %v542 = vmul.f32 %v539, 2.0
  %v543 = vmul.f32 %v541, 2.0
  %v544 = vsub.f32 %v542, 1.0
  %v545 = vsub.f32 %v543, 1.0
  %v546 = vsel %vm42, %v544, %v539
  %v547 = vsel %vm43, %v545, %v541
  %549 = vrot.lane.b32.xlu0 %v547, 32
  %v550 = vpop.permute.xlu0 %549
  %v552 = vsel %vm330, %v546, %v550
  %554 = vrot.lane.b32.xlu0 %v546, 96
  %v555 = vpop.permute.xlu0 %554
  %v557 = vsel %vm330, %v555, %v547
  %558 = vrot.lane.b32.xlu0 %v546, 64
  %v559 = vpop.permute.xlu0 %558
  %561 = vrot.lane.b32.xlu0 %v547, 96
  %v562 = vpop.permute.xlu0 %561
  %v564 = vsel %vm330, %v559, %v562
  %565 = vrot.lane.b32.xlu0 %v546, 32
  %v566 = vpop.permute.xlu0 %565
  %568 = vrot.lane.b32.xlu0 %v547, 64
  %v569 = vpop.permute.xlu0 %568
  %v571 = vsel %vm330, %v566, %v569
  %v572 = vmul.f32 %v557, %v464
  %v573 = vmul.f32 %v552, %v564
  %v574 = vadd.f32 %v572, %v573
  %v575 = vtanh.pop %v574
  %v576 = vmul.f32 %v571, %v575
  %v577 = vpack.c.bf16 %v576, %v576
  %s578 = scalar_lea.vmem [#allocation2], 8
  %579 = vst.msk [vmem:[%s578] sm:$0xf] %vm357, %v577
  %s580 = scalar_lea.vmem [#allocation2], 20
  %581 = vst.msk [vmem:[%s580] sm:$0xf] %vm360, %v577
  %s582 = smul.u32 3, 2
  %s583 = smul.addr %s582, 8
  %s584 = scalar_lea.vmem [#allocation4], %s583
  %v585 = vld [vmem:[%s584] sm:$0xff]
  %s586 = smul.u32 4, 2
  %s587 = smul.addr %s586, 8
  %s588 = scalar_lea.vmem [#allocation4], %s587
  %v589 = vld [vmem:[%s588 + $0x8] sm:$0xff]
  %v591 = vsel %vm257, %v577, 0
  %593 = vmatprep.subr.bf16.mxu0 0
  %594 = vmatpush1.bf16.msra.mxu0 0
  %595 = vmatprep.subr.bf16.mxu0 0
  %596 = vmatpush1.bf16.msra.mxu0 0
  %597 = vmatprep.subr.bf16.mxu0 0
  %598 = vmatpush1.bf16.msra.mxu0 0
  %599 = vmatprep.subr.bf16.mxu0 0
  %600 = vmatpush1.bf16.msra.mxu0 0
  %601 = vmatprep.subr.bf16.mxu0 %v248
  %602 = vmatpush1.bf16.msra.mxu0 %v247
  %603 = vmatprep.subr.bf16.mxu0 %v246
  %604 = vmatpush1.bf16.msra.mxu0 %v245
  %605 = vmatprep.subr.bf16.mxu0 %v244
  %606 = vmatpush1.bf16.msra.mxu0 %v243
  %607 = vmatprep.subr.bf16.mxu0 %v242
  %608 = vmatpush1.bf16.msra.mxu0 %v241
  %609 = vmatprep.subr.bf16.mxu0 0
  %610 = vmatpush2.bf16.msra.mxu0 0
  %611 = vmatprep.subr.bf16.mxu0 0
  %612 = vmatpush2.bf16.msra.mxu0 0
  %613 = vmatprep.subr.bf16.mxu0 0
  %614 = vmatpush2.bf16.msra.mxu0 0
  %615 = vmatprep.subr.bf16.mxu0 0
  %616 = vmatpush2.bf16.msra.mxu0 0
  %617 = vmatprep.subr.bf16.mxu0 0
  %618 = vmatpush2.bf16.msra.mxu0 0
  %619 = vmatprep.subr.bf16.mxu0 0
  %620 = vmatpush2.bf16.msra.mxu0 0
  %621 = vmatprep.subr.bf16.mxu0 0
  %622 = vmatpush2.bf16.msra.mxu0 0
  %623 = vmatprep.subr.bf16.mxu0 0
  %624 = vmatpush2.bf16.msra.mxu0 0
  %625 = vmatprep.mubr.bf16.mxu0 0
  %626 = vmatmul.mubr.bf16.gmra.mxu0 %v591
  %v627 = vpop.f32.mrf.mxu0
  %v628 = vadd.f32 0.0, %v627
  %v629 = vpop.f32.mrf.mxu0
  %v630 = vadd.f32 0.0, %v629
  %v631 = vpop.f32.mrf.mxu0
  %v632 = vpop.f32.mrf.mxu0
  %633 = vdwg.mxu0
  %v634 = vadd.f32 %v585, %v628
  %v635 = vadd.f32 %v589, %v630
  %v636 = vmul.f32 %v634, 2.0
  %v637 = vmul.f32 %v635, 2.0
  %v638 = vsel %vm42, %v636, %v634
  %v639 = vsel %vm43, %v637, %v635
  %v640 = vxor.u32 %v638, 2147483648
  %v641 = vxor.u32 %v639, 2147483648
  %v642 = vmul.f32 %v640, 1.442695
  %v643 = vpow.pop %v642
  %v644 = vmul.f32 %v641, 1.442695
  %v645 = vpow.pop %v644
  %v646 = vadd.f32 %v643, 1.0
  %v647 = vadd.f32 %v645, 1.0
  %v648 = vrcp.pop %v646
  %v649 = vmul.f32 1.0, %v648
  %v650 = vrcp.pop %v647
  %v651 = vmul.f32 1.0, %v650
  %v652 = vmul.f32 %v649, 2.0
  %v653 = vmul.f32 %v651, 2.0
  %v654 = vsub.f32 %v652, 1.0
  %v655 = vsub.f32 %v653, 1.0
  %v656 = vsel %vm42, %v654, %v649
  %v657 = vsel %vm43, %v655, %v651
  %659 = vrot.lane.b32.xlu0 %v657, 32
  %v660 = vpop.permute.xlu0 %659
  %v662 = vsel %vm330, %v656, %v660
  %664 = vrot.lane.b32.xlu0 %v656, 96
  %v665 = vpop.permute.xlu0 %664
  %v667 = vsel %vm330, %v665, %v657
  %668 = vrot.lane.b32.xlu0 %v656, 64
  %v669 = vpop.permute.xlu0 %668
  %671 = vrot.lane.b32.xlu0 %v657, 96
  %v672 = vpop.permute.xlu0 %671
  %v674 = vsel %vm330, %v669, %v672
  %675 = vrot.lane.b32.xlu0 %v656, 32
  %v676 = vpop.permute.xlu0 %675
  %678 = vrot.lane.b32.xlu0 %v657, 64
  %v679 = vpop.permute.xlu0 %678
  %v681 = vsel %vm330, %v676, %v679
  %v682 = vmul.f32 %v667, %v574
  %v683 = vmul.f32 %v662, %v674
  %v684 = vadd.f32 %v682, %v683
  %v685 = vtanh.pop %v684
  %v686 = vmul.f32 %v681, %v685
  %v687 = vpack.c.bf16 %v686, %v686
  %s688 = scalar_lea.vmem [#allocation2], 12
  %689 = vst.msk [vmem:[%s688] sm:$0xf] %vm357, %v687
  %s690 = scalar_lea.vmem [#allocation2], 16
  %691 = vst.msk [vmem:[%s690] sm:$0xf] %vm360, %v687
  %v692 = vld [vmem:[%s588] sm:$0xff]
  %v693 = vld [vmem:[%s584 + $0x8] sm:$0xff]
  %v695 = vsel %vm257, %v687, 0
  %697 = vmatprep.subr.bf16.mxu0 0
  %698 = vmatpush1.bf16.msra.mxu0 0
  %699 = vmatprep.subr.bf16.mxu0 0
  %700 = vmatpush1.bf16.msra.mxu0 0
  %701 = vmatprep.subr.bf16.mxu0 0
  %702 = vmatpush1.bf16.msra.mxu0 0
  %703 = vmatprep.subr.bf16.mxu0 0
  %704 = vmatpush1.bf16.msra.mxu0 0
  %705 = vmatprep.subr.bf16.mxu0 %v248
  %706 = vmatpush1.bf16.msra.mxu0 %v247
  %707 = vmatprep.subr.bf16.mxu0 %v246
  %708 = vmatpush1.bf16.msra.mxu0 %v245
  %709 = vmatprep.subr.bf16.mxu0 %v244
  %710 = vmatpush1.bf16.msra.mxu0 %v243
  %711 = vmatprep.subr.bf16.mxu0 %v242
  %712 = vmatpush1.bf16.msra.mxu0 %v241
  %713 = vmatprep.subr.bf16.mxu0 0
  %714 = vmatpush2.bf16.msra.mxu0 0
  %715 = vmatprep.subr.bf16.mxu0 0
  %716 = vmatpush2.bf16.msra.mxu0 0
  %717 = vmatprep.subr.bf16.mxu0 0
  %718 = vmatpush2.bf16.msra.mxu0 0
  %719 = vmatprep.subr.bf16.mxu0 0
  %720 = vmatpush2.bf16.msra.mxu0 0
  %721 = vmatprep.subr.bf16.mxu0 0
  %722 = vmatpush2.bf16.msra.mxu0 0
  %723 = vmatprep.subr.bf16.mxu0 0
  %724 = vmatpush2.bf16.msra.mxu0 0
  %725 = vmatprep.subr.bf16.mxu0 0
  %726 = vmatpush2.bf16.msra.mxu0 0
  %727 = vmatprep.subr.bf16.mxu0 0
  %728 = vmatpush2.bf16.msra.mxu0 0
  %729 = vmatprep.mubr.bf16.mxu0 0
  %730 = vmatmul.mubr.bf16.gmra.mxu0 %v695
  %v731 = vpop.f32.mrf.mxu0
  %v732 = vadd.f32 0.0, %v731
  %v733 = vpop.f32.mrf.mxu0
  %v734 = vadd.f32 0.0, %v733
  %v735 = vpop.f32.mrf.mxu0
  %v736 = vpop.f32.mrf.mxu0
  %737 = vdwg.mxu0
  %v738 = vadd.f32 %v692, %v732
  %v739 = vadd.f32 %v693, %v734
  %v740 = vmul.f32 %v738, 2.0
  %v741 = vmul.f32 %v739, 2.0
  %v742 = vsel %vm42, %v740, %v738
  %v743 = vsel %vm43, %v741, %v739
  %v744 = vxor.u32 %v742, 2147483648
  %v745 = vxor.u32 %v743, 2147483648
  %v746 = vmul.f32 %v744, 1.442695
  %v747 = vpow.pop %v746
  %v748 = vmul.f32 %v745, 1.442695
  %v749 = vpow.pop %v748
  %v750 = vadd.f32 %v747, 1.0
  %v751 = vadd.f32 %v749, 1.0
  %v752 = vrcp.pop %v750
  %v753 = vmul.f32 1.0, %v752
  %v754 = vrcp.pop %v751
  %v755 = vmul.f32 1.0, %v754
  %v756 = vmul.f32 %v753, 2.0
  %v757 = vmul.f32 %v755, 2.0
  %v758 = vsub.f32 %v756, 1.0
  %v759 = vsub.f32 %v757, 1.0
  %v760 = vsel %vm42, %v758, %v753
  %v761 = vsel %vm43, %v759, %v755
  %763 = vrot.lane.b32.xlu0 %v761, 32
  %v764 = vpop.permute.xlu0 %763
  %v766 = vsel %vm330, %v760, %v764
  %768 = vrot.lane.b32.xlu0 %v760, 96
  %v769 = vpop.permute.xlu0 %768
  %v771 = vsel %vm330, %v769, %v761
  %772 = vrot.lane.b32.xlu0 %v760, 64
  %v773 = vpop.permute.xlu0 %772
  %775 = vrot.lane.b32.xlu0 %v761, 96
  %v776 = vpop.permute.xlu0 %775
  %v778 = vsel %vm330, %v773, %v776
  %779 = vrot.lane.b32.xlu0 %v760, 32
  %v780 = vpop.permute.xlu0 %779
  %782 = vrot.lane.b32.xlu0 %v761, 64
  %v783 = vpop.permute.xlu0 %782
  %v785 = vsel %vm330, %v780, %v783
  %v786 = vmul.f32 %v771, %v684
  %v787 = vmul.f32 %v766, %v778
  %v788 = vadd.f32 %v786, %v787
  %v789 = vtanh.pop %v788
  %v790 = vmul.f32 %v785, %v789
  %v791 = vpack.c.bf16 %v790, %v790
  %792 = vst.msk [vmem:[%s690] sm:$0xf] %vm357, %v791
  %793 = vst.msk [vmem:[%s688] sm:$0xf] %vm360, %v791
  %v794 = vld [vmem:[%s478] sm:$0xff]
  %v795 = vld [vmem:[%s474 + $0x8] sm:$0xff]
  %v797 = vsel %vm257, %v791, 0
  %799 = vmatprep.subr.bf16.mxu0 0
  %800 = vmatpush1.bf16.msra.mxu0 0
  %801 = vmatprep.subr.bf16.mxu0 0
  %802 = vmatpush1.bf16.msra.mxu0 0
  %803 = vmatprep.subr.bf16.mxu0 0
  %804 = vmatpush1.bf16.msra.mxu0 0
  %805 = vmatprep.subr.bf16.mxu0 0
  %806 = vmatpush1.bf16.msra.mxu0 0
  %807 = vmatprep.subr.bf16.mxu0 %v248
  %808 = vmatpush1.bf16.msra.mxu0 %v247
  %809 = vmatprep.subr.bf16.mxu0 %v246
  %810 = vmatpush1.bf16.msra.mxu0 %v245
  %811 = vmatprep.subr.bf16.mxu0 %v244
  %812 = vmatpush1.bf16.msra.mxu0 %v243
  %813 = vmatprep.subr.bf16.mxu0 %v242
  %814 = vmatpush1.bf16.msra.mxu0 %v241
  %815 = vmatprep.subr.bf16.mxu0 0
  %816 = vmatpush2.bf16.msra.mxu0 0
  %817 = vmatprep.subr.bf16.mxu0 0
  %818 = vmatpush2.bf16.msra.mxu0 0
  %819 = vmatprep.subr.bf16.mxu0 0
  %820 = vmatpush2.bf16.msra.mxu0 0
  %821 = vmatprep.subr.bf16.mxu0 0
  %822 = vmatpush2.bf16.msra.mxu0 0
  %823 = vmatprep.subr.bf16.mxu0 0
  %824 = vmatpush2.bf16.msra.mxu0 0
  %825 = vmatprep.subr.bf16.mxu0 0
  %826 = vmatpush2.bf16.msra.mxu0 0
  %827 = vmatprep.subr.bf16.mxu0 0
  %828 = vmatpush2.bf16.msra.mxu0 0
  %829 = vmatprep.subr.bf16.mxu0 0
  %830 = vmatpush2.bf16.msra.mxu0 0
  %831 = vmatprep.mubr.bf16.mxu0 0
  %832 = vmatmul.mubr.bf16.gmra.mxu0 %v797
  %v833 = vpop.f32.mrf.mxu0
  %v834 = vadd.f32 0.0, %v833
  %v835 = vpop.f32.mrf.mxu0
  %v836 = vadd.f32 0.0, %v835
  %v837 = vpop.f32.mrf.mxu0
  %v838 = vpop.f32.mrf.mxu0
  %839 = vdwg.mxu0
  %v840 = vadd.f32 %v794, %v834
  %v841 = vadd.f32 %v795, %v836
  %v842 = vmul.f32 %v840, 2.0
  %v843 = vmul.f32 %v841, 2.0
  %v844 = vsel %vm42, %v842, %v840
  %v845 = vsel %vm43, %v843, %v841
  %v846 = vxor.u32 %v844, 2147483648
  %v847 = vxor.u32 %v845, 2147483648
  %v848 = vmul.f32 %v846, 1.442695
  %v849 = vpow.pop %v848
  %v850 = vmul.f32 %v847, 1.442695
  %v851 = vpow.pop %v850
  %v852 = vadd.f32 %v849, 1.0
  %v853 = vadd.f32 %v851, 1.0
  %v854 = vrcp.pop %v852
  %v855 = vmul.f32 1.0, %v854
  %v856 = vrcp.pop %v853
  %v857 = vmul.f32 1.0, %v856
  %v858 = vmul.f32 %v855, 2.0
  %v859 = vmul.f32 %v857, 2.0
  %v860 = vsub.f32 %v858, 1.0
  %v861 = vsub.f32 %v859, 1.0
  %v862 = vsel %vm42, %v860, %v855
  %v863 = vsel %vm43, %v861, %v857
  %865 = vrot.lane.b32.xlu0 %v863, 32
  %v866 = vpop.permute.xlu0 %865
  %v868 = vsel %vm330, %v862, %v866
  %870 = vrot.lane.b32.xlu0 %v862, 96
  %v871 = vpop.permute.xlu0 %870
  %v873 = vsel %vm330, %v871, %v863
  %874 = vrot.lane.b32.xlu0 %v862, 64
  %v875 = vpop.permute.xlu0 %874
  %877 = vrot.lane.b32.xlu0 %v863, 96
  %v878 = vpop.permute.xlu0 %877
  %v880 = vsel %vm330, %v875, %v878
  %881 = vrot.lane.b32.xlu0 %v862, 32
  %v882 = vpop.permute.xlu0 %881
  %884 = vrot.lane.b32.xlu0 %v863, 64
  %v885 = vpop.permute.xlu0 %884
  %v887 = vsel %vm330, %v882, %v885
  %v888 = vmul.f32 %v873, %v788
  %v889 = vmul.f32 %v868, %v880
  %v890 = vadd.f32 %v888, %v889
  %v891 = vtanh.pop %v890
  %v892 = vmul.f32 %v887, %v891
  %v893 = vpack.c.bf16 %v892, %v892
  %894 = vst.msk [vmem:[%s580] sm:$0xf] %vm357, %v893
  %895 = vst.msk [vmem:[%s578] sm:$0xf] %vm360, %v893
  %v896 = vld [vmem:[%s368] sm:$0xff]
  %v897 = vld [vmem:[%s364 + $0x8] sm:$0xff]
  %v899 = vsel %vm257, %v893, 0
  %901 = vmatprep.subr.bf16.mxu0 0
  %902 = vmatpush1.bf16.msra.mxu0 0
  %903 = vmatprep.subr.bf16.mxu0 0
  %904 = vmatpush1.bf16.msra.mxu0 0
  %905 = vmatprep.subr.bf16.mxu0 0
  %906 = vmatpush1.bf16.msra.mxu0 0
  %907 = vmatprep.subr.bf16.mxu0 0
  %908 = vmatpush1.bf16.msra.mxu0 0
  %909 = vmatprep.subr.bf16.mxu0 %v248
  %910 = vmatpush1.bf16.msra.mxu0 %v247
  %911 = vmatprep.subr.bf16.mxu0 %v246
  %912 = vmatpush1.bf16.msra.mxu0 %v245
  %913 = vmatprep.subr.bf16.mxu0 %v244
  %914 = vmatpush1.bf16.msra.mxu0 %v243
  %915 = vmatprep.subr.bf16.mxu0 %v242
  %916 = vmatpush1.bf16.msra.mxu0 %v241
  %917 = vmatprep.subr.bf16.mxu0 0
  %918 = vmatpush2.bf16.msra.mxu0 0
  %919 = vmatprep.subr.bf16.mxu0 0
  %920 = vmatpush2.bf16.msra.mxu0 0
  %921 = vmatprep.subr.bf16.mxu0 0
  %922 = vmatpush2.bf16.msra.mxu0 0
  %923 = vmatprep.subr.bf16.mxu0 0
  %924 = vmatpush2.bf16.msra.mxu0 0
  %925 = vmatprep.subr.bf16.mxu0 0
  %926 = vmatpush2.bf16.msra.mxu0 0
  %927 = vmatprep.subr.bf16.mxu0 0
  %928 = vmatpush2.bf16.msra.mxu0 0
  %929 = vmatprep.subr.bf16.mxu0 0
  %930 = vmatpush2.bf16.msra.mxu0 0
  %931 = vmatprep.subr.bf16.mxu0 0
  %932 = vmatpush2.bf16.msra.mxu0 0
  %933 = vmatprep.mubr.bf16.mxu0 0
  %934 = vmatmul.mubr.bf16.gmra.mxu0 %v899
  %v935 = vpop.f32.mrf.mxu0
  %v936 = vadd.f32 0.0, %v935
  %v937 = vpop.f32.mrf.mxu0
  %v938 = vadd.f32 0.0, %v937
  %v939 = vpop.f32.mrf.mxu0
  %v940 = vpop.f32.mrf.mxu0
  %941 = vdwg.mxu0
  %v942 = vadd.f32 %v896, %v936
  %v943 = vadd.f32 %v897, %v938
  %v944 = vmul.f32 %v942, 2.0
  %v945 = vmul.f32 %v943, 2.0
  %v946 = vsel %vm42, %v944, %v942
  %v947 = vsel %vm43, %v945, %v943
  %v948 = vxor.u32 %v946, 2147483648
  %v949 = vxor.u32 %v947, 2147483648
  %v950 = vmul.f32 %v948, 1.442695
  %v951 = vpow.pop %v950
  %v952 = vmul.f32 %v949, 1.442695
  %v953 = vpow.pop %v952
  %v954 = vadd.f32 %v951, 1.0
  %v955 = vadd.f32 %v953, 1.0
  %v956 = vrcp.pop %v954
  %v957 = vmul.f32 1.0, %v956
  %v958 = vrcp.pop %v955
  %v959 = vmul.f32 1.0, %v958
  %v960 = vmul.f32 %v957, 2.0
  %v961 = vmul.f32 %v959, 2.0
  %v962 = vsub.f32 %v960, 1.0
  %v963 = vsub.f32 %v961, 1.0
  %v964 = vsel %vm42, %v962, %v957
  %v965 = vsel %vm43, %v963, %v959
  %967 = vrot.lane.b32.xlu0 %v965, 32
  %v968 = vpop.permute.xlu0 %967
  %v970 = vsel %vm330, %v964, %v968
  %972 = vrot.lane.b32.xlu0 %v964, 96
  %v973 = vpop.permute.xlu0 %972
  %v975 = vsel %vm330, %v973, %v965
  %976 = vrot.lane.b32.xlu0 %v964, 64
  %v977 = vpop.permute.xlu0 %976
  %979 = vrot.lane.b32.xlu0 %v965, 96
  %v980 = vpop.permute.xlu0 %979
  %v982 = vsel %vm330, %v977, %v980
  %983 = vrot.lane.b32.xlu0 %v964, 32
  %v984 = vpop.permute.xlu0 %983
  %986 = vrot.lane.b32.xlu0 %v965, 64
  %v987 = vpop.permute.xlu0 %986
  %v989 = vsel %vm330, %v984, %v987
  %v990 = vmul.f32 %v975, %v890
  %v991 = vmul.f32 %v970, %v982
  %v992 = vadd.f32 %v990, %v991
  %v993 = vtanh.pop %v992
  %v994 = vmul.f32 %v989, %v993
  %v995 = vpack.c.bf16 %v994, %v994
  %996 = vst.msk [vmem:[%s470] sm:$0xf] %vm357, %v995
  %997 = vst.msk [vmem:[%s468] sm:$0xf] %vm360, %v995
  %v998 = vld [vmem:[%s215] sm:$0xff]
  %v999 = vld [vmem:[%s211 + $0x8] sm:$0xff]
  %v1001 = vsel %vm257, %v995, 0
  %1003 = vmatprep.subr.bf16.mxu0 0
  %1004 = vmatpush1.bf16.msra.mxu0 0
  %1005 = vmatprep.subr.bf16.mxu0 0
  %1006 = vmatpush1.bf16.msra.mxu0 0
  %1007 = vmatprep.subr.bf16.mxu0 0
  %1008 = vmatpush1.bf16.msra.mxu0 0
  %1009 = vmatprep.subr.bf16.mxu0 0
  %1010 = vmatpush1.bf16.msra.mxu0 0
  %1011 = vmatprep.subr.bf16.mxu0 %v248
  %1012 = vmatpush1.bf16.msra.mxu0 %v247
  %1013 = vmatprep.subr.bf16.mxu0 %v246
  %1014 = vmatpush1.bf16.msra.mxu0 %v245
  %1015 = vmatprep.subr.bf16.mxu0 %v244
  %1016 = vmatpush1.bf16.msra.mxu0 %v243
  %1017 = vmatprep.subr.bf16.mxu0 %v242
  %1018 = vmatpush1.bf16.msra.mxu0 %v241
  %1019 = vmatprep.subr.bf16.mxu0 0
  %1020 = vmatpush2.bf16.msra.mxu0 0
  %1021 = vmatprep.subr.bf16.mxu0 0
  %1022 = vmatpush2.bf16.msra.mxu0 0
  %1023 = vmatprep.subr.bf16.mxu0 0
  %1024 = vmatpush2.bf16.msra.mxu0 0
  %1025 = vmatprep.subr.bf16.mxu0 0
  %1026 = vmatpush2.bf16.msra.mxu0 0
  %1027 = vmatprep.subr.bf16.mxu0 0
  %1028 = vmatpush2.bf16.msra.mxu0 0
  %1029 = vmatprep.subr.bf16.mxu0 0
  %1030 = vmatpush2.bf16.msra.mxu0 0
  %1031 = vmatprep.subr.bf16.mxu0 0
  %1032 = vmatpush2.bf16.msra.mxu0 0
  %1033 = vmatprep.subr.bf16.mxu0 0
  %1034 = vmatpush2.bf16.msra.mxu0 0
  %1035 = vmatprep.mubr.bf16.mxu0 0
  %1036 = vmatmul.mubr.bf16.gmra.mxu0 %v1001
  %v1037 = vpop.f32.mrf.mxu0
  %v1038 = vadd.f32 0.0, %v1037
  %v1039 = vpop.f32.mrf.mxu0
  %v1040 = vadd.f32 0.0, %v1039
  %v1041 = vpop.f32.mrf.mxu0
  %v1042 = vpop.f32.mrf.mxu0
  %1043 = vdwg.mxu0
  %v1044 = vadd.f32 %v998, %v1038
  %v1045 = vadd.f32 %v999, %v1040
  %v1046 = vmul.f32 %v1044, 2.0
  %v1047 = vmul.f32 %v1045, 2.0
  %v1048 = vsel %vm42, %v1046, %v1044
  %v1049 = vsel %vm43, %v1047, %v1045
  %v1050 = vxor.u32 %v1048, 2147483648
  %v1051 = vxor.u32 %v1049, 2147483648
  %v1052 = vmul.f32 %v1050, 1.442695
  %v1053 = vpow.pop %v1052
  %v1054 = vmul.f32 %v1051, 1.442695
  %v1055 = vpow.pop %v1054
  %v1056 = vadd.f32 %v1053, 1.0
  %v1057 = vadd.f32 %v1055, 1.0
  %v1058 = vrcp.pop %v1056
  %v1059 = vmul.f32 1.0, %v1058
  %v1060 = vrcp.pop %v1057
  %v1061 = vmul.f32 1.0, %v1060
  %v1062 = vmul.f32 %v1059, 2.0
  %v1063 = vmul.f32 %v1061, 2.0
  %v1064 = vsub.f32 %v1062, 1.0
  %v1065 = vsub.f32 %v1063, 1.0
  %v1066 = vsel %vm42, %v1064, %v1059
  %v1067 = vsel %vm43, %v1065, %v1061
  %1069 = vrot.lane.b32.xlu0 %v1067, 32
  %v1070 = vpop.permute.xlu0 %1069
  %v1072 = vsel %vm330, %v1066, %v1070
  %1074 = vrot.lane.b32.xlu0 %v1066, 96
  %v1075 = vpop.permute.xlu0 %1074
  %v1077 = vsel %vm330, %v1075, %v1067
  %1078 = vrot.lane.b32.xlu0 %v1066, 64
  %v1079 = vpop.permute.xlu0 %1078
  %1081 = vrot.lane.b32.xlu0 %v1067, 96
  %v1082 = vpop.permute.xlu0 %1081
  %v1084 = vsel %vm330, %v1079, %v1082
  %1085 = vrot.lane.b32.xlu0 %v1066, 32
  %v1086 = vpop.permute.xlu0 %1085
  %1088 = vrot.lane.b32.xlu0 %v1067, 64
  %v1089 = vpop.permute.xlu0 %1088
  %v1091 = vsel %vm330, %v1086, %v1089
  %v1092 = vmul.f32 %v1077, %v992
  %v1093 = vmul.f32 %v1072, %v1084
  %v1094 = vadd.f32 %v1092, %v1093
  %v1095 = vtanh.pop %v1094
  %v1096 = vmul.f32 %v1091, %v1095
  %v1097 = vpack.c.bf16 %v1096, %v1096
  %1098 = vst.msk [vmem:[%s359] sm:$0xf] %vm357, %v1097
  %1099 = vst.msk [vmem:[#allocation2] sm:$0xf] %vm360, %v1097
  %v1100 = vld [vmem:[#allocation2] sm:$0xf]
  %v1101 = vld [vmem:[#allocation2 + $0x4] sm:$0xf]
  %v1102 = vld [vmem:[#allocation2 + $0x8] sm:$0xf]
  %v1103 = vld [vmem:[#allocation2 + $0xc] sm:$0xf]
  %v1104 = vld [vmem:[#allocation2 + $0x10] sm:$0xf]
  %v1105 = vld [vmem:[#allocation2 + $0x14] sm:$0xf]
  %v1106 = vld [vmem:[#allocation2 + $0x18] sm:$0xf]
  %v1107 = vld [vmem:[#allocation2 + $0x1c] sm:$0xf]
  %v1108 = vld [vmem:[%s2] sm:$0xff]
  %v1109 = vld [vmem:[%s2 + $0x8] sm:$0xff]
  %v1110 = vld [vmem:[%s2 + $0x10] sm:$0xff]
  %v1111 = vld [vmem:[%s2 + $0x18] sm:$0xff]
  %v1112 = vld [vmem:[%s2 + $0x20] sm:$0xff]
  %v1113 = vld [vmem:[%s2 + $0x28] sm:$0xff]
  %v1114 = vld [vmem:[%s2 + $0x30] sm:$0xff]
  %v1115 = vld [vmem:[%s2 + $0x38] sm:$0xff]
  %s1116 = scalar_lea.vmem %s3, 64
  %v1117 = vld [vmem:[%s1116] sm:$0xff]
  %v1118 = vld [vmem:[%s1116 + $0x8] sm:$0xff]
  %v1119 = vld [vmem:[%s1116 + $0x10] sm:$0xff]
  %v1120 = vld [vmem:[%s1116 + $0x18] sm:$0xff]
  %v1121 = vld [vmem:[%s1116 + $0x20] sm:$0xff]
  %v1122 = vld [vmem:[%s1116 + $0x28] sm:$0xff]
  %v1123 = vld [vmem:[%s1116 + $0x30] sm:$0xff]
  %v1124 = vld [vmem:[%s1116 + $0x38] sm:$0xff]
  %s1125 = scalar_lea.vmem %s4, 2
  %v1126 = vld [vmem:[%s1125] sm:$0x3]
  %s1127 = scalar_lea.vmem %s5, 8
  %v1128 = vld [vmem:[%s1127] sm:$0xff]
  %s1129 = scalar_lea.vmem %s6, 8
  %v1130 = vld [vmem:[%s1129] sm:$0xff]
  %v1132 = vlaneseq
  %v1133 = vshrl.u32 %v1132, 7
  %v1134 = vsub.s32 0, %v1133
  %v1135 = vrot.slane %v1126, %v1134
  %v1136 = vlaneseq
  %v1137 = vshrl.u32 %v1136, 7
  %v1138 = vsub.s32 1, %v1137
  %v1139 = vrot.slane %v1126, %v1138
  %v1150 = vunpack.c.l.b16 %v1100
  %v1151 = vunpack.c.l.b16 %v1101
  %v1152 = vunpack.c.l.b16 %v1102
  %v1153 = vunpack.c.l.b16 %v1103
  %v1154 = vunpack.c.l.b16 %v1104
  %v1155 = vunpack.c.l.b16 %v1105
  %v1156 = vunpack.c.l.b16 %v1106
  %v1157 = vunpack.c.l.b16 %v1107
  %v1158 = vpack.c.b16 %v1151, %v1150
  %v1159 = vpack.c.b16 %v1153, %v1152
  %v1160 = vpack.c.b16 %v1155, %v1154
  %v1161 = vpack.c.b16 %v1157, %v1156
  %v1170 = vunpack.c.l.b16 %v1108
  %v1171 = vunpack.c.h.b16 %v1108
  %v1172 = vunpack.c.l.b16 %v1109
  %v1173 = vunpack.c.h.b16 %v1109
  %v1174 = vunpack.c.l.b16 %v1110
  %v1175 = vunpack.c.h.b16 %v1110
  %v1176 = vunpack.c.l.b16 %v1111
  %v1177 = vunpack.c.h.b16 %v1111
  %v1178 = vunpack.c.l.b16 %v1112
  %v1179 = vunpack.c.h.b16 %v1112
  %v1180 = vunpack.c.l.b16 %v1113
  %v1181 = vunpack.c.h.b16 %v1113
  %v1182 = vunpack.c.l.b16 %v1114
  %v1183 = vunpack.c.h.b16 %v1114
  %v1184 = vunpack.c.l.b16 %v1115
  %v1185 = vunpack.c.h.b16 %v1115
  %v1186 = vpack.c.b16 %v1172, %v1170
  %v1187 = vpack.c.b16 %v1173, %v1171
  %v1188 = vpack.c.b16 %v1176, %v1174
  %v1189 = vpack.c.b16 %v1177, %v1175
  %v1190 = vpack.c.b16 %v1180, %v1178
  %v1191 = vpack.c.b16 %v1181, %v1179
  %v1192 = vpack.c.b16 %v1184, %v1182
  %v1193 = vpack.c.b16 %v1185, %v1183
  %v1203 = vsel %vm257, %v1158, 0
  %v1206 = vsel %vm257, %v1159, 0
  %v1209 = vsel %vm257, %v1160, 0
  %v1212 = vsel %vm257, %v1161, 0
  %1214 = vmatprep.subr.bf16.mxu0 0
  %1215 = vmatpush1.bf16.msra.mxu0 0
  %1216 = vmatprep.subr.bf16.mxu0 0
  %1217 = vmatpush1.bf16.msra.mxu0 0
  %1218 = vmatprep.subr.bf16.mxu0 0
  %1219 = vmatpush1.bf16.msra.mxu0 0
  %1220 = vmatprep.subr.bf16.mxu0 0
  %1221 = vmatpush1.bf16.msra.mxu0 0
  %1222 = vmatprep.subr.bf16.mxu0 %v1193
  %1223 = vmatpush1.bf16.msra.mxu0 %v1192
  %1224 = vmatprep.subr.bf16.mxu0 %v1191
  %1225 = vmatpush1.bf16.msra.mxu0 %v1190
  %1226 = vmatprep.subr.bf16.mxu0 %v1189
  %1227 = vmatpush1.bf16.msra.mxu0 %v1188
  %1228 = vmatprep.subr.bf16.mxu0 %v1187
  %1229 = vmatpush1.bf16.msra.mxu0 %v1186
  %1230 = vmatprep.subr.bf16.mxu0 0
  %1231 = vmatpush2.bf16.msra.mxu0 0
  %1232 = vmatprep.subr.bf16.mxu0 0
  %1233 = vmatpush2.bf16.msra.mxu0 0
  %1234 = vmatprep.subr.bf16.mxu0 0
  %1235 = vmatpush2.bf16.msra.mxu0 0
  %1236 = vmatprep.subr.bf16.mxu0 0
  %1237 = vmatpush2.bf16.msra.mxu0 0
  %1238 = vmatprep.subr.bf16.mxu0 0
  %1239 = vmatpush2.bf16.msra.mxu0 0
  %1240 = vmatprep.subr.bf16.mxu0 0
  %1241 = vmatpush2.bf16.msra.mxu0 0
  %1242 = vmatprep.subr.bf16.mxu0 0
  %1243 = vmatpush2.bf16.msra.mxu0 0
  %1244 = vmatprep.subr.bf16.mxu0 0
  %1245 = vmatpush2.bf16.msra.mxu0 0
  %1246 = vmatprep.mubr.bf16.mxu0 0
  %1247 = vmatmul.mubr.bf16.gmra.mxu0 %v1203
  %v1248 = vpop.f32.mrf.mxu0
  %v1249 = vadd.f32 %v1135, %v1248
  %v1250 = vpop.f32.mrf.mxu0
  %v1251 = vadd.f32 %v1139, %v1250
  %v1252 = vpop.f32.mrf.mxu0
  %v1253 = vadd.f32 %v1135, %v1252
  %v1254 = vpop.f32.mrf.mxu0
  %v1255 = vadd.f32 %v1139, %v1254
  %1256 = vmatprep.mubr.bf16.mxu0 0
  %1257 = vmatmul.mubr.bf16.gmra.mxu0 %v1206
  %v1258 = vpop.f32.mrf.mxu0
  %v1259 = vadd.f32 %v1135, %v1258
  %v1260 = vpop.f32.mrf.mxu0
  %v1261 = vadd.f32 %v1139, %v1260
  %v1262 = vpop.f32.mrf.mxu0
  %v1263 = vadd.f32 %v1135, %v1262
  %v1264 = vpop.f32.mrf.mxu0
  %v1265 = vadd.f32 %v1139, %v1264
  %1266 = vmatprep.mubr.bf16.mxu0 0
  %1267 = vmatmul.mubr.bf16.gmra.mxu0 %v1209
  %v1268 = vpop.f32.mrf.mxu0
  %v1269 = vadd.f32 %v1135, %v1268
  %v1270 = vpop.f32.mrf.mxu0
  %v1271 = vadd.f32 %v1139, %v1270
  %v1272 = vpop.f32.mrf.mxu0
  %v1273 = vadd.f32 %v1135, %v1272
  %v1274 = vpop.f32.mrf.mxu0
  %v1275 = vadd.f32 %v1139, %v1274
  %1276 = vmatprep.mubr.bf16.mxu0 0
  %1277 = vmatmul.mubr.bf16.gmra.mxu0 %v1212
  %v1278 = vpop.f32.mrf.mxu0
  %v1279 = vadd.f32 %v1135, %v1278
  %v1280 = vpop.f32.mrf.mxu0
  %v1281 = vadd.f32 %v1139, %v1280
  %v1282 = vpop.f32.mrf.mxu0
  %v1283 = vadd.f32 %v1135, %v1282
  %v1284 = vpop.f32.mrf.mxu0
  %v1285 = vadd.f32 %v1139, %v1284
  %1286 = vdwg.mxu0
  %1287 = vst [vmem:[#allocation4] sm:$0xff] %v1249
  %1288 = vst [vmem:[#allocation4 + $0x8] sm:$0xff] %v1251
  %1289 = vst [vmem:[#allocation4 + $0x10] sm:$0xff] %v1253
  %1290 = vst [vmem:[#allocation4 + $0x18] sm:$0xff] %v1255
  %1291 = vst [vmem:[#allocation4 + $0x20] sm:$0xff] %v1259
  %1292 = vst [vmem:[#allocation4 + $0x28] sm:$0xff] %v1261
  %1293 = vst [vmem:[#allocation4 + $0x30] sm:$0xff] %v1263
  %1294 = vst [vmem:[#allocation4 + $0x38] sm:$0xff] %v1265
  %1295 = vst [vmem:[#allocation4 + $0x40] sm:$0xff] %v1269
  %1296 = vst [vmem:[#allocation4 + $0x48] sm:$0xff] %v1271
  %1297 = vst [vmem:[#allocation4 + $0x50] sm:$0xff] %v1273
  %1298 = vst [vmem:[#allocation4 + $0x58] sm:$0xff] %v1275
  %1299 = vst [vmem:[#allocation4 + $0x60] sm:$0xff] %v1279
  %1300 = vst [vmem:[#allocation4 + $0x68] sm:$0xff] %v1281
  %1301 = vst [vmem:[#allocation4 + $0x70] sm:$0xff] %v1283
  %1302 = vst [vmem:[#allocation4 + $0x78] sm:$0xff] %v1285
  %v1303 = vpack.c.bf16 %v1128, %v1128
  %v1304 = vld [vmem:[%s211] sm:$0xff]
  %v1305 = vld [vmem:[%s215 + $0x8] sm:$0xff]
  %v1314 = vunpack.c.l.b16 %v1117
  %v1315 = vunpack.c.h.b16 %v1117
  %v1316 = vunpack.c.l.b16 %v1118
  %v1317 = vunpack.c.h.b16 %v1118
  %v1318 = vunpack.c.l.b16 %v1119
  %v1319 = vunpack.c.h.b16 %v1119
  %v1320 = vunpack.c.l.b16 %v1120
  %v1321 = vunpack.c.h.b16 %v1120
  %v1322 = vunpack.c.l.b16 %v1121
  %v1323 = vunpack.c.h.b16 %v1121
  %v1324 = vunpack.c.l.b16 %v1122
  %v1325 = vunpack.c.h.b16 %v1122
  %v1326 = vunpack.c.l.b16 %v1123
  %v1327 = vunpack.c.h.b16 %v1123
  %v1328 = vunpack.c.l.b16 %v1124
  %v1329 = vunpack.c.h.b16 %v1124
  %v1330 = vpack.c.b16 %v1316, %v1314
  %v1331 = vpack.c.b16 %v1317, %v1315
  %v1332 = vpack.c.b16 %v1320, %v1318
  %v1333 = vpack.c.b16 %v1321, %v1319
  %v1334 = vpack.c.b16 %v1324, %v1322
  %v1335 = vpack.c.b16 %v1325, %v1323
  %v1336 = vpack.c.b16 %v1328, %v1326
  %v1337 = vpack.c.b16 %v1329, %v1327
  %v1347 = vsel %vm257, %v1303, 0
  %1349 = vmatprep.subr.bf16.mxu0 0
  %1350 = vmatpush1.bf16.msra.mxu0 0
  %1351 = vmatprep.subr.bf16.mxu0 0
  %1352 = vmatpush1.bf16.msra.mxu0 0
  %1353 = vmatprep.subr.bf16.mxu0 0
  %1354 = vmatpush1.bf16.msra.mxu0 0
  %1355 = vmatprep.subr.bf16.mxu0 0
  %1356 = vmatpush1.bf16.msra.mxu0 0
  %1357 = vmatprep.subr.bf16.mxu0 %v1337
  %1358 = vmatpush1.bf16.msra.mxu0 %v1336
  %1359 = vmatprep.subr.bf16.mxu0 %v1335
  %1360 = vmatpush1.bf16.msra.mxu0 %v1334
  %1361 = vmatprep.subr.bf16.mxu0 %v1333
  %1362 = vmatpush1.bf16.msra.mxu0 %v1332
  %1363 = vmatprep.subr.bf16.mxu0 %v1331
  %1364 = vmatpush1.bf16.msra.mxu0 %v1330
  %1365 = vmatprep.subr.bf16.mxu0 0
  %1366 = vmatpush2.bf16.msra.mxu0 0
  %1367 = vmatprep.subr.bf16.mxu0 0
  %1368 = vmatpush2.bf16.msra.mxu0 0
  %1369 = vmatprep.subr.bf16.mxu0 0
  %1370 = vmatpush2.bf16.msra.mxu0 0
  %1371 = vmatprep.subr.bf16.mxu0 0
  %1372 = vmatpush2.bf16.msra.mxu0 0
  %1373 = vmatprep.subr.bf16.mxu0 0
  %1374 = vmatpush2.bf16.msra.mxu0 0
  %1375 = vmatprep.subr.bf16.mxu0 0
  %1376 = vmatpush2.bf16.msra.mxu0 0
  %1377 = vmatprep.subr.bf16.mxu0 0
  %1378 = vmatpush2.bf16.msra.mxu0 0
  %1379 = vmatprep.subr.bf16.mxu0 0
  %1380 = vmatpush2.bf16.msra.mxu0 0
  %1381 = vmatprep.mubr.bf16.mxu0 0
  %1382 = vmatmul.mubr.bf16.gmra.mxu0 %v1347
  %v1383 = vpop.f32.mrf.mxu0
  %v1384 = vadd.f32 0.0, %v1383
  %v1385 = vpop.f32.mrf.mxu0
  %v1386 = vadd.f32 0.0, %v1385
  %v1387 = vpop.f32.mrf.mxu0
  %v1388 = vpop.f32.mrf.mxu0
  %1389 = vdwg.mxu0
  %v1390 = vadd.f32 %v1304, %v1384
  %v1391 = vadd.f32 %v1305, %v1386
  %v1392 = vmul.f32 %v1390, 2.0
  %v1393 = vmul.f32 %v1391, 2.0
  %v1394 = vsel %vm42, %v1392, %v1390
  %v1395 = vsel %vm43, %v1393, %v1391
  %v1396 = vxor.u32 %v1394, 2147483648
  %v1397 = vxor.u32 %v1395, 2147483648
  %v1398 = vmul.f32 %v1396, 1.442695
  %v1399 = vpow.pop %v1398
  %v1400 = vmul.f32 %v1397, 1.442695
  %v1401 = vpow.pop %v1400
  %v1402 = vadd.f32 %v1399, 1.0
  %v1403 = vadd.f32 %v1401, 1.0
  %v1404 = vrcp.pop %v1402
  %v1405 = vmul.f32 1.0, %v1404
  %v1406 = vrcp.pop %v1403
  %v1407 = vmul.f32 1.0, %v1406
  %v1408 = vmul.f32 %v1405, 2.0
  %v1409 = vmul.f32 %v1407, 2.0
  %v1410 = vsub.f32 %v1408, 1.0
  %v1411 = vsub.f32 %v1409, 1.0
  %v1412 = vsel %vm42, %v1410, %v1405
  %v1413 = vsel %vm43, %v1411, %v1407
  %1415 = vrot.lane.b32.xlu0 %v1413, 32
  %v1416 = vpop.permute.xlu0 %1415
  %v1418 = vsel %vm330, %v1412, %v1416
  %1420 = vrot.lane.b32.xlu0 %v1412, 96
  %v1421 = vpop.permute.xlu0 %1420
  %v1423 = vsel %vm330, %v1421, %v1413
  %1424 = vrot.lane.b32.xlu0 %v1412, 64
  %v1425 = vpop.permute.xlu0 %1424
  %1427 = vrot.lane.b32.xlu0 %v1413, 96
  %v1428 = vpop.permute.xlu0 %1427
  %v1430 = vsel %vm330, %v1425, %v1428
  %1431 = vrot.lane.b32.xlu0 %v1412, 32
  %v1432 = vpop.permute.xlu0 %1431
  %1434 = vrot.lane.b32.xlu0 %v1413, 64
  %v1435 = vpop.permute.xlu0 %1434
  %v1437 = vsel %vm330, %v1432, %v1435
  %v1438 = vmul.f32 %v1423, %v1130
  %v1439 = vmul.f32 %v1418, %v1430
  %v1440 = vadd.f32 %v1438, %v1439
  %v1441 = vtanh.pop %v1440
  %v1442 = vmul.f32 %v1437, %v1441
  %1443 = vst.msk [vmem:[%s7] sm:$0xff] %vm330, %v1442
  %s1444 = scalar_lea.vmem %s7, 56
  %vm1445 = vcmask 523520
  %1446 = vst.msk [vmem:[%s1444] sm:$0xff] %vm1445, %v1442
  %v1447 = vpack.c.bf16 %v1442, %v1442
  %v1448 = vld [vmem:[%s364] sm:$0xff]
  %v1449 = vld [vmem:[%s368 + $0x8] sm:$0xff]
  %v1451 = vsel %vm257, %v1447, 0
  %1453 = vmatprep.subr.bf16.mxu0 0
  %1454 = vmatpush1.bf16.msra.mxu0 0
  %1455 = vmatprep.subr.bf16.mxu0 0
  %1456 = vmatpush1.bf16.msra.mxu0 0
  %1457 = vmatprep.subr.bf16.mxu0 0
  %1458 = vmatpush1.bf16.msra.mxu0 0
  %1459 = vmatprep.subr.bf16.mxu0 0
  %1460 = vmatpush1.bf16.msra.mxu0 0
  %1461 = vmatprep.subr.bf16.mxu0 %v1337
  %1462 = vmatpush1.bf16.msra.mxu0 %v1336
  %1463 = vmatprep.subr.bf16.mxu0 %v1335
  %1464 = vmatpush1.bf16.msra.mxu0 %v1334
  %1465 = vmatprep.subr.bf16.mxu0 %v1333
  %1466 = vmatpush1.bf16.msra.mxu0 %v1332
  %1467 = vmatprep.subr.bf16.mxu0 %v1331
  %1468 = vmatpush1.bf16.msra.mxu0 %v1330
  %1469 = vmatprep.subr.bf16.mxu0 0
  %1470 = vmatpush2.bf16.msra.mxu0 0
  %1471 = vmatprep.subr.bf16.mxu0 0
  %1472 = vmatpush2.bf16.msra.mxu0 0
  %1473 = vmatprep.subr.bf16.mxu0 0
  %1474 = vmatpush2.bf16.msra.mxu0 0
  %1475 = vmatprep.subr.bf16.mxu0 0
  %1476 = vmatpush2.bf16.msra.mxu0 0
  %1477 = vmatprep.subr.bf16.mxu0 0
  %1478 = vmatpush2.bf16.msra.mxu0 0
  %1479 = vmatprep.subr.bf16.mxu0 0
  %1480 = vmatpush2.bf16.msra.mxu0 0
  %1481 = vmatprep.subr.bf16.mxu0 0
  %1482 = vmatpush2.bf16.msra.mxu0 0
  %1483 = vmatprep.subr.bf16.mxu0 0
  %1484 = vmatpush2.bf16.msra.mxu0 0
  %1485 = vmatprep.mubr.bf16.mxu0 0
  %1486 = vmatmul.mubr.bf16.gmra.mxu0 %v1451
  %v1487 = vpop.f32.mrf.mxu0
  %v1488 = vadd.f32 0.0, %v1487
  %v1489 = vpop.f32.mrf.mxu0
  %v1490 = vadd.f32 0.0, %v1489
  %v1491 = vpop.f32.mrf.mxu0
  %v1492 = vpop.f32.mrf.mxu0
  %1493 = vdwg.mxu0
  %v1494 = vadd.f32 %v1448, %v1488
  %v1495 = vadd.f32 %v1449, %v1490
  %v1496 = vmul.f32 %v1494, 2.0
  %v1497 = vmul.f32 %v1495, 2.0
  %v1498 = vsel %vm42, %v1496, %v1494
  %v1499 = vsel %vm43, %v1497, %v1495
  %v1500 = vxor.u32 %v1498, 2147483648
  %v1501 = vxor.u32 %v1499, 2147483648
  %v1502 = vmul.f32 %v1500, 1.442695
  %v1503 = vpow.pop %v1502
  %v1504 = vmul.f32 %v1501, 1.442695
  %v1505 = vpow.pop %v1504
  %v1506 = vadd.f32 %v1503, 1.0
  %v1507 = vadd.f32 %v1505, 1.0
  %v1508 = vrcp.pop %v1506
  %v1509 = vmul.f32 1.0, %v1508
  %v1510 = vrcp.pop %v1507
  %v1511 = vmul.f32 1.0, %v1510
  %v1512 = vmul.f32 %v1509, 2.0
  %v1513 = vmul.f32 %v1511, 2.0
  %v1514 = vsub.f32 %v1512, 1.0
  %v1515 = vsub.f32 %v1513, 1.0
  %v1516 = vsel %vm42, %v1514, %v1509
  %v1517 = vsel %vm43, %v1515, %v1511
  %1519 = vrot.lane.b32.xlu0 %v1517, 32
  %v1520 = vpop.permute.xlu0 %1519
  %v1522 = vsel %vm330, %v1516, %v1520
  %1524 = vrot.lane.b32.xlu0 %v1516, 96
  %v1525 = vpop.permute.xlu0 %1524
  %v1527 = vsel %vm330, %v1525, %v1517
  %1528 = vrot.lane.b32.xlu0 %v1516, 64
  %v1529 = vpop.permute.xlu0 %1528
  %1531 = vrot.lane.b32.xlu0 %v1517, 96
  %v1532 = vpop.permute.xlu0 %1531
  %v1534 = vsel %vm330, %v1529, %v1532
  %1535 = vrot.lane.b32.xlu0 %v1516, 32
  %v1536 = vpop.permute.xlu0 %1535
  %1538 = vrot.lane.b32.xlu0 %v1517, 64
  %v1539 = vpop.permute.xlu0 %1538
  %v1541 = vsel %vm330, %v1536, %v1539
  %v1542 = vmul.f32 %v1527, %v1440
  %v1543 = vmul.f32 %v1522, %v1534
  %v1544 = vadd.f32 %v1542, %v1543
  %v1545 = vtanh.pop %v1544
  %v1546 = vmul.f32 %v1541, %v1545
  %s1547 = scalar_lea.vmem %s7, 8
  %1548 = vst.msk [vmem:[%s1547] sm:$0xff] %vm330, %v1546
  %s1549 = scalar_lea.vmem %s7, 48
  %1550 = vst.msk [vmem:[%s1549] sm:$0xff] %vm1445, %v1546
  %v1551 = vpack.c.bf16 %v1546, %v1546
  %v1552 = vld [vmem:[%s474] sm:$0xff]
  %v1553 = vld [vmem:[%s478 + $0x8] sm:$0xff]
  %v1555 = vsel %vm257, %v1551, 0
  %1557 = vmatprep.subr.bf16.mxu0 0
  %1558 = vmatpush1.bf16.msra.mxu0 0
  %1559 = vmatprep.subr.bf16.mxu0 0
  %1560 = vmatpush1.bf16.msra.mxu0 0
  %1561 = vmatprep.subr.bf16.mxu0 0
  %1562 = vmatpush1.bf16.msra.mxu0 0
  %1563 = vmatprep.subr.bf16.mxu0 0
  %1564 = vmatpush1.bf16.msra.mxu0 0
  %1565 = vmatprep.subr.bf16.mxu0 %v1337
  %1566 = vmatpush1.bf16.msra.mxu0 %v1336
  %1567 = vmatprep.subr.bf16.mxu0 %v1335
  %1568 = vmatpush1.bf16.msra.mxu0 %v1334
  %1569 = vmatprep.subr.bf16.mxu0 %v1333
  %1570 = vmatpush1.bf16.msra.mxu0 %v1332
  %1571 = vmatprep.subr.bf16.mxu0 %v1331
  %1572 = vmatpush1.bf16.msra.mxu0 %v1330
  %1573 = vmatprep.subr.bf16.mxu0 0
  %1574 = vmatpush2.bf16.msra.mxu0 0
  %1575 = vmatprep.subr.bf16.mxu0 0
  %1576 = vmatpush2.bf16.msra.mxu0 0
  %1577 = vmatprep.subr.bf16.mxu0 0
  %1578 = vmatpush2.bf16.msra.mxu0 0
  %1579 = vmatprep.subr.bf16.mxu0 0
  %1580 = vmatpush2.bf16.msra.mxu0 0
  %1581 = vmatprep.subr.bf16.mxu0 0
  %1582 = vmatpush2.bf16.msra.mxu0 0
  %1583 = vmatprep.subr.bf16.mxu0 0
  %1584 = vmatpush2.bf16.msra.mxu0 0
  %1585 = vmatprep.subr.bf16.mxu0 0
  %1586 = vmatpush2.bf16.msra.mxu0 0
  %1587 = vmatprep.subr.bf16.mxu0 0
  %1588 = vmatpush2.bf16.msra.mxu0 0
  %1589 = vmatprep.mubr.bf16.mxu0 0
  %1590 = vmatmul.mubr.bf16.gmra.mxu0 %v1555
  %v1591 = vpop.f32.mrf.mxu0
  %v1592 = vadd.f32 0.0, %v1591
  %v1593 = vpop.f32.mrf.mxu0
  %v1594 = vadd.f32 0.0, %v1593
  %v1595 = vpop.f32.mrf.mxu0
  %v1596 = vpop.f32.mrf.mxu0
  %1597 = vdwg.mxu0
  %v1598 = vadd.f32 %v1552, %v1592
  %v1599 = vadd.f32 %v1553, %v1594
  %v1600 = vmul.f32 %v1598, 2.0
  %v1601 = vmul.f32 %v1599, 2.0
  %v1602 = vsel %vm42, %v1600, %v1598
  %v1603 = vsel %vm43, %v1601, %v1599
  %v1604 = vxor.u32 %v1602, 2147483648
  %v1605 = vxor.u32 %v1603, 2147483648
  %v1606 = vmul.f32 %v1604, 1.442695
  %v1607 = vpow.pop %v1606
  %v1608 = vmul.f32 %v1605, 1.442695
  %v1609 = vpow.pop %v1608
  %v1610 = vadd.f32 %v1607, 1.0
  %v1611 = vadd.f32 %v1609, 1.0
  %v1612 = vrcp.pop %v1610
  %v1613 = vmul.f32 1.0, %v1612
  %v1614 = vrcp.pop %v1611
  %v1615 = vmul.f32 1.0, %v1614
  %v1616 = vmul.f32 %v1613, 2.0
  %v1617 = vmul.f32 %v1615, 2.0
  %v1618 = vsub.f32 %v1616, 1.0
  %v1619 = vsub.f32 %v1617, 1.0
  %v1620 = vsel %vm42, %v1618, %v1613
  %v1621 = vsel %vm43, %v1619, %v1615
  %1623 = vrot.lane.b32.xlu0 %v1621, 32
  %v1624 = vpop.permute.xlu0 %1623
  %v1626 = vsel %vm330, %v1620, %v1624
  %1628 = vrot.lane.b32.xlu0 %v1620, 96
  %v1629 = vpop.permute.xlu0 %1628
  %v1631 = vsel %vm330, %v1629, %v1621
  %1632 = vrot.lane.b32.xlu0 %v1620, 64
  %v1633 = vpop.permute.xlu0 %1632
  %1635 = vrot.lane.b32.xlu0 %v1621, 96
  %v1636 = vpop.permute.xlu0 %1635
  %v1638 = vsel %vm330, %v1633, %v1636
  %1639 = vrot.lane.b32.xlu0 %v1620, 32
  %v1640 = vpop.permute.xlu0 %1639
  %1642 = vrot.lane.b32.xlu0 %v1621, 64
  %v1643 = vpop.permute.xlu0 %1642
  %v1645 = vsel %vm330, %v1640, %v1643
  %v1646 = vmul.f32 %v1631, %v1544
  %v1647 = vmul.f32 %v1626, %v1638
  %v1648 = vadd.f32 %v1646, %v1647
  %v1649 = vtanh.pop %v1648
  %v1650 = vmul.f32 %v1645, %v1649
  %s1651 = scalar_lea.vmem %s7, 16
  %1652 = vst.msk [vmem:[%s1651] sm:$0xff] %vm330, %v1650
  %s1653 = scalar_lea.vmem %s7, 40
  %1654 = vst.msk [vmem:[%s1653] sm:$0xff] %vm1445, %v1650
  %v1655 = vpack.c.bf16 %v1650, %v1650
  %v1656 = vld [vmem:[%s584] sm:$0xff]
  %v1657 = vld [vmem:[%s588 + $0x8] sm:$0xff]
  %v1659 = vsel %vm257, %v1655, 0
  %1661 = vmatprep.subr.bf16.mxu0 0
  %1662 = vmatpush1.bf16.msra.mxu0 0
  %1663 = vmatprep.subr.bf16.mxu0 0
  %1664 = vmatpush1.bf16.msra.mxu0 0
  %1665 = vmatprep.subr.bf16.mxu0 0
  %1666 = vmatpush1.bf16.msra.mxu0 0
  %1667 = vmatprep.subr.bf16.mxu0 0
  %1668 = vmatpush1.bf16.msra.mxu0 0
  %1669 = vmatprep.subr.bf16.mxu0 %v1337
  %1670 = vmatpush1.bf16.msra.mxu0 %v1336
  %1671 = vmatprep.subr.bf16.mxu0 %v1335
  %1672 = vmatpush1.bf16.msra.mxu0 %v1334
  %1673 = vmatprep.subr.bf16.mxu0 %v1333
  %1674 = vmatpush1.bf16.msra.mxu0 %v1332
  %1675 = vmatprep.subr.bf16.mxu0 %v1331
  %1676 = vmatpush1.bf16.msra.mxu0 %v1330
  %1677 = vmatprep.subr.bf16.mxu0 0
  %1678 = vmatpush2.bf16.msra.mxu0 0
  %1679 = vmatprep.subr.bf16.mxu0 0
  %1680 = vmatpush2.bf16.msra.mxu0 0
  %1681 = vmatprep.subr.bf16.mxu0 0
  %1682 = vmatpush2.bf16.msra.mxu0 0
  %1683 = vmatprep.subr.bf16.mxu0 0
  %1684 = vmatpush2.bf16.msra.mxu0 0
  %1685 = vmatprep.subr.bf16.mxu0 0
  %1686 = vmatpush2.bf16.msra.mxu0 0
  %1687 = vmatprep.subr.bf16.mxu0 0
  %1688 = vmatpush2.bf16.msra.mxu0 0
  %1689 = vmatprep.subr.bf16.mxu0 0
  %1690 = vmatpush2.bf16.msra.mxu0 0
  %1691 = vmatprep.subr.bf16.mxu0 0
  %1692 = vmatpush2.bf16.msra.mxu0 0
  %1693 = vmatprep.mubr.bf16.mxu0 0
  %1694 = vmatmul.mubr.bf16.gmra.mxu0 %v1659
  %v1695 = vpop.f32.mrf.mxu0
  %v1696 = vadd.f32 0.0, %v1695
  %v1697 = vpop.f32.mrf.mxu0
  %v1698 = vadd.f32 0.0, %v1697
  %v1699 = vpop.f32.mrf.mxu0
  %v1700 = vpop.f32.mrf.mxu0
  %1701 = vdwg.mxu0
  %v1702 = vadd.f32 %v1656, %v1696
  %v1703 = vadd.f32 %v1657, %v1698
  %v1704 = vmul.f32 %v1702, 2.0
  %v1705 = vmul.f32 %v1703, 2.0
  %v1706 = vsel %vm42, %v1704, %v1702
  %v1707 = vsel %vm43, %v1705, %v1703
  %v1708 = vxor.u32 %v1706, 2147483648
  %v1709 = vxor.u32 %v1707, 2147483648
  %v1710 = vmul.f32 %v1708, 1.442695
  %v1711 = vpow.pop %v1710
  %v1712 = vmul.f32 %v1709, 1.442695
  %v1713 = vpow.pop %v1712
  %v1714 = vadd.f32 %v1711, 1.0
  %v1715 = vadd.f32 %v1713, 1.0
  %v1716 = vrcp.pop %v1714
  %v1717 = vmul.f32 1.0, %v1716
  %v1718 = vrcp.pop %v1715
  %v1719 = vmul.f32 1.0, %v1718
  %v1720 = vmul.f32 %v1717, 2.0
  %v1721 = vmul.f32 %v1719, 2.0
  %v1722 = vsub.f32 %v1720, 1.0
  %v1723 = vsub.f32 %v1721, 1.0
  %v1724 = vsel %vm42, %v1722, %v1717
  %v1725 = vsel %vm43, %v1723, %v1719
  %1727 = vrot.lane.b32.xlu0 %v1725, 32
  %v1728 = vpop.permute.xlu0 %1727
  %v1730 = vsel %vm330, %v1724, %v1728
  %1732 = vrot.lane.b32.xlu0 %v1724, 96
  %v1733 = vpop.permute.xlu0 %1732
  %v1735 = vsel %vm330, %v1733, %v1725
  %1736 = vrot.lane.b32.xlu0 %v1724, 64
  %v1737 = vpop.permute.xlu0 %1736
  %1739 = vrot.lane.b32.xlu0 %v1725, 96
  %v1740 = vpop.permute.xlu0 %1739
  %v1742 = vsel %vm330, %v1737, %v1740
  %1743 = vrot.lane.b32.xlu0 %v1724, 32
  %v1744 = vpop.permute.xlu0 %1743
  %1746 = vrot.lane.b32.xlu0 %v1725, 64
  %v1747 = vpop.permute.xlu0 %1746
  %v1749 = vsel %vm330, %v1744, %v1747
  %v1750 = vmul.f32 %v1735, %v1648
  %v1751 = vmul.f32 %v1730, %v1742
  %v1752 = vadd.f32 %v1750, %v1751
  %v1753 = vtanh.pop %v1752
  %v1754 = vmul.f32 %v1749, %v1753
  %s1755 = scalar_lea.vmem %s7, 24
  %1756 = vst.msk [vmem:[%s1755] sm:$0xff] %vm330, %v1754
  %s1757 = scalar_lea.vmem %s7, 32
  %1758 = vst.msk [vmem:[%s1757] sm:$0xff] %vm1445, %v1754
  %v1759 = vpack.c.bf16 %v1754, %v1754
  %v1760 = vld [vmem:[%s588] sm:$0xff]
  %v1761 = vld [vmem:[%s584 + $0x8] sm:$0xff]
  %v1763 = vsel %vm257, %v1759, 0
  %1765 = vmatprep.subr.bf16.mxu0 0
  %1766 = vmatpush1.bf16.msra.mxu0 0
  %1767 = vmatprep.subr.bf16.mxu0 0
  %1768 = vmatpush1.bf16.msra.mxu0 0
  %1769 = vmatprep.subr.bf16.mxu0 0
  %1770 = vmatpush1.bf16.msra.mxu0 0
  %1771 = vmatprep.subr.bf16.mxu0 0
  %1772 = vmatpush1.bf16.msra.mxu0 0
  %1773 = vmatprep.subr.bf16.mxu0 %v1337
  %1774 = vmatpush1.bf16.msra.mxu0 %v1336
  %1775 = vmatprep.subr.bf16.mxu0 %v1335
  %1776 = vmatpush1.bf16.msra.mxu0 %v1334
  %1777 = vmatprep.subr.bf16.mxu0 %v1333
  %1778 = vmatpush1.bf16.msra.mxu0 %v1332
  %1779 = vmatprep.subr.bf16.mxu0 %v1331
  %1780 = vmatpush1.bf16.msra.mxu0 %v1330
  %1781 = vmatprep.subr.bf16.mxu0 0
  %1782 = vmatpush2.bf16.msra.mxu0 0
  %1783 = vmatprep.subr.bf16.mxu0 0
  %1784 = vmatpush2.bf16.msra.mxu0 0
  %1785 = vmatprep.subr.bf16.mxu0 0
  %1786 = vmatpush2.bf16.msra.mxu0 0
  %1787 = vmatprep.subr.bf16.mxu0 0
  %1788 = vmatpush2.bf16.msra.mxu0 0
  %1789 = vmatprep.subr.bf16.mxu0 0
  %1790 = vmatpush2.bf16.msra.mxu0 0
  %1791 = vmatprep.subr.bf16.mxu0 0
  %1792 = vmatpush2.bf16.msra.mxu0 0
  %1793 = vmatprep.subr.bf16.mxu0 0
  %1794 = vmatpush2.bf16.msra.mxu0 0
  %1795 = vmatprep.subr.bf16.mxu0 0
  %1796 = vmatpush2.bf16.msra.mxu0 0
  %1797 = vmatprep.mubr.bf16.mxu0 0
  %1798 = vmatmul.mubr.bf16.gmra.mxu0 %v1763
  %v1799 = vpop.f32.mrf.mxu0
  %v1800 = vadd.f32 0.0, %v1799
  %v1801 = vpop.f32.mrf.mxu0
  %v1802 = vadd.f32 0.0, %v1801
  %v1803 = vpop.f32.mrf.mxu0
  %v1804 = vpop.f32.mrf.mxu0
  %1805 = vdwg.mxu0
  %v1806 = vadd.f32 %v1760, %v1800
  %v1807 = vadd.f32 %v1761, %v1802
  %v1808 = vmul.f32 %v1806, 2.0
  %v1809 = vmul.f32 %v1807, 2.0
  %v1810 = vsel %vm42, %v1808, %v1806
  %v1811 = vsel %vm43, %v1809, %v1807
  %v1812 = vxor.u32 %v1810, 2147483648
  %v1813 = vxor.u32 %v1811, 2147483648
  %v1814 = vmul.f32 %v1812, 1.442695
  %v1815 = vpow.pop %v1814
  %v1816 = vmul.f32 %v1813, 1.442695
  %v1817 = vpow.pop %v1816
  %v1818 = vadd.f32 %v1815, 1.0
  %v1819 = vadd.f32 %v1817, 1.0
  %v1820 = vrcp.pop %v1818
  %v1821 = vmul.f32 1.0, %v1820
  %v1822 = vrcp.pop %v1819
  %v1823 = vmul.f32 1.0, %v1822
  %v1824 = vmul.f32 %v1821, 2.0
  %v1825 = vmul.f32 %v1823, 2.0
  %v1826 = vsub.f32 %v1824, 1.0
  %v1827 = vsub.f32 %v1825, 1.0
  %v1828 = vsel %vm42, %v1826, %v1821
  %v1829 = vsel %vm43, %v1827, %v1823
  %1831 = vrot.lane.b32.xlu0 %v1829, 32
  %v1832 = vpop.permute.xlu0 %1831
  %v1834 = vsel %vm330, %v1828, %v1832
  %1836 = vrot.lane.b32.xlu0 %v1828, 96
  %v1837 = vpop.permute.xlu0 %1836
  %v1839 = vsel %vm330, %v1837, %v1829
  %1840 = vrot.lane.b32.xlu0 %v1828, 64
  %v1841 = vpop.permute.xlu0 %1840
  %1843 = vrot.lane.b32.xlu0 %v1829, 96
  %v1844 = vpop.permute.xlu0 %1843
  %v1846 = vsel %vm330, %v1841, %v1844
  %1847 = vrot.lane.b32.xlu0 %v1828, 32
  %v1848 = vpop.permute.xlu0 %1847
  %1850 = vrot.lane.b32.xlu0 %v1829, 64
  %v1851 = vpop.permute.xlu0 %1850
  %v1853 = vsel %vm330, %v1848, %v1851
  %v1854 = vmul.f32 %v1839, %v1752
  %v1855 = vmul.f32 %v1834, %v1846
  %v1856 = vadd.f32 %v1854, %v1855
  %v1857 = vtanh.pop %v1856
  %v1858 = vmul.f32 %v1853, %v1857
  %1859 = vst.msk [vmem:[%s1757] sm:$0xff] %vm330, %v1858
  %1860 = vst.msk [vmem:[%s1755] sm:$0xff] %vm1445, %v1858
  %v1861 = vpack.c.bf16 %v1858, %v1858
  %v1862 = vld [vmem:[%s478] sm:$0xff]
  %v1863 = vld [vmem:[%s474 + $0x8] sm:$0xff]
  %v1865 = vsel %vm257, %v1861, 0
  %1867 = vmatprep.subr.bf16.mxu0 0
  %1868 = vmatpush1.bf16.msra.mxu0 0
  %1869 = vmatprep.subr.bf16.mxu0 0
  %1870 = vmatpush1.bf16.msra.mxu0 0
  %1871 = vmatprep.subr.bf16.mxu0 0
  %1872 = vmatpush1.bf16.msra.mxu0 0
  %1873 = vmatprep.subr.bf16.mxu0 0
  %1874 = vmatpush1.bf16.msra.mxu0 0
  %1875 = vmatprep.subr.bf16.mxu0 %v1337
  %1876 = vmatpush1.bf16.msra.mxu0 %v1336
  %1877 = vmatprep.subr.bf16.mxu0 %v1335
  %1878 = vmatpush1.bf16.msra.mxu0 %v1334
  %1879 = vmatprep.subr.bf16.mxu0 %v1333
  %1880 = vmatpush1.bf16.msra.mxu0 %v1332
  %1881 = vmatprep.subr.bf16.mxu0 %v1331
  %1882 = vmatpush1.bf16.msra.mxu0 %v1330
  %1883 = vmatprep.subr.bf16.mxu0 0
  %1884 = vmatpush2.bf16.msra.mxu0 0
  %1885 = vmatprep.subr.bf16.mxu0 0
  %1886 = vmatpush2.bf16.msra.mxu0 0
  %1887 = vmatprep.subr.bf16.mxu0 0
  %1888 = vmatpush2.bf16.msra.mxu0 0
  %1889 = vmatprep.subr.bf16.mxu0 0
  %1890 = vmatpush2.bf16.msra.mxu0 0
  %1891 = vmatprep.subr.bf16.mxu0 0
  %1892 = vmatpush2.bf16.msra.mxu0 0
  %1893 = vmatprep.subr.bf16.mxu0 0
  %1894 = vmatpush2.bf16.msra.mxu0 0
  %1895 = vmatprep.subr.bf16.mxu0 0
  %1896 = vmatpush2.bf16.msra.mxu0 0
  %1897 = vmatprep.subr.bf16.mxu0 0
  %1898 = vmatpush2.bf16.msra.mxu0 0
  %1899 = vmatprep.mubr.bf16.mxu0 0
  %1900 = vmatmul.mubr.bf16.gmra.mxu0 %v1865
  %v1901 = vpop.f32.mrf.mxu0
  %v1902 = vadd.f32 0.0, %v1901
  %v1903 = vpop.f32.mrf.mxu0
  %v1904 = vadd.f32 0.0, %v1903
  %v1905 = vpop.f32.mrf.mxu0
  %v1906 = vpop.f32.mrf.mxu0
  %1907 = vdwg.mxu0
  %v1908 = vadd.f32 %v1862, %v1902
  %v1909 = vadd.f32 %v1863, %v1904
  %v1910 = vmul.f32 %v1908, 2.0
  %v1911 = vmul.f32 %v1909, 2.0
  %v1912 = vsel %vm42, %v1910, %v1908
  %v1913 = vsel %vm43, %v1911, %v1909
  %v1914 = vxor.u32 %v1912, 2147483648
  %v1915 = vxor.u32 %v1913, 2147483648
  %v1916 = vmul.f32 %v1914, 1.442695
  %v1917 = vpow.pop %v1916
  %v1918 = vmul.f32 %v1915, 1.442695
  %v1919 = vpow.pop %v1918
  %v1920 = vadd.f32 %v1917, 1.0
  %v1921 = vadd.f32 %v1919, 1.0
  %v1922 = vrcp.pop %v1920
  %v1923 = vmul.f32 1.0, %v1922
  %v1924 = vrcp.pop %v1921
  %v1925 = vmul.f32 1.0, %v1924
  %v1926 = vmul.f32 %v1923, 2.0
  %v1927 = vmul.f32 %v1925, 2.0
  %v1928 = vsub.f32 %v1926, 1.0
  %v1929 = vsub.f32 %v1927, 1.0
  %v1930 = vsel %vm42, %v1928, %v1923
  %v1931 = vsel %vm43, %v1929, %v1925
  %1933 = vrot.lane.b32.xlu0 %v1931, 32
  %v1934 = vpop.permute.xlu0 %1933
  %v1936 = vsel %vm330, %v1930, %v1934
  %1938 = vrot.lane.b32.xlu0 %v1930, 96
  %v1939 = vpop.permute.xlu0 %1938
  %v1941 = vsel %vm330, %v1939, %v1931
  %1942 = vrot.lane.b32.xlu0 %v1930, 64
  %v1943 = vpop.permute.xlu0 %1942
  %1945 = vrot.lane.b32.xlu0 %v1931, 96
  %v1946 = vpop.permute.xlu0 %1945
  %v1948 = vsel %vm330, %v1943, %v1946
  %1949 = vrot.lane.b32.xlu0 %v1930, 32
  %v1950 = vpop.permute.xlu0 %1949
  %1952 = vrot.lane.b32.xlu0 %v1931, 64
  %v1953 = vpop.permute.xlu0 %1952
  %v1955 = vsel %vm330, %v1950, %v1953
  %v1956 = vmul.f32 %v1941, %v1856
  %v1957 = vmul.f32 %v1936, %v1948
  %v1958 = vadd.f32 %v1956, %v1957
  %v1959 = vtanh.pop %v1958
  %v1960 = vmul.f32 %v1955, %v1959
  %1961 = vst.msk [vmem:[%s1653] sm:$0xff] %vm330, %v1960
  %1962 = vst.msk [vmem:[%s1651] sm:$0xff] %vm1445, %v1960
  %v1963 = vpack.c.bf16 %v1960, %v1960
  %v1964 = vld [vmem:[%s368] sm:$0xff]
  %v1965 = vld [vmem:[%s364 + $0x8] sm:$0xff]
  %v1967 = vsel %vm257, %v1963, 0
  %1969 = vmatprep.subr.bf16.mxu0 0
  %1970 = vmatpush1.bf16.msra.mxu0 0
  %1971 = vmatprep.subr.bf16.mxu0 0
  %1972 = vmatpush1.bf16.msra.mxu0 0
  %1973 = vmatprep.subr.bf16.mxu0 0
  %1974 = vmatpush1.bf16.msra.mxu0 0
  %1975 = vmatprep.subr.bf16.mxu0 0
  %1976 = vmatpush1.bf16.msra.mxu0 0
  %1977 = vmatprep.subr.bf16.mxu0 %v1337
  %1978 = vmatpush1.bf16.msra.mxu0 %v1336
  %1979 = vmatprep.subr.bf16.mxu0 %v1335
  %1980 = vmatpush1.bf16.msra.mxu0 %v1334
  %1981 = vmatprep.subr.bf16.mxu0 %v1333
  %1982 = vmatpush1.bf16.msra.mxu0 %v1332
  %1983 = vmatprep.subr.bf16.mxu0 %v1331
  %1984 = vmatpush1.bf16.msra.mxu0 %v1330
  %1985 = vmatprep.subr.bf16.mxu0 0
  %1986 = vmatpush2.bf16.msra.mxu0 0
  %1987 = vmatprep.subr.bf16.mxu0 0
  %1988 = vmatpush2.bf16.msra.mxu0 0
  %1989 = vmatprep.subr.bf16.mxu0 0
  %1990 = vmatpush2.bf16.msra.mxu0 0
  %1991 = vmatprep.subr.bf16.mxu0 0
  %1992 = vmatpush2.bf16.msra.mxu0 0
  %1993 = vmatprep.subr.bf16.mxu0 0
  %1994 = vmatpush2.bf16.msra.mxu0 0
  %1995 = vmatprep.subr.bf16.mxu0 0
  %1996 = vmatpush2.bf16.msra.mxu0 0
  %1997 = vmatprep.subr.bf16.mxu0 0
  %1998 = vmatpush2.bf16.msra.mxu0 0
  %1999 = vmatprep.subr.bf16.mxu0 0
  %2000 = vmatpush2.bf16.msra.mxu0 0
  %2001 = vmatprep.mubr.bf16.mxu0 0
  %2002 = vmatmul.mubr.bf16.gmra.mxu0 %v1967
  %v2003 = vpop.f32.mrf.mxu0
  %v2004 = vadd.f32 0.0, %v2003
  %v2005 = vpop.f32.mrf.mxu0
  %v2006 = vadd.f32 0.0, %v2005
  %v2007 = vpop.f32.mrf.mxu0
  %v2008 = vpop.f32.mrf.mxu0
  %2009 = vdwg.mxu0
  %v2010 = vadd.f32 %v1964, %v2004
  %v2011 = vadd.f32 %v1965, %v2006
  %v2012 = vmul.f32 %v2010, 2.0
  %v2013 = vmul.f32 %v2011, 2.0
  %v2014 = vsel %vm42, %v2012, %v2010
  %v2015 = vsel %vm43, %v2013, %v2011
  %v2016 = vxor.u32 %v2014, 2147483648
  %v2017 = vxor.u32 %v2015, 2147483648
  %v2018 = vmul.f32 %v2016, 1.442695
  %v2019 = vpow.pop %v2018
  %v2020 = vmul.f32 %v2017, 1.442695
  %v2021 = vpow.pop %v2020
  %v2022 = vadd.f32 %v2019, 1.0
  %v2023 = vadd.f32 %v2021, 1.0
  %v2024 = vrcp.pop %v2022
  %v2025 = vmul.f32 1.0, %v2024
  %v2026 = vrcp.pop %v2023
  %v2027 = vmul.f32 1.0, %v2026
  %v2028 = vmul.f32 %v2025, 2.0
  %v2029 = vmul.f32 %v2027, 2.0
  %v2030 = vsub.f32 %v2028, 1.0
  %v2031 = vsub.f32 %v2029, 1.0
  %v2032 = vsel %vm42, %v2030, %v2025
  %v2033 = vsel %vm43, %v2031, %v2027
  %2035 = vrot.lane.b32.xlu0 %v2033, 32
  %v2036 = vpop.permute.xlu0 %2035
  %v2038 = vsel %vm330, %v2032, %v2036
  %2040 = vrot.lane.b32.xlu0 %v2032, 96
  %v2041 = vpop.permute.xlu0 %2040
  %v2043 = vsel %vm330, %v2041, %v2033
  %2044 = vrot.lane.b32.xlu0 %v2032, 64
  %v2045 = vpop.permute.xlu0 %2044
  %2047 = vrot.lane.b32.xlu0 %v2033, 96
  %v2048 = vpop.permute.xlu0 %2047
  %v2050 = vsel %vm330, %v2045, %v2048
  %2051 = vrot.lane.b32.xlu0 %v2032, 32
  %v2052 = vpop.permute.xlu0 %2051
  %2054 = vrot.lane.b32.xlu0 %v2033, 64
  %v2055 = vpop.permute.xlu0 %2054
  %v2057 = vsel %vm330, %v2052, %v2055
  %v2058 = vmul.f32 %v2043, %v1958
  %v2059 = vmul.f32 %v2038, %v2050
  %v2060 = vadd.f32 %v2058, %v2059
  %v2061 = vtanh.pop %v2060
  %v2062 = vmul.f32 %v2057, %v2061
  %2063 = vst.msk [vmem:[%s1549] sm:$0xff] %vm330, %v2062
  %2064 = vst.msk [vmem:[%s1547] sm:$0xff] %vm1445, %v2062
  %v2065 = vpack.c.bf16 %v2062, %v2062
  %v2066 = vld [vmem:[%s215] sm:$0xff]
  %v2067 = vld [vmem:[%s211 + $0x8] sm:$0xff]
  %v2069 = vsel %vm257, %v2065, 0
  %2071 = vmatprep.subr.bf16.mxu0 0
  %2072 = vmatpush1.bf16.msra.mxu0 0
  %2073 = vmatprep.subr.bf16.mxu0 0
  %2074 = vmatpush1.bf16.msra.mxu0 0
  %2075 = vmatprep.subr.bf16.mxu0 0
  %2076 = vmatpush1.bf16.msra.mxu0 0
  %2077 = vmatprep.subr.bf16.mxu0 0
  %2078 = vmatpush1.bf16.msra.mxu0 0
  %2079 = vmatprep.subr.bf16.mxu0 %v1337
  %2080 = vmatpush1.bf16.msra.mxu0 %v1336
  %2081 = vmatprep.subr.bf16.mxu0 %v1335
  %2082 = vmatpush1.bf16.msra.mxu0 %v1334
  %2083 = vmatprep.subr.bf16.mxu0 %v1333
  %2084 = vmatpush1.bf16.msra.mxu0 %v1332
  %2085 = vmatprep.subr.bf16.mxu0 %v1331
  %2086 = vmatpush1.bf16.msra.mxu0 %v1330
  %2087 = vmatprep.subr.bf16.mxu0 0
  %2088 = vmatpush2.bf16.msra.mxu0 0
  %2089 = vmatprep.subr.bf16.mxu0 0
  %2090 = vmatpush2.bf16.msra.mxu0 0
  %2091 = vmatprep.subr.bf16.mxu0 0
  %2092 = vmatpush2.bf16.msra.mxu0 0
  %2093 = vmatprep.subr.bf16.mxu0 0
  %2094 = vmatpush2.bf16.msra.mxu0 0
  %2095 = vmatprep.subr.bf16.mxu0 0
  %2096 = vmatpush2.bf16.msra.mxu0 0
  %2097 = vmatprep.subr.bf16.mxu0 0
  %2098 = vmatpush2.bf16.msra.mxu0 0
  %2099 = vmatprep.subr.bf16.mxu0 0
  %2100 = vmatpush2.bf16.msra.mxu0 0
  %2101 = vmatprep.subr.bf16.mxu0 0
  %2102 = vmatpush2.bf16.msra.mxu0 0
  %2103 = vmatprep.mubr.bf16.mxu0 0
  %2104 = vmatmul.mubr.bf16.gmra.mxu0 %v2069
  %v2105 = vpop.f32.mrf.mxu0
  %v2106 = vadd.f32 0.0, %v2105
  %v2107 = vpop.f32.mrf.mxu0
  %v2108 = vadd.f32 0.0, %v2107
  %v2109 = vpop.f32.mrf.mxu0
  %v2110 = vpop.f32.mrf.mxu0
  %2111 = vdwg.mxu0
  %v2112 = vadd.f32 %v2066, %v2106
  %v2113 = vadd.f32 %v2067, %v2108
  %v2114 = vmul.f32 %v2112, 2.0
  %v2115 = vmul.f32 %v2113, 2.0
  %v2116 = vsel %vm42, %v2114, %v2112
  %v2117 = vsel %vm43, %v2115, %v2113
  %v2118 = vxor.u32 %v2116, 2147483648
  %v2119 = vxor.u32 %v2117, 2147483648
  %v2120 = vmul.f32 %v2118, 1.442695
  %v2121 = vpow.pop %v2120
  %v2122 = vmul.f32 %v2119, 1.442695
  %v2123 = vpow.pop %v2122
  %v2124 = vadd.f32 %v2121, 1.0
  %v2125 = vadd.f32 %v2123, 1.0
  %v2126 = vrcp.pop %v2124
  %v2127 = vmul.f32 1.0, %v2126
  %v2128 = vrcp.pop %v2125
  %v2129 = vmul.f32 1.0, %v2128
  %v2130 = vmul.f32 %v2127, 2.0
  %v2131 = vmul.f32 %v2129, 2.0
  %v2132 = vsub.f32 %v2130, 1.0
  %v2133 = vsub.f32 %v2131, 1.0
  %v2134 = vsel %vm42, %v2132, %v2127
  %v2135 = vsel %vm43, %v2133, %v2129
  %2137 = vrot.lane.b32.xlu0 %v2135, 32
  %v2138 = vpop.permute.xlu0 %2137
  %v2140 = vsel %vm330, %v2134, %v2138
  %2142 = vrot.lane.b32.xlu0 %v2134, 96
  %v2143 = vpop.permute.xlu0 %2142
  %v2145 = vsel %vm330, %v2143, %v2135
  %2146 = vrot.lane.b32.xlu0 %v2134, 64
  %v2147 = vpop.permute.xlu0 %2146
  %2149 = vrot.lane.b32.xlu0 %v2135, 96
  %v2150 = vpop.permute.xlu0 %2149
  %v2152 = vsel %vm330, %v2147, %v2150
  %2153 = vrot.lane.b32.xlu0 %v2134, 32
  %v2154 = vpop.permute.xlu0 %2153
  %2156 = vrot.lane.b32.xlu0 %v2135, 64
  %v2157 = vpop.permute.xlu0 %2156
  %v2159 = vsel %vm330, %v2154, %v2157
  %v2160 = vmul.f32 %v2145, %v2060
  %v2161 = vmul.f32 %v2140, %v2152
  %v2162 = vadd.f32 %v2160, %v2161
  %v2163 = vtanh.pop %v2162
  %v2164 = vmul.f32 %v2159, %v2163
  %2165 = vst.msk [vmem:[%s1444] sm:$0xff] %vm330, %v2164
  %2166 = vst.msk [vmem:[%s7] sm:$0xff] %vm1445, %v2164
  // Predicated region
  $region30: #{bilstm_forward.1} parent=0 // pred_check
    _
  $region31: #{bilstm_forward.1} parent=0 // pred_check_branch
    %2168 = sbr.rel (0) target = $region33
  $region32: #{bilstm_forward.1} parent=0 // pred_region
    _
  $region33: #{bilstm_forward.1} parent=0 // pred_fallthru
    _
  // Predicated region
  $region34: #{bilstm_forward.1} parent=0 // pred_check
    _
  $region35: #{bilstm_forward.1} parent=0 // pred_check_branch
    %2170 = sbr.rel (0) target = $region37
  $region36: #{bilstm_forward.1} parent=0 // pred_region
    _
  $region37: #{bilstm_forward.1} parent=0 // pred_fallthru
    _

</llo_original>
